<compile_context>
chip_gen: v5e
topology: v5e:2x2
jax: 0.10.0
libtpu: 0.0.40
codegen_flags: <defaults>
</compile_context>

<pallas_src>
import jax
import jax.numpy as jnp
from jax.experimental import pallas as pl
from jax.experimental.pallas import tpu as pltpu

NUM_CONTEXT = 2048
NUM_BODY = 2048
NUM_POSE = 26
FC1_IN = NUM_CONTEXT + NUM_BODY      # 4096
FC1_OUT = 1024
FC2_OUT = 256
OUT_FEATURES = 26
LANE_PAD = 128                        # lane-dense padded width (fc3/pose/fc_cat/out)
TK = 1024                             # fc1 K-tile -> grid=(4,)


def fusion_kernel(x_ref, w1q_ref, s1_ref, b1_ref,
                  w2_ref, b2_ref, w3_ref, b3_ref,
                  pose_ref, wcat_f_ref, wcat_p_ref, bcat_ref,
                  out_ref, acc_ref):
    k = pl.program_id(0)

    @pl.when(k == 0)
    def _init():
        acc_ref[...] = jnp.zeros_like(acc_ref)

    # fc1 partial product: int8 weights (values exact in bf16) x bf16
    # activations on the MXU, f32 accumulation across the K grid.
    w1 = w1q_ref[...].astype(jnp.bfloat16)
    acc_ref[...] += jnp.dot(x_ref[...], w1, preferred_element_type=jnp.float32)

    @pl.when(k == pl.num_programs(0) - 1)
    def _epilogue():
        # Per-output-column dequant scale applied once, after full accumulation.
        h1 = acc_ref[...] * s1_ref[...] + b1_ref[...]

        # fc2 with BatchNorm1d (eval, running stats) folded into weights/bias.
        h2 = jnp.dot(h1.astype(jnp.bfloat16), w2_ref[...],
                     preferred_element_type=jnp.float32) + b2_ref[...]

        # fc3 (padded to lane-dense 128 columns; pad cols are exactly zero).
        h3 = jnp.dot(h2, w3_ref[...], preferred_element_type=jnp.float32) + b3_ref[...]

        # cat(fc3, pose) -> relu -> dropout(identity, eval) -> fc_cat,
        # expressed as two matmuls into the padded (N=128) output.
        f_act = jnp.maximum(h3, jnp.float32(0.0))
        p_act = jnp.maximum(pose_ref[...], jnp.float32(0.0))
        out_ref[...] = (
            jnp.dot(f_act, wcat_f_ref[...], preferred_element_type=jnp.float32)
            + jnp.dot(p_act, wcat_p_ref[...], preferred_element_type=jnp.float32)
            + bcat_ref[...])


def _pad2d(a, rows, cols):
    return jnp.pad(a, ((0, rows - a.shape[0]), (0, cols - a.shape[1])))


def prepare_params(p):
    """One-time parameter packing: merge+int8-quantize fc1, fold BN into fc2
    (bf16), pad fc3/fc_cat to lane-dense widths."""
    # BatchNorm fold into fc2.
    bn_scale = p["gamma"] * jax.lax.rsqrt(p["var"] + jnp.float32(1e-5))   # (1, 256)
    w2_fold = p["w2"] * bn_scale
    b2_fold = (p["b2"] - p["mean"]) * bn_scale + p["beta"]

    # Merge fc1 (cat on K) and weight-only int8 quantize, per output column.
    w1 = jnp.concatenate([p["w1c"], p["w1b"]], axis=0)                    # (4096, 1024)
    s1 = jnp.maximum(jnp.max(jnp.abs(w1), axis=0, keepdims=True), 1e-12) / 127.0
    w1q = jnp.clip(jnp.round(w1 / s1), -127, 127).astype(jnp.int8)

    return {
        "w1q": w1q,                                   # (4096, 1024) int8  — hot stream
        "s1": s1.astype(jnp.float32),                 # (1, 1024) dequant scale
        "b1": p["b1"],                                # (1, 1024) f32
        "w2": w2_fold.astype(jnp.bfloat16),           # (1024, 256) bf16, BN folded
        "b2": b2_fold,                                # (1, 256) f32, BN folded
        "w3": _pad2d(p["w3"], FC2_OUT, LANE_PAD),     # (256, 128) f32
        "b3": _pad2d(p["b3"], 1, LANE_PAD),           # (1, 128)
        "wcat_f": _pad2d(p["wcat_f"], LANE_PAD, LANE_PAD),   # (128, 128)
        "wcat_p": _pad2d(p["wcat_p"], LANE_PAD, LANE_PAD),   # (128, 128)
        "bcat": _pad2d(p["bcat"], 1, LANE_PAD),       # (1, 128)
    }


def fusion_net_forward(x_context, x_body, x_pose, prep):
    B = x_context.shape[0]
    # Wrapper-side concat + bf16 cast of the activations (single stream).
    x = jnp.concatenate([x_context, x_body], axis=1).astype(jnp.bfloat16)
    pose = x_pose.reshape(-1, NUM_POSE).astype(jnp.float32)     # x_pose.view(-1, 26)
    pose = jnp.pad(pose, ((0, 0), (0, LANE_PAD - NUM_POSE)))    # lane-dense

    n_k = FC1_IN // TK
    inputs = (x, prep["w1q"], prep["s1"], prep["b1"],
              prep["w2"], prep["b2"], prep["w3"], prep["b3"],
              pose, prep["wcat_f"], prep["wcat_p"], prep["bcat"])

    def resident(shape):
        # Same block every grid step -> fetched once, stays VMEM-resident.
        return pl.BlockSpec(shape, lambda k: (0, 0))

    grid_spec = pltpu.PrefetchScalarGridSpec(
        num_scalar_prefetch=0,
        grid=(n_k,),
        in_specs=[
            pl.BlockSpec((B, TK), lambda k: (0, k)),           # x (bf16)
            pl.BlockSpec((TK, FC1_OUT), lambda k: (k, 0)),     # w1q (int8, hot stream)
            resident((1, FC1_OUT)),                            # s1
            resident((1, FC1_OUT)),                            # b1
            resident((FC1_OUT, FC2_OUT)),                      # w2 (bf16, BN folded)
            resident((1, FC2_OUT)),                            # b2
            resident((FC2_OUT, LANE_PAD)),                     # w3 (padded)
            resident((1, LANE_PAD)),                           # b3 (padded)
            resident((B, LANE_PAD)),                           # pose (padded)
            resident((LANE_PAD, LANE_PAD)),                    # wcat_f (padded)
            resident((LANE_PAD, LANE_PAD)),                    # wcat_p (padded)
            resident((1, LANE_PAD)),                           # bcat (padded)
        ],
        out_specs=pl.BlockSpec((B, LANE_PAD), lambda k: (0, 0)),
        scratch_shapes=[pltpu.VMEM((B, FC1_OUT), jnp.float32)],   # fc1 f32 accumulator
    )

    out_padded = pl.pallas_call(
        fusion_kernel,
        out_shape=jax.ShapeDtypeStruct((B, LANE_PAD), jnp.float32),
        grid_spec=grid_spec,
        compiler_params=pltpu.CompilerParams(
            dimension_semantics=("arbitrary",),     # reduction axis
            vmem_limit_bytes=32 << 20),
    )(*inputs)
    return out_padded[:, :OUT_FEATURES]


def init_params(key):
    """Deterministic synthetic parameters with Linear-style 1/sqrt(fan_in) scale."""
    ks = jax.random.split(key, 12)

    def lin(kw, kb, fan_in, fan_out):
        bound = 1.0 / jnp.sqrt(jnp.float32(fan_in))
        w = jax.random.uniform(kw, (fan_in, fan_out), jnp.float32, -bound, bound)
        b = jax.random.uniform(kb, (1, fan_out), jnp.float32, -bound, bound)
        return w, b

    w1, b1 = lin(ks[0], ks[1], FC1_IN, FC1_OUT)
    w2, b2 = lin(ks[2], ks[3], FC1_OUT, FC2_OUT)
    w3, b3 = lin(ks[4], ks[5], FC2_OUT, OUT_FEATURES)
    wcat, bcat = lin(ks[6], ks[7], 2 * OUT_FEATURES, OUT_FEATURES)

    gamma = 1.0 + 0.1 * jax.random.normal(ks[8], (1, FC2_OUT), jnp.float32)
    beta = 0.1 * jax.random.normal(ks[9], (1, FC2_OUT), jnp.float32)
    mean = 0.1 * jax.random.normal(ks[10], (1, FC2_OUT), jnp.float32)
    var = jnp.abs(1.0 + 0.1 * jax.random.normal(ks[11], (1, FC2_OUT), jnp.float32))

    return {
        "w1c": w1[:NUM_CONTEXT], "w1b": w1[NUM_CONTEXT:], "b1": b1,
        "w2": w2, "b2": b2,
        "gamma": gamma, "beta": beta, "mean": mean, "var": var,
        "w3": w3, "b3": b3,
        "wcat_f": wcat[:OUT_FEATURES], "wcat_p": wcat[OUT_FEATURES:], "bcat": bcat,
    }


def reference_forward(x_context, x_body, x_pose, p):
    """Pure-JAX f32 reference matching the PyTorch forward (eval mode)."""
    pose = x_pose.reshape(-1, NUM_POSE)
    fuse = jnp.concatenate([x_context, x_body], axis=1)
    w1 = jnp.concatenate([p["w1c"], p["w1b"]], axis=0)
    h = fuse @ w1 + p["b1"]
    h = h @ p["w2"] + p["b2"]
    h = (h - p["mean"]) * jax.lax.rsqrt(p["var"] + 1e-5) * p["gamma"] + p["beta"]
    h = h @ p["w3"] + p["b3"]
    total = jnp.concatenate([h, pose], axis=1)
    act = jnp.maximum(total, 0.0)
    wcat = jnp.concatenate([p["wcat_f"], p["wcat_p"]], axis=0)
    return act @ wcat + p["bcat"]


def reference_forward_matched(x_context, x_body, x_pose, prep):
    """Pure-JAX reference with the same int8/bf16 weight packing as the kernel."""
    x = jnp.concatenate([x_context, x_body], axis=1).astype(jnp.bfloat16)
    pose = jnp.pad(x_pose.reshape(-1, NUM_POSE), ((0, 0), (0, LANE_PAD - NUM_POSE)))
    h1 = (jnp.dot(x, prep["w1q"].astype(jnp.bfloat16),
                  preferred_element_type=jnp.float32) * prep["s1"] + prep["b1"])
    h2 = jnp.dot(h1.astype(jnp.bfloat16), prep["w2"],
                 preferred_element_type=jnp.float32) + prep["b2"]
    h3 = jnp.dot(h2, prep["w3"], preferred_element_type=jnp.float32) + prep["b3"]
    out = (jnp.maximum(h3, 0.0) @ prep["wcat_f"]
           + jnp.maximum(pose, 0.0) @ prep["wcat_p"]
           + prep["bcat"])
    return out[:, :OUT_FEATURES]


if __name__ == "__main__":
    key = jax.random.PRNGKey(0)
    k_ctx, k_body, k_pose, k_param = jax.random.split(key, 4)

    B = 8
    x_context = jax.random.normal(k_ctx, (B, NUM_CONTEXT), jnp.float32)
    x_body = jax.random.normal(k_body, (B, NUM_BODY), jnp.float32)
    x_pose = jax.random.normal(k_pose, (B, NUM_POSE), jnp.float32)

    params = init_params(k_param)
    prep = prepare_params(params)

    out = fusion_net_forward(x_context, x_body, x_pose, prep)
    out = jax.block_until_ready(out)
    assert out.shape == (B, OUT_FEATURES)

    # Kernel implements exactly the packed-weight math (tight-ish tolerance;
    # only f32 accumulation order / bf16 re-rounding can differ).
    ref_matched = reference_forward_matched(x_context, x_body, x_pose, prep)
    assert jnp.allclose(out, ref_matched, atol=5e-3, rtol=5e-3), \
        "mismatch vs matched-precision reference"

    # And stays close to the original f32 module semantics (int8 fc1 + bf16 fc2
    # weight rounding).
    ref_f32 = reference_forward(x_context, x_body, x_pose, params)
    assert jnp.allclose(out, ref_f32, atol=2e-2, rtol=2e-2), \
        "mismatch vs f32 reference"

    print("KERNEL_OK")
</pallas_src>

<mosaic_0001>
module attributes {stable_mosaic.version = 11 : i64} {
  func.func @fusion_kernel(%arg0: i32, %arg1: memref<8x1024xbf16, #tpu.memory_space<vmem>>, %arg2: memref<1024x1024xi8, #tpu.memory_space<vmem>>, %arg3: memref<1x1024xf32, #tpu.memory_space<vmem>>, %arg4: memref<1x1024xf32, #tpu.memory_space<vmem>>, %arg5: memref<1024x256xbf16, #tpu.memory_space<vmem>>, %arg6: memref<1x256xf32, #tpu.memory_space<vmem>>, %arg7: memref<256x128xf32, #tpu.memory_space<vmem>>, %arg8: memref<1x128xf32, #tpu.memory_space<vmem>>, %arg9: memref<8x128xf32, #tpu.memory_space<vmem>>, %arg10: memref<128x128xf32, #tpu.memory_space<vmem>>, %arg11: memref<128x128xf32, #tpu.memory_space<vmem>>, %arg12: memref<1x128xf32, #tpu.memory_space<vmem>>, %arg13: memref<8x128xf32, #tpu.memory_space<vmem>>, %arg14: memref<8x1024xf32, #tpu.memory_space<vmem>>) attributes {dimension_semantics = [#tpu.dimension_semantics<arbitrary>], iteration_bounds = array<i64: 4>, scalar_prefetch = 0 : i64, scratch_operands = 1 : i64, tpu.core_type = #tpu.core_type<tc>, window_params = [{transform_indices = @transform_0, window_bounds = array<i64: 8, 1024>}, {transform_indices = @transform_1, window_bounds = array<i64: 1024, 1024>}, {pipeline_mode = #tpu.pipeline_mode<synchronous>, transform_indices = @transform_2, window_bounds = array<i64: 1, 1024>}, {pipeline_mode = #tpu.pipeline_mode<synchronous>, transform_indices = @transform_3, window_bounds = array<i64: 1, 1024>}, {pipeline_mode = #tpu.pipeline_mode<synchronous>, transform_indices = @transform_4, window_bounds = array<i64: 1024, 256>}, {pipeline_mode = #tpu.pipeline_mode<synchronous>, transform_indices = @transform_5, window_bounds = array<i64: 1, 256>}, {pipeline_mode = #tpu.pipeline_mode<synchronous>, transform_indices = @transform_6, window_bounds = array<i64: 256, 128>}, {pipeline_mode = #tpu.pipeline_mode<synchronous>, transform_indices = @transform_7, window_bounds = array<i64: 1, 128>}, {pipeline_mode = #tpu.pipeline_mode<synchronous>, transform_indices = @transform_8, window_bounds = array<i64: 8, 128>}, {pipeline_mode = #tpu.pipeline_mode<synchronous>, transform_indices = @transform_9, window_bounds = array<i64: 128, 128>}, {pipeline_mode = #tpu.pipeline_mode<synchronous>, transform_indices = @transform_10, window_bounds = array<i64: 128, 128>}, {pipeline_mode = #tpu.pipeline_mode<synchronous>, transform_indices = @transform_11, window_bounds = array<i64: 1, 128>}, {pipeline_mode = #tpu.pipeline_mode<synchronous>, transform_indices = @transform_12, window_bounds = array<i64: 8, 128>}]} {
    %c0_i32 = arith.constant 0 : i32
    %0 = arith.cmpi eq, %arg0, %c0_i32 : i32
    %1 = arith.extui %0 : i1 to i32
    %c0_i32_0 = arith.constant 0 : i32
    %2 = arith.cmpi ne, %1, %c0_i32_0 : i32
    scf.if %2 {
      %cst_9 = arith.constant 0.000000e+00 : f32
      %13 = vector.broadcast %cst_9 : f32 to vector<8x1024xf32>
      %c0_10 = arith.constant 0 : index
      %c0_11 = arith.constant 0 : index
      %14 = vector.load %arg14[%c0_10, %c0_11] : memref<8x1024xf32, #tpu.memory_space<vmem>>, vector<8x1024xf32>
      tpu.vector_store %arg14[%c0_10, %c0_11], %13 {strides = array<i32>} : memref<8x1024xf32, #tpu.memory_space<vmem>>, vector<8x1024xf32>,
    } else {
    }
    %c0 = arith.constant 0 : index
    %c0_1 = arith.constant 0 : index
    %3 = vector.load %arg2[%c0, %c0_1] : memref<1024x1024xi8, #tpu.memory_space<vmem>>, vector<1024x1024xi8>
    %4 = arith.sitofp %3 : vector<1024x1024xi8> to vector<1024x1024xbf16>
    %c0_2 = arith.constant 0 : index
    %c0_3 = arith.constant 0 : index
    %5 = vector.load %arg14[%c0_2, %c0_3] : memref<8x1024xf32, #tpu.memory_space<vmem>>, vector<8x1024xf32>
    %c0_4 = arith.constant 0 : index
    %c0_5 = arith.constant 0 : index
    %6 = vector.load %arg1[%c0_4, %c0_5] : memref<8x1024xbf16, #tpu.memory_space<vmem>>, vector<8x1024xbf16>
    %cst = arith.constant dense<0.000000e+00> : vector<8x1024xf32>
    %7 = tpu.matmul %6, %4, %cst {dimension_numbers = #tpu.dot_dimension_numbers<[1], [0], [0], [1], [0, 0, 1, 1], [], []>} : vector<8x1024xbf16>, vector<1024x1024xbf16>, vector<8x1024xf32> -> vector<8x1024xf32>
    %8 = arith.addf %5, %7 : vector<8x1024xf32>
    %c0_6 = arith.constant 0 : index
    %c0_7 = arith.constant 0 : index
    %9 = vector.load %arg14[%c0_6, %c0_7] : memref<8x1024xf32, #tpu.memory_space<vmem>>, vector<8x1024xf32>
    tpu.vector_store %arg14[%c0_6, %c0_7], %8 {strides = array<i32>} : memref<8x1024xf32, #tpu.memory_space<vmem>>, vector<8x1024xf32>,
    %c3_i32 = arith.constant 3 : i32
    %10 = arith.cmpi eq, %arg0, %c3_i32 : i32
    %11 = arith.extui %10 : i1 to i32
    %c0_i32_8 = arith.constant 0 : i32
    %12 = arith.cmpi ne, %11, %c0_i32_8 : i32
    scf.if %12 {
      %c0_9 = arith.constant 0 : index
      %c0_10 = arith.constant 0 : index
      %13 = vector.load %arg14[%c0_9, %c0_10] : memref<8x1024xf32, #tpu.memory_space<vmem>>, vector<8x1024xf32>
      %c0_11 = arith.constant 0 : index
      %c0_12 = arith.constant 0 : index
      %14 = vector.load %arg3[%c0_11, %c0_12] : memref<1x1024xf32, #tpu.memory_space<vmem>>, vector<1x1024xf32>
      %15 = vector.broadcast %14 : vector<1x1024xf32> to vector<8x1024xf32>
      %16 = arith.mulf %13, %15 : vector<8x1024xf32>
      %c0_13 = arith.constant 0 : index
      %c0_14 = arith.constant 0 : index
      %17 = vector.load %arg4[%c0_13, %c0_14] : memref<1x1024xf32, #tpu.memory_space<vmem>>, vector<1x1024xf32>
      %18 = vector.broadcast %17 : vector<1x1024xf32> to vector<8x1024xf32>
      %19 = arith.addf %16, %18 : vector<8x1024xf32>
      %20 = arith.truncf %19 : vector<8x1024xf32> to vector<8x1024xbf16>
      %c0_15 = arith.constant 0 : index
      %c0_16 = arith.constant 0 : index
      %21 = vector.load %arg5[%c0_15, %c0_16] : memref<1024x256xbf16, #tpu.memory_space<vmem>>, vector<1024x256xbf16>
      %cst_17 = arith.constant dense<0.000000e+00> : vector<8x256xf32>
      %22 = tpu.matmul %20, %21, %cst_17 {dimension_numbers = #tpu.dot_dimension_numbers<[1], [0], [0], [1], [0, 0, 1, 1], [], []>} : vector<8x1024xbf16>, vector<1024x256xbf16>, vector<8x256xf32> -> vector<8x256xf32>
      %c0_18 = arith.constant 0 : index
      %c0_19 = arith.constant 0 : index
      %23 = vector.load %arg6[%c0_18, %c0_19] : memref<1x256xf32, #tpu.memory_space<vmem>>, vector<1x256xf32>
      %24 = vector.broadcast %23 : vector<1x256xf32> to vector<8x256xf32>
      %25 = arith.addf %22, %24 : vector<8x256xf32>
      %c0_20 = arith.constant 0 : index
      %c0_21 = arith.constant 0 : index
      %26 = vector.load %arg7[%c0_20, %c0_21] : memref<256x128xf32, #tpu.memory_space<vmem>>, vector<256x128xf32>
      %cst_22 = arith.constant dense<0.000000e+00> : vector<8x128xf32>
      %27 = tpu.matmul %25, %26, %cst_22 {dimension_numbers = #tpu.dot_dimension_numbers<[1], [0], [0], [1], [0, 0, 1, 1], [], []>} : vector<8x256xf32>, vector<256x128xf32>, vector<8x128xf32> -> vector<8x128xf32>
      %c0_23 = arith.constant 0 : index
      %c0_24 = arith.constant 0 : index
      %28 = vector.load %arg8[%c0_23, %c0_24] : memref<1x128xf32, #tpu.memory_space<vmem>>, vector<1x128xf32>
      %29 = vector.broadcast %28 : vector<1x128xf32> to vector<8x128xf32>
      %30 = arith.addf %27, %29 : vector<8x128xf32>
      %cst_25 = arith.constant 0.000000e+00 : f32
      %31 = vector.broadcast %cst_25 : f32 to vector<8x128xf32>
      %32 = arith.maximumf %30, %31 : vector<8x128xf32>
      %c0_26 = arith.constant 0 : index
      %c0_27 = arith.constant 0 : index
      %33 = vector.load %arg9[%c0_26, %c0_27] : memref<8x128xf32, #tpu.memory_space<vmem>>, vector<8x128xf32>
      %cst_28 = arith.constant 0.000000e+00 : f32
      %34 = vector.broadcast %cst_28 : f32 to vector<8x128xf32>
      %35 = arith.maximumf %33, %34 : vector<8x128xf32>
      %c0_29 = arith.constant 0 : index
      %c0_30 = arith.constant 0 : index
      %36 = vector.load %arg10[%c0_29, %c0_30] : memref<128x128xf32, #tpu.memory_space<vmem>>, vector<128x128xf32>
      %cst_31 = arith.constant dense<0.000000e+00> : vector<8x128xf32>
      %37 = tpu.matmul %32, %36, %cst_31 {dimension_numbers = #tpu.dot_dimension_numbers<[1], [0], [0], [1], [0, 0, 1, 1], [], []>} : vector<8x128xf32>, vector<128x128xf32>, vector<8x128xf32> -> vector<8x128xf32>
      %c0_32 = arith.constant 0 : index
      %c0_33 = arith.constant 0 : index
      %38 = vector.load %arg11[%c0_32, %c0_33] : memref<128x128xf32, #tpu.memory_space<vmem>>, vector<128x128xf32>
      %cst_34 = arith.constant dense<0.000000e+00> : vector<8x128xf32>
      %39 = tpu.matmul %35, %38, %cst_34 {dimension_numbers = #tpu.dot_dimension_numbers<[1], [0], [0], [1], [0, 0, 1, 1], [], []>} : vector<8x128xf32>, vector<128x128xf32>, vector<8x128xf32> -> vector<8x128xf32>
      %40 = arith.addf %37, %39 : vector<8x128xf32>
      %c0_35 = arith.constant 0 : index
      %c0_36 = arith.constant 0 : index
      %41 = vector.load %arg12[%c0_35, %c0_36] : memref<1x128xf32, #tpu.memory_space<vmem>>, vector<1x128xf32>
      %42 = vector.broadcast %41 : vector<1x128xf32> to vector<8x128xf32>
      %43 = arith.addf %40, %42 : vector<8x128xf32>
      %c0_37 = arith.constant 0 : index
      %c0_38 = arith.constant 0 : index
      %44 = vector.load %arg13[%c0_37, %c0_38] : memref<8x128xf32, #tpu.memory_space<vmem>>, vector<8x128xf32>
      tpu.vector_store %arg13[%c0_37, %c0_38], %43 {strides = array<i32>} : memref<8x128xf32, #tpu.memory_space<vmem>>, vector<8x128xf32>,
    } else {
    }
    return
  }
  func.func @transform_0(%arg0: i32) -> (i32, i32) {
    %c0_i32 = arith.constant 0 : i32
    %c0_i32_0 = arith.constant 0 : i32
    return %c0_i32, %arg0 : i32, i32
  }
  func.func @transform_1(%arg0: i32) -> (i32, i32) {
    %c0_i32 = arith.constant 0 : i32
    %c0_i32_0 = arith.constant 0 : i32
    return %arg0, %c0_i32 : i32, i32
  }
  func.func @transform_2(%arg0: i32) -> (i32, i32) {
    %c0_i32 = arith.constant 0 : i32
    %c0_i32_0 = arith.constant 0 : i32
    %c0_i32_1 = arith.constant 0 : i32
    return %c0_i32, %c0_i32_0 : i32, i32
  }
  func.func @transform_3(%arg0: i32) -> (i32, i32) {
    %c0_i32 = arith.constant 0 : i32
    %c0_i32_0 = arith.constant 0 : i32
    %c0_i32_1 = arith.constant 0 : i32
    return %c0_i32, %c0_i32_0 : i32, i32
  }
  func.func @transform_4(%arg0: i32) -> (i32, i32) {
    %c0_i32 = arith.constant 0 : i32
    %c0_i32_0 = arith.constant 0 : i32
    %c0_i32_1 = arith.constant 0 : i32
    return %c0_i32, %c0_i32_0 : i32, i32
  }
  func.func @transform_5(%arg0: i32) -> (i32, i32) {
    %c0_i32 = arith.constant 0 : i32
    %c0_i32_0 = arith.constant 0 : i32
    %c0_i32_1 = arith.constant 0 : i32
    return %c0_i32, %c0_i32_0 : i32, i32
  }
  func.func @transform_6(%arg0: i32) -> (i32, i32) {
    %c0_i32 = arith.constant 0 : i32
    %c0_i32_0 = arith.constant 0 : i32
    %c0_i32_1 = arith.constant 0 : i32
    return %c0_i32, %c0_i32_0 : i32, i32
  }
  func.func @transform_7(%arg0: i32) -> (i32, i32) {
    %c0_i32 = arith.constant 0 : i32
    %c0_i32_0 = arith.constant 0 : i32
    %c0_i32_1 = arith.constant 0 : i32
    return %c0_i32, %c0_i32_0 : i32, i32
  }
  func.func @transform_8(%arg0: i32) -> (i32, i32) {
    %c0_i32 = arith.constant 0 : i32
    %c0_i32_0 = arith.constant 0 : i32
    %c0_i32_1 = arith.constant 0 : i32
    return %c0_i32, %c0_i32_0 : i32, i32
  }
  func.func @transform_9(%arg0: i32) -> (i32, i32) {
    %c0_i32 = arith.constant 0 : i32
    %c0_i32_0 = arith.constant 0 : i32
    %c0_i32_1 = arith.constant 0 : i32
    return %c0_i32, %c0_i32_0 : i32, i32
  }
  func.func @transform_10(%arg0: i32) -> (i32, i32) {
    %c0_i32 = arith.constant 0 : i32
    %c0_i32_0 = arith.constant 0 : i32
    %c0_i32_1 = arith.constant 0 : i32
    return %c0_i32, %c0_i32_0 : i32, i32
  }
  func.func @transform_11(%arg0: i32) -> (i32, i32) {
    %c0_i32 = arith.constant 0 : i32
    %c0_i32_0 = arith.constant 0 : i32
    %c0_i32_1 = arith.constant 0 : i32
    return %c0_i32, %c0_i32_0 : i32, i32
  }
  func.func @transform_12(%arg0: i32) -> (i32, i32) {
    %c0_i32 = arith.constant 0 : i32
    %c0_i32_0 = arith.constant 0 : i32
    %c0_i32_1 = arith.constant 0 : i32
    return %c0_i32, %c0_i32_0 : i32, i32
  }
}

</mosaic_0001>

<llo_original>
// kernel: tpu_custom_call.1
$region0: #{tpu_custom_call.1}
  #allocation0 [shape = 'u32[]', space=smem, size = 0x4, offset = 0x4, fixed_abs, tag = 'smem constant byte address 0x4 - core index']
  #allocation1 [shape = 'u32[72,128]{1,0:T(1,128)}', space=vmem, size = 0x9000, scoped, tag = 'internal scratch']
  #allocation2 [shape = 'f32[8,1024]{1,0:T(8,128)}', space=vmem, size = 0x8000, scoped, tag = 'scratch operand']
  %s0 = inlined_call_operand.hbm [shape: bf16[8,4096], index: 0, kind: input, shape index: {}]
  %s1 = inlined_call_operand.hbm [shape: s8[4096,1024], index: 1, kind: input, shape index: {}]
  %s2 = inlined_call_operand.hbm [shape: f32[1,1024], index: 2, kind: input, shape index: {}]
  %s3 = inlined_call_operand.hbm [shape: f32[1,1024], index: 3, kind: input, shape index: {}]
  %s4 = inlined_call_operand.hbm [shape: bf16[1024,256], index: 4, kind: input, shape index: {}]
  %s5 = inlined_call_operand.hbm [shape: f32[1,256], index: 5, kind: input, shape index: {}]
  %s6 = inlined_call_operand.hbm [shape: f32[256,128], index: 6, kind: input, shape index: {}]
  %s7 = inlined_call_operand.hbm [shape: f32[1,128], index: 7, kind: input, shape index: {}]
  %s8 = inlined_call_operand.hbm [shape: f32[8,128], index: 8, kind: input, shape index: {}]
  %s9 = inlined_call_operand.hbm [shape: f32[128,128], index: 9, kind: input, shape index: {}]
  %s10 = inlined_call_operand.hbm [shape: f32[128,128], index: 10, kind: input, shape index: {}]
  %s11 = inlined_call_operand.hbm [shape: f32[1,128], index: 11, kind: input, shape index: {}]
  %s12 = inlined_call_operand.hbm [shape: f32[8,128], index: 12, kind: output, shape index: {}]
  %s13 = sld [smem:[#allocation0]]
  $region137: #{tpu_custom_call.1} parent=0
    _
  %s15 = ssub.s32 1, %s13
  %s16 = scalar_select 0, %s15, %s13
  $region1: #{tpu_custom_call.1} parent=0
    #allocation3 [shape = 'u8[32768]{0}', space=vmem, size = 0x8000, scoped, tag = 'input window, operand 0']
    #allocation4 [shape = 's32[2]{0}', space=sflag, size = 0x8, scoped, tag = 'scoped memory for tpu_custom_call.1']
    #allocation5 [shape = 's32[2]{0}', space=sflag, size = 0x8, scoped, tag = 'scoped memory for tpu_custom_call.1']
    #allocation6 [shape = 'u8[2097152]{0}', space=vmem, size = 0x200000, scoped, tag = 'input window, operand 1']
    #allocation7 [shape = 's32[2]{0}', space=sflag, size = 0x8, scoped, tag = 'scoped memory for tpu_custom_call.1']
    #allocation8 [shape = 'u8[4096]{0}', space=vmem, size = 0x1000, scoped, tag = 'input window, operand 2, single buffered']
    #allocation9 [shape = 'u8[4096]{0}', space=vmem, size = 0x1000, scoped, tag = 'input window, operand 3, single buffered']
    #allocation10 [shape = 's32[1]{0}', space=sflag, size = 0x4, scoped, tag = 'scoped memory for tpu_custom_call.1']
    #allocation11 [shape = 'u8[524288]{0}', space=vmem, size = 0x80000, scoped, tag = 'input window, operand 4, single buffered']
    #allocation12 [shape = 'u8[1024]{0}', space=vmem, size = 0x400, scoped, tag = 'input window, operand 5, single buffered']
    #allocation13 [shape = 's32[1]{0}', space=sflag, size = 0x4, scoped, tag = 'scoped memory for tpu_custom_call.1']
    #allocation14 [shape = 'u8[131072]{0}', space=vmem, size = 0x20000, scoped, tag = 'input window, operand 6, single buffered']
    #allocation15 [shape = 'u8[512]{0}', space=vmem, size = 0x400, scoped, tag = 'input window, operand 7, single buffered']
    #allocation16 [shape = 's32[1]{0}', space=sflag, size = 0x4, scoped, tag = 'scoped memory for tpu_custom_call.1']
    #allocation17 [shape = 'u8[4096]{0}', space=vmem, size = 0x1000, scoped, tag = 'input window, operand 8, single buffered']
    #allocation18 [shape = 'u8[65536]{0}', space=vmem, size = 0x10000, scoped, tag = 'input window, operand 9, single buffered']
    #allocation19 [shape = 's32[1]{0}', space=sflag, size = 0x4, scoped, tag = 'scoped memory for tpu_custom_call.1']
    #allocation20 [shape = 'u8[65536]{0}', space=vmem, size = 0x10000, scoped, tag = 'input window, operand 10, single buffered']
    #allocation21 [shape = 'u8[512]{0}', space=vmem, size = 0x400, scoped, tag = 'input window, operand 11, single buffered']
    #allocation22 [shape = 's32[1]{0}', space=sflag, size = 0x4, scoped, tag = 'scoped memory for tpu_custom_call.1']
    #allocation23 [shape = 'u8[4096]{0}', space=vmem, size = 0x1000, scoped, tag = 'output window, operand 0, single buffered']
    %17 = vsyncpa [#allocation4], 0
    %s18 = scalar_lea.sflag [#allocation4], 1
    %19 = vsyncpa %s18, 0
    %20 = vsyncpa [#allocation7], 0
    %s21 = scalar_lea.sflag [#allocation7], 1
    %22 = vsyncpa %s21, 0
    %23 = vsyncpa [#allocation10], 0
    %24 = vsyncpa [#allocation13], 0
    %25 = vsyncpa [#allocation16], 0
    %26 = vsyncpa [#allocation19], 0
    %27 = vsyncpa [#allocation22], 0
    %28 = vsyncpa [#allocation5], 0
    loop: start=0, step=1, limit=6
    $region2: #{tpu_custom_call.1} parent=1 // loop_pre_header
      _
    $region3: #{tpu_custom_call.1} parent=1 // loop_header
      %s30 = sphi 0, %s34
      %p31 = scmp.ge.s32.totalorder %s30, 6
      %s40 = sphi 0, %s42
      %s43 = sphi 0, %s40
      %s44 = sphi 0, %s43
      %s60 = sphi 0, %s44
      %s66 = sphi 0, %s68
      %s69 = sphi 0, %s66
      %s70 = sphi 0, %s69
      %s86 = sphi 0, %s70
      %s90 = sphi 0, %s90
      %s92 = sphi 0, %s90
      %s93 = sphi 0, %s92
      %s107 = sphi 0, %s93
      %s111 = sphi 0, %s111
      %s113 = sphi 0, %s111
      %s114 = sphi 0, %s113
      %s128 = sphi 0, %s114
      %s132 = sphi 0, %s132
      %s134 = sphi 0, %s132
      %s135 = sphi 0, %s134
      %s149 = sphi 0, %s135
      %s153 = sphi 0, %s153
      %s155 = sphi 0, %s153
      %s156 = sphi 0, %s155
      %s170 = sphi 0, %s156
      %s174 = sphi 0, %s174
      %s176 = sphi 0, %s174
      %s177 = sphi 0, %s176
      %s191 = sphi 0, %s177
      %s195 = sphi 0, %s195
      %s197 = sphi 0, %s195
      %s198 = sphi 0, %s197
      %s212 = sphi 0, %s198
      %s216 = sphi 0, %s216
      %s218 = sphi 0, %s216
      %s219 = sphi 0, %s218
      %s233 = sphi 0, %s219
      %s237 = sphi 0, %s237
      %s239 = sphi 0, %s237
      %s240 = sphi 0, %s239
      %s254 = sphi 0, %s240
      %s258 = sphi 0, %s258
      %s260 = sphi 0, %s258
      %s261 = sphi 0, %s260
      %s275 = sphi 0, %s261
      %s279 = sphi 0, %s279
      %s281 = sphi 0, %s279
      %s282 = sphi 0, %s281
      %s296 = sphi 0, %s282
      %s300 = sphi 0, %s300
      %s302 = sphi 0, %s300
      %s303 = sphi 0, %s302
      %s317 = sphi 0, %s303
    $region4: #{tpu_custom_call.1} parent=1 // loop_header_branch
      %33 = sbr.rel (%p31) target = $region8
    $region5: #{tpu_custom_call.1} parent=1 // loop_body
      %s35 = ssub.s32 %s30, 1
      %s36 = ssub.s32 %s30, 2
      %s37 = sadd.s32 %s30, 1
      %s38 = ssub.s32 %s30, %s37
      %p39 = scmp.eq.s32.totalorder %s38, 0
      %s41 = sadd.s32 %s40, 1
      %s42 = scalar_select %p39, %s40, %s41
      %p45 = pneg %p39
      %p46 = scmp.eq.s32.totalorder %s30, 3
      %p47 = por %p45, %p46
      %p48 = scmp.ne.s32.totalorder %s40, %s43
      %p49 = scmp.eq.s32.totalorder %s30, 0
      %p50 = por %p48, %p49
      %p51 = scmp.ne.s32.totalorder %s40, %s43
      %p52 = scmp.eq.s32.totalorder %s35, 3
      %p53 = por %p51, %p52
      %p54 = scmp.ne.s32.totalorder %s43, %s44
      %p55 = scmp.eq.s32.totalorder %s35, 0
      %p56 = por %p54, %p55
      %p57 = scmp.ne.s32.totalorder %s43, %s44
      %p58 = scmp.eq.s32.totalorder %s36, 3
      %p59 = por %p57, %p58
      %p61 = scmp.ne.s32.totalorder %s44, %s60
      %p62 = scmp.eq.s32.totalorder %s36, 0
      %p63 = por %p61, %p62
      %s64 = ssub.s32 %s30, %s37
      %p65 = scmp.eq.s32.totalorder %s64, 0
      %s67 = sadd.s32 %s66, 1
      %s68 = scalar_select %p65, %s66, %s67
      %p71 = pneg %p65
      %p72 = scmp.eq.s32.totalorder %s30, 3
      %p73 = por %p71, %p72
      %p74 = scmp.ne.s32.totalorder %s66, %s69
      %p75 = scmp.eq.s32.totalorder %s30, 0
      %p76 = por %p74, %p75
      %p77 = scmp.ne.s32.totalorder %s66, %s69
      %p78 = scmp.eq.s32.totalorder %s35, 3
      %p79 = por %p77, %p78
      %p80 = scmp.ne.s32.totalorder %s69, %s70
      %p81 = scmp.eq.s32.totalorder %s35, 0
      %p82 = por %p80, %p81
      %p83 = scmp.ne.s32.totalorder %s69, %s70
      %p84 = scmp.eq.s32.totalorder %s36, 3
      %p85 = por %p83, %p84
      %p87 = scmp.ne.s32.totalorder %s70, %s86
      %p88 = scmp.eq.s32.totalorder %s36, 0
      %p89 = por %p87, %p88
      %s91 = sadd.s32 %s90, 1
      %p94 = scmp.eq.s32.totalorder %s30, 3
      %p95 = scmp.ne.s32.totalorder %s90, %s92
      %p96 = scmp.eq.s32.totalorder %s30, 0
      %p97 = por %p95, %p96
      %p98 = scmp.ne.s32.totalorder %s90, %s92
      %p99 = scmp.eq.s32.totalorder %s35, 3
      %p100 = por %p98, %p99
      %p101 = scmp.ne.s32.totalorder %s92, %s93
      %p102 = scmp.eq.s32.totalorder %s35, 0
      %p103 = por %p101, %p102
      %p104 = scmp.ne.s32.totalorder %s92, %s93
      %p105 = scmp.eq.s32.totalorder %s36, 3
      %p106 = por %p104, %p105
      %p108 = scmp.ne.s32.totalorder %s93, %s107
      %p109 = scmp.eq.s32.totalorder %s36, 0
      %p110 = por %p108, %p109
      %s112 = sadd.s32 %s111, 1
      %p115 = scmp.eq.s32.totalorder %s30, 3
      %p116 = scmp.ne.s32.totalorder %s111, %s113
      %p117 = scmp.eq.s32.totalorder %s30, 0
      %p118 = por %p116, %p117
      %p119 = scmp.ne.s32.totalorder %s111, %s113
      %p120 = scmp.eq.s32.totalorder %s35, 3
      %p121 = por %p119, %p120
      %p122 = scmp.ne.s32.totalorder %s113, %s114
      %p123 = scmp.eq.s32.totalorder %s35, 0
      %p124 = por %p122, %p123
      %p125 = scmp.ne.s32.totalorder %s113, %s114
      %p126 = scmp.eq.s32.totalorder %s36, 3
      %p127 = por %p125, %p126
      %p129 = scmp.ne.s32.totalorder %s114, %s128
      %p130 = scmp.eq.s32.totalorder %s36, 0
      %p131 = por %p129, %p130
      %s133 = sadd.s32 %s132, 1
      %p136 = scmp.eq.s32.totalorder %s30, 3
      %p137 = scmp.ne.s32.totalorder %s132, %s134
      %p138 = scmp.eq.s32.totalorder %s30, 0
      %p139 = por %p137, %p138
      %p140 = scmp.ne.s32.totalorder %s132, %s134
      %p141 = scmp.eq.s32.totalorder %s35, 3
      %p142 = por %p140, %p141
      %p143 = scmp.ne.s32.totalorder %s134, %s135
      %p144 = scmp.eq.s32.totalorder %s35, 0
      %p145 = por %p143, %p144
      %p146 = scmp.ne.s32.totalorder %s134, %s135
      %p147 = scmp.eq.s32.totalorder %s36, 3
      %p148 = por %p146, %p147
      %p150 = scmp.ne.s32.totalorder %s135, %s149
      %p151 = scmp.eq.s32.totalorder %s36, 0
      %p152 = por %p150, %p151
      %s154 = sadd.s32 %s153, 1
      %p157 = scmp.eq.s32.totalorder %s30, 3
      %p158 = scmp.ne.s32.totalorder %s153, %s155
      %p159 = scmp.eq.s32.totalorder %s30, 0
      %p160 = por %p158, %p159
      %p161 = scmp.ne.s32.totalorder %s153, %s155
      %p162 = scmp.eq.s32.totalorder %s35, 3
      %p163 = por %p161, %p162
      %p164 = scmp.ne.s32.totalorder %s155, %s156
      %p165 = scmp.eq.s32.totalorder %s35, 0
      %p166 = por %p164, %p165
      %p167 = scmp.ne.s32.totalorder %s155, %s156
      %p168 = scmp.eq.s32.totalorder %s36, 3
      %p169 = por %p167, %p168
      %p171 = scmp.ne.s32.totalorder %s156, %s170
      %p172 = scmp.eq.s32.totalorder %s36, 0
      %p173 = por %p171, %p172
      %s175 = sadd.s32 %s174, 1
      %p178 = scmp.eq.s32.totalorder %s30, 3
      %p179 = scmp.ne.s32.totalorder %s174, %s176
      %p180 = scmp.eq.s32.totalorder %s30, 0
      %p181 = por %p179, %p180
      %p182 = scmp.ne.s32.totalorder %s174, %s176
      %p183 = scmp.eq.s32.totalorder %s35, 3
      %p184 = por %p182, %p183
      %p185 = scmp.ne.s32.totalorder %s176, %s177
      %p186 = scmp.eq.s32.totalorder %s35, 0
      %p187 = por %p185, %p186
      %p188 = scmp.ne.s32.totalorder %s176, %s177
      %p189 = scmp.eq.s32.totalorder %s36, 3
      %p190 = por %p188, %p189
      %p192 = scmp.ne.s32.totalorder %s177, %s191
      %p193 = scmp.eq.s32.totalorder %s36, 0
      %p194 = por %p192, %p193
      %s196 = sadd.s32 %s195, 1
      %p199 = scmp.eq.s32.totalorder %s30, 3
      %p200 = scmp.ne.s32.totalorder %s195, %s197
      %p201 = scmp.eq.s32.totalorder %s30, 0
      %p202 = por %p200, %p201
      %p203 = scmp.ne.s32.totalorder %s195, %s197
      %p204 = scmp.eq.s32.totalorder %s35, 3
      %p205 = por %p203, %p204
      %p206 = scmp.ne.s32.totalorder %s197, %s198
      %p207 = scmp.eq.s32.totalorder %s35, 0
      %p208 = por %p206, %p207
      %p209 = scmp.ne.s32.totalorder %s197, %s198
      %p210 = scmp.eq.s32.totalorder %s36, 3
      %p211 = por %p209, %p210
      %p213 = scmp.ne.s32.totalorder %s198, %s212
      %p214 = scmp.eq.s32.totalorder %s36, 0
      %p215 = por %p213, %p214
      %s217 = sadd.s32 %s216, 1
      %p220 = scmp.eq.s32.totalorder %s30, 3
      %p221 = scmp.ne.s32.totalorder %s216, %s218
      %p222 = scmp.eq.s32.totalorder %s30, 0
      %p223 = por %p221, %p222
      %p224 = scmp.ne.s32.totalorder %s216, %s218
      %p225 = scmp.eq.s32.totalorder %s35, 3
      %p226 = por %p224, %p225
      %p227 = scmp.ne.s32.totalorder %s218, %s219
      %p228 = scmp.eq.s32.totalorder %s35, 0
      %p229 = por %p227, %p228
      %p230 = scmp.ne.s32.totalorder %s218, %s219
      %p231 = scmp.eq.s32.totalorder %s36, 3
      %p232 = por %p230, %p231
      %p234 = scmp.ne.s32.totalorder %s219, %s233
      %p235 = scmp.eq.s32.totalorder %s36, 0
      %p236 = por %p234, %p235
      %s238 = sadd.s32 %s237, 1
      %p241 = scmp.eq.s32.totalorder %s30, 3
      %p242 = scmp.ne.s32.totalorder %s237, %s239
      %p243 = scmp.eq.s32.totalorder %s30, 0
      %p244 = por %p242, %p243
      %p245 = scmp.ne.s32.totalorder %s237, %s239
      %p246 = scmp.eq.s32.totalorder %s35, 3
      %p247 = por %p245, %p246
      %p248 = scmp.ne.s32.totalorder %s239, %s240
      %p249 = scmp.eq.s32.totalorder %s35, 0
      %p250 = por %p248, %p249
      %p251 = scmp.ne.s32.totalorder %s239, %s240
      %p252 = scmp.eq.s32.totalorder %s36, 3
      %p253 = por %p251, %p252
      %p255 = scmp.ne.s32.totalorder %s240, %s254
      %p256 = scmp.eq.s32.totalorder %s36, 0
      %p257 = por %p255, %p256
      %s259 = sadd.s32 %s258, 1
      %p262 = scmp.eq.s32.totalorder %s30, 3
      %p263 = scmp.ne.s32.totalorder %s258, %s260
      %p264 = scmp.eq.s32.totalorder %s30, 0
      %p265 = por %p263, %p264
      %p266 = scmp.ne.s32.totalorder %s258, %s260
      %p267 = scmp.eq.s32.totalorder %s35, 3
      %p268 = por %p266, %p267
      %p269 = scmp.ne.s32.totalorder %s260, %s261
      %p270 = scmp.eq.s32.totalorder %s35, 0
      %p271 = por %p269, %p270
      %p272 = scmp.ne.s32.totalorder %s260, %s261
      %p273 = scmp.eq.s32.totalorder %s36, 3
      %p274 = por %p272, %p273
      %p276 = scmp.ne.s32.totalorder %s261, %s275
      %p277 = scmp.eq.s32.totalorder %s36, 0
      %p278 = por %p276, %p277
      %s280 = sadd.s32 %s279, 1
      %p283 = scmp.eq.s32.totalorder %s30, 3
      %p284 = scmp.ne.s32.totalorder %s279, %s281
      %p285 = scmp.eq.s32.totalorder %s30, 0
      %p286 = por %p284, %p285
      %p287 = scmp.ne.s32.totalorder %s279, %s281
      %p288 = scmp.eq.s32.totalorder %s35, 3
      %p289 = por %p287, %p288
      %p290 = scmp.ne.s32.totalorder %s281, %s282
      %p291 = scmp.eq.s32.totalorder %s35, 0
      %p292 = por %p290, %p291
      %p293 = scmp.ne.s32.totalorder %s281, %s282
      %p294 = scmp.eq.s32.totalorder %s36, 3
      %p295 = por %p293, %p294
      %p297 = scmp.ne.s32.totalorder %s282, %s296
      %p298 = scmp.eq.s32.totalorder %s36, 0
      %p299 = por %p297, %p298
      %s301 = sadd.s32 %s300, 1
      %p304 = scmp.eq.s32.totalorder %s30, 3
      %p305 = scmp.ne.s32.totalorder %s300, %s302
      %p306 = scmp.eq.s32.totalorder %s30, 0
      %p307 = por %p305, %p306
      %p308 = scmp.ne.s32.totalorder %s300, %s302
      %p309 = scmp.eq.s32.totalorder %s35, 3
      %p310 = por %p308, %p309
      %p311 = scmp.ne.s32.totalorder %s302, %s303
      %p312 = scmp.eq.s32.totalorder %s35, 0
      %p313 = por %p311, %p312
      %p314 = scmp.ne.s32.totalorder %s302, %s303
      %p315 = scmp.eq.s32.totalorder %s36, 3
      %p316 = por %p314, %p315
      %p318 = scmp.ne.s32.totalorder %s303, %s317
      %p319 = scmp.eq.s32.totalorder %s36, 0
      %p320 = por %p318, %p319
      %p321 = scmp.le.s32.totalorder 1, %s30
      %p322 = scmp.lt.s32.totalorder %s30, 5
      %p323 = pnand %p321, %p322
      %p324 = pneg %p323
      // Predicated region
      $region9: #{tpu_custom_call.1} parent=5 // pred_check
        _
      $region10: #{tpu_custom_call.1} parent=5 // pred_check_branch
        %326 = sbr.rel (%p323) target = $region12
      $region11: #{tpu_custom_call.1} parent=5 // pred_region
        %s327 = ssub.s32 %s30, 1
        // Predicated region
        $region13: #{tpu_custom_call.1} parent=11 // pred_check
          %p328 = pneg %p103
        $region14: #{tpu_custom_call.1} parent=11 // pred_check_branch
          %330 = sbr.rel (%p328) target = $region16
        $region15: #{tpu_custom_call.1} parent=11 // pred_region
          %332 = vsyncadd [#allocation7], 0
          %s334 = sshll.u32 %s2, 4
          %s335 = int_to_ptr.hbm [resolvable:$true] %s334
          %s336 = sshll.u32 [#allocation8], 4
          %s337 = int_to_ptr.vmem [resolvable:$true] %s336
          %339 = dma.hbm_to_vmem [thread:$0]  %s335, 128, %s337, [#allocation7]
        $region16: #{tpu_custom_call.1} parent=11 // pred_fallthru
          _
        // Predicated region
        $region17: #{tpu_custom_call.1} parent=11 // pred_check
          %p340 = pneg %p124
        $region18: #{tpu_custom_call.1} parent=11 // pred_check_branch
          %342 = sbr.rel (%p340) target = $region20
        $region19: #{tpu_custom_call.1} parent=11 // pred_region
          %344 = vsyncadd [#allocation10], 0
          %s346 = sshll.u32 %s3, 4
          %s347 = int_to_ptr.hbm [resolvable:$true] %s346
          %s348 = sshll.u32 [#allocation9], 4
          %s349 = int_to_ptr.vmem [resolvable:$true] %s348
          %351 = dma.hbm_to_vmem [thread:$0]  %s347, 128, %s349, [#allocation10]
        $region20: #{tpu_custom_call.1} parent=11 // pred_fallthru
          _
        // Predicated region
        $region21: #{tpu_custom_call.1} parent=11 // pred_check
          %p352 = pneg %p145
        $region22: #{tpu_custom_call.1} parent=11 // pred_check_branch
          %354 = sbr.rel (%p352) target = $region24
        $region23: #{tpu_custom_call.1} parent=11 // pred_region
          %356 = vsyncadd [#allocation10], 0
          %s357 = sshll.u32 %s4, 4
          %s358 = int_to_ptr.hbm [resolvable:$true] %s357
          %s359 = sshll.u32 [#allocation11], 4
          %s360 = int_to_ptr.vmem [resolvable:$true] %s359
          %365 = dma.hbm_to_vmem [thread:$0]  %s358, 16384, %s360, [#allocation10], 128, 128, 8
        $region24: #{tpu_custom_call.1} parent=11 // pred_fallthru
          _
        // Predicated region
        $region25: #{tpu_custom_call.1} parent=11 // pred_check
          %p366 = pneg %p166
        $region26: #{tpu_custom_call.1} parent=11 // pred_check_branch
          %368 = sbr.rel (%p366) target = $region28
        $region27: #{tpu_custom_call.1} parent=11 // pred_region
          %370 = vsyncadd [#allocation13], 0
          %s372 = sshll.u32 %s5, 4
          %s373 = int_to_ptr.hbm [resolvable:$true] %s372
          %s374 = sshll.u32 [#allocation12], 4
          %s375 = int_to_ptr.vmem [resolvable:$true] %s374
          %377 = dma.hbm_to_vmem [thread:$0]  %s373, 32, %s375, [#allocation13]
        $region28: #{tpu_custom_call.1} parent=11 // pred_fallthru
          _
        // Predicated region
        $region29: #{tpu_custom_call.1} parent=11 // pred_check
          %p378 = pneg %p187
        $region30: #{tpu_custom_call.1} parent=11 // pred_check_branch
          %380 = sbr.rel (%p378) target = $region32
        $region31: #{tpu_custom_call.1} parent=11 // pred_region
          %382 = vsyncadd [#allocation13], 0
          %s383 = sshll.u32 %s6, 4
          %s384 = int_to_ptr.hbm [resolvable:$true] %s383
          %s385 = sshll.u32 [#allocation14], 4
          %s386 = int_to_ptr.vmem [resolvable:$true] %s385
          %391 = dma.hbm_to_vmem [thread:$0]  %s384, 4096, %s386, [#allocation13], 128, 128, 8
        $region32: #{tpu_custom_call.1} parent=11 // pred_fallthru
          _
        // Predicated region
        $region33: #{tpu_custom_call.1} parent=11 // pred_check
          %p392 = pneg %p208
        $region34: #{tpu_custom_call.1} parent=11 // pred_check_branch
          %394 = sbr.rel (%p392) target = $region36
        $region35: #{tpu_custom_call.1} parent=11 // pred_region
          %396 = vsyncadd [#allocation16], 0
          %s398 = sshll.u32 %s7, 4
          %s399 = int_to_ptr.hbm [resolvable:$true] %s398
          %s400 = sshll.u32 [#allocation15], 4
          %s401 = int_to_ptr.vmem [resolvable:$true] %s400
          %403 = dma.hbm_to_vmem [thread:$0]  %s399, 16, %s401, [#allocation16]
        $region36: #{tpu_custom_call.1} parent=11 // pred_fallthru
          _
        // Predicated region
        $region37: #{tpu_custom_call.1} parent=11 // pred_check
          %p404 = pneg %p229
        $region38: #{tpu_custom_call.1} parent=11 // pred_check_branch
          %406 = sbr.rel (%p404) target = $region40
        $region39: #{tpu_custom_call.1} parent=11 // pred_region
          %408 = vsyncadd [#allocation16], 0
          %s410 = sshll.u32 %s8, 4
          %s411 = int_to_ptr.hbm [resolvable:$true] %s410
          %s412 = sshll.u32 [#allocation17], 4
          %s413 = int_to_ptr.vmem [resolvable:$true] %s412
          %415 = dma.hbm_to_vmem [thread:$0]  %s411, 128, %s413, [#allocation16]
        $region40: #{tpu_custom_call.1} parent=11 // pred_fallthru
          _
        // Predicated region
        $region41: #{tpu_custom_call.1} parent=11 // pred_check
          %p416 = pneg %p250
        $region42: #{tpu_custom_call.1} parent=11 // pred_check_branch
          %418 = sbr.rel (%p416) target = $region44
        $region43: #{tpu_custom_call.1} parent=11 // pred_region
          %420 = vsyncadd [#allocation19], 0
          %s421 = sshll.u32 %s9, 4
          %s422 = int_to_ptr.hbm [resolvable:$true] %s421
          %s423 = sshll.u32 [#allocation18], 4
          %s424 = int_to_ptr.vmem [resolvable:$true] %s423
          %429 = dma.hbm_to_vmem [thread:$0]  %s422, 2048, %s424, [#allocation19], 128, 128, 8
        $region44: #{tpu_custom_call.1} parent=11 // pred_fallthru
          _
        // Predicated region
        $region45: #{tpu_custom_call.1} parent=11 // pred_check
          %p430 = pneg %p271
        $region46: #{tpu_custom_call.1} parent=11 // pred_check_branch
          %432 = sbr.rel (%p430) target = $region48
        $region47: #{tpu_custom_call.1} parent=11 // pred_region
          %434 = vsyncadd [#allocation19], 0
          %s435 = sshll.u32 %s10, 4
          %s436 = int_to_ptr.hbm [resolvable:$true] %s435
          %s437 = sshll.u32 [#allocation20], 4
          %s438 = int_to_ptr.vmem [resolvable:$true] %s437
          %443 = dma.hbm_to_vmem [thread:$0]  %s436, 2048, %s438, [#allocation19], 128, 128, 8
        $region48: #{tpu_custom_call.1} parent=11 // pred_fallthru
          _
        // Predicated region
        $region49: #{tpu_custom_call.1} parent=11 // pred_check
          %p444 = pneg %p292
        $region50: #{tpu_custom_call.1} parent=11 // pred_check_branch
          %446 = sbr.rel (%p444) target = $region52
        $region51: #{tpu_custom_call.1} parent=11 // pred_region
          %448 = vsyncadd [#allocation22], 0
          %s450 = sshll.u32 %s11, 4
          %s451 = int_to_ptr.hbm [resolvable:$true] %s450
          %s452 = sshll.u32 [#allocation21], 4
          %s453 = int_to_ptr.vmem [resolvable:$true] %s452
          %455 = dma.hbm_to_vmem [thread:$0]  %s451, 16, %s453, [#allocation22]
        $region52: #{tpu_custom_call.1} parent=11 // pred_fallthru
          _
      $region12: #{tpu_custom_call.1} parent=5 // pred_fallthru
        _
      %p456 = scmp.lt.s32.totalorder %s30, 4
      // Predicated region
      $region53: #{tpu_custom_call.1} parent=5 // pred_check
        %p457 = pneg %p456
      $region54: #{tpu_custom_call.1} parent=5 // pred_check_branch
        %459 = sbr.rel (%p457) target = $region56
      $region55: #{tpu_custom_call.1} parent=5 // pred_region
        // Predicated region
        $region57: #{tpu_custom_call.1} parent=55 // pred_check
          %p460 = pneg %p50
        $region58: #{tpu_custom_call.1} parent=55 // pred_check_branch
          %462 = sbr.rel (%p460) target = $region60
        $region59: #{tpu_custom_call.1} parent=55 // pred_region
          %s463 = sand.u32 %s40, 1
          %s464 = scalar_lea.sflag [#allocation4], %s463
          %s465 = sand.u32 %s40, 1
          %s466 = smul.addr %s465, 32
          %s467 = scalar_lea.vmem [#allocation3], %s466
          %s468 = smul.u32 8, %s30
          %470 = vsyncadd %s464, 0
          %s471 = smul.addr %s468, 4
          %s472 = scalar_lea.hbm %s0, %s471
          %s474 = sshll.u32 %s472, 4
          %s475 = int_to_ptr.hbm [resolvable:$true] %s474
          %s476 = sshll.u32 %s467, 4
          %s477 = int_to_ptr.vmem [resolvable:$true] %s476
          %479 = dma.hbm_to_vmem [thread:$0]  %s475, 512, %s477, %s464
        $region60: #{tpu_custom_call.1} parent=55 // pred_fallthru
          _
        // Predicated region
        $region61: #{tpu_custom_call.1} parent=55 // pred_check
          %p480 = pneg %p76
        $region62: #{tpu_custom_call.1} parent=55 // pred_check_branch
          %482 = sbr.rel (%p480) target = $region64
        $region63: #{tpu_custom_call.1} parent=55 // pred_region
          %s483 = sand.u32 %s30, 1
          %s484 = scalar_lea.sflag [#allocation7], %s483
          %s485 = sand.u32 %s66, 1
          %s486 = smul.addr %s485, 2048
          %s487 = scalar_lea.vmem [#allocation6], %s486
          %s488 = smul.u32 32, %s30
          %490 = vsyncadd %s484, 0
          %s491 = smul.addr %s488, 8
          %s492 = smul.addr %s491, 8
          %s493 = scalar_lea.hbm %s1, %s492
          %s494 = sshll.u32 %s493, 4
          %s495 = int_to_ptr.hbm [resolvable:$true] %s494
          %s496 = sshll.u32 %s487, 4
          %s497 = int_to_ptr.vmem [resolvable:$true] %s496
          %502 = dma.hbm_to_vmem [thread:$0]  %s495, 32768, %s497, %s484, 1024, 1024, 64
        $region64: #{tpu_custom_call.1} parent=55 // pred_fallthru
          _
      $region56: #{tpu_custom_call.1} parent=5 // pred_fallthru
        _
      %p503 = scmp.le.s32.totalorder 1, %s30
      %p504 = scmp.lt.s32.totalorder %s30, 5
      %p505 = pnand %p503, %p504
      %p506 = pneg %p505
      // Predicated region
      $region65: #{tpu_custom_call.1} parent=5 // pred_check
        _
      $region66: #{tpu_custom_call.1} parent=5 // pred_check_branch
        %508 = sbr.rel (%p505) target = $region68
      $region67: #{tpu_custom_call.1} parent=5 // pred_region
        %s509 = ssub.s32 %s30, 1
        %s510 = sand.u32 %s43, 1
        %s511 = scalar_lea.sflag [#allocation4], %s510
        %s512 = sand.u32 %s43, 1
        %s513 = smul.addr %s512, 32
        %s514 = scalar_lea.vmem [#allocation3], %s513
        // Predicated region
        $region69: #{tpu_custom_call.1} parent=67 // pred_check
          %p515 = pneg %p56
        $region70: #{tpu_custom_call.1} parent=67 // pred_check_branch
          %517 = sbr.rel (%p515) target = $region72
        $region71: #{tpu_custom_call.1} parent=67 // pred_region
          %519 = dma.done %s511, 512
        $region72: #{tpu_custom_call.1} parent=67 // pred_fallthru
          _
        %s520 = sand.u32 %s35, 1
        %s521 = scalar_lea.sflag [#allocation7], %s520
        %s522 = sand.u32 %s69, 1
        %s523 = smul.addr %s522, 2048
        %s524 = scalar_lea.vmem [#allocation6], %s523
        // Predicated region
        $region73: #{tpu_custom_call.1} parent=67 // pred_check
          %p525 = pneg %p82
        $region74: #{tpu_custom_call.1} parent=67 // pred_check_branch
          %527 = sbr.rel (%p525) target = $region76
        $region75: #{tpu_custom_call.1} parent=67 // pred_region
          %529 = dma.done %s521, 32768
        $region76: #{tpu_custom_call.1} parent=67 // pred_fallthru
          _
        // Predicated region
        $region77: #{tpu_custom_call.1} parent=67 // pred_check
          %p530 = pneg %p103
        $region78: #{tpu_custom_call.1} parent=67 // pred_check_branch
          %532 = sbr.rel (%p530) target = $region80
        $region79: #{tpu_custom_call.1} parent=67 // pred_region
          %534 = dma.done [#allocation7], 128
        $region80: #{tpu_custom_call.1} parent=67 // pred_fallthru
          _
        // Predicated region
        $region81: #{tpu_custom_call.1} parent=67 // pred_check
          %p535 = pneg %p124
        $region82: #{tpu_custom_call.1} parent=67 // pred_check_branch
          %537 = sbr.rel (%p535) target = $region84
        $region83: #{tpu_custom_call.1} parent=67 // pred_region
          %539 = dma.done [#allocation10], 128
        $region84: #{tpu_custom_call.1} parent=67 // pred_fallthru
          _
        // Predicated region
        $region85: #{tpu_custom_call.1} parent=67 // pred_check
          %p540 = pneg %p145
        $region86: #{tpu_custom_call.1} parent=67 // pred_check_branch
          %542 = sbr.rel (%p540) target = $region88
        $region87: #{tpu_custom_call.1} parent=67 // pred_region
          %544 = dma.done [#allocation10], 16384
        $region88: #{tpu_custom_call.1} parent=67 // pred_fallthru
          _
        // Predicated region
        $region89: #{tpu_custom_call.1} parent=67 // pred_check
          %p545 = pneg %p166
        $region90: #{tpu_custom_call.1} parent=67 // pred_check_branch
          %547 = sbr.rel (%p545) target = $region92
        $region91: #{tpu_custom_call.1} parent=67 // pred_region
          %549 = dma.done [#allocation13], 32
        $region92: #{tpu_custom_call.1} parent=67 // pred_fallthru
          _
        // Predicated region
        $region93: #{tpu_custom_call.1} parent=67 // pred_check
          %p550 = pneg %p187
        $region94: #{tpu_custom_call.1} parent=67 // pred_check_branch
          %552 = sbr.rel (%p550) target = $region96
        $region95: #{tpu_custom_call.1} parent=67 // pred_region
          %554 = dma.done [#allocation13], 4096
        $region96: #{tpu_custom_call.1} parent=67 // pred_fallthru
          _
        // Predicated region
        $region97: #{tpu_custom_call.1} parent=67 // pred_check
          %p555 = pneg %p208
        $region98: #{tpu_custom_call.1} parent=67 // pred_check_branch
          %557 = sbr.rel (%p555) target = $region100
        $region99: #{tpu_custom_call.1} parent=67 // pred_region
          %559 = dma.done [#allocation16], 16
        $region100: #{tpu_custom_call.1} parent=67 // pred_fallthru
          _
        // Predicated region
        $region101: #{tpu_custom_call.1} parent=67 // pred_check
          %p560 = pneg %p229
        $region102: #{tpu_custom_call.1} parent=67 // pred_check_branch
          %562 = sbr.rel (%p560) target = $region104
        $region103: #{tpu_custom_call.1} parent=67 // pred_region
          %564 = dma.done [#allocation16], 128
        $region104: #{tpu_custom_call.1} parent=67 // pred_fallthru
          _
        // Predicated region
        $region105: #{tpu_custom_call.1} parent=67 // pred_check
          %p565 = pneg %p250
        $region106: #{tpu_custom_call.1} parent=67 // pred_check_branch
          %567 = sbr.rel (%p565) target = $region108
        $region107: #{tpu_custom_call.1} parent=67 // pred_region
          %569 = dma.done [#allocation19], 2048
        $region108: #{tpu_custom_call.1} parent=67 // pred_fallthru
          _
        // Predicated region
        $region109: #{tpu_custom_call.1} parent=67 // pred_check
          %p570 = pneg %p271
        $region110: #{tpu_custom_call.1} parent=67 // pred_check_branch
          %572 = sbr.rel (%p570) target = $region112
        $region111: #{tpu_custom_call.1} parent=67 // pred_region
          %574 = dma.done [#allocation19], 2048
        $region112: #{tpu_custom_call.1} parent=67 // pred_fallthru
          _
        // Predicated region
        $region113: #{tpu_custom_call.1} parent=67 // pred_check
          %p575 = pneg %p292
        $region114: #{tpu_custom_call.1} parent=67 // pred_check_branch
          %577 = sbr.rel (%p575) target = $region116
        $region115: #{tpu_custom_call.1} parent=67 // pred_region
          %579 = dma.done [#allocation22], 16
        $region116: #{tpu_custom_call.1} parent=67 // pred_fallthru
          _
        %s580 = sand.u32 %s43, 1
        %s581 = scalar_lea.sflag [#allocation4], %s580
        %s582 = sand.u32 %s43, 1
        %s583 = smul.addr %s582, 32
        %s584 = scalar_lea.vmem [#allocation3], %s583
        %p585 = pneg %p56
        %p586 = pneg %p53
        %s587 = sand.u32 %s35, 1
        %s588 = scalar_lea.sflag [#allocation7], %s587
        %s589 = sand.u32 %s69, 1
        %s590 = smul.addr %s589, 2048
        %s591 = scalar_lea.vmem [#allocation6], %s590
        %p592 = pneg %p82
        %p593 = pneg %p79
        %p594 = pneg %p103
        %p595 = pneg %p100
        %p596 = pneg %p124
        %p597 = pneg %p121
        %p598 = pneg %p145
        %p599 = pneg %p142
        %p600 = pneg %p166
        %p601 = pneg %p163
        %p602 = pneg %p187
        %p603 = pneg %p184
        %p604 = pneg %p208
        %p605 = pneg %p205
        %p606 = pneg %p229
        %p607 = pneg %p226
        %p608 = pneg %p250
        %p609 = pneg %p247
        %p610 = pneg %p271
        %p611 = pneg %p268
        %p612 = pneg %p292
        %p613 = pneg %p289
        %p614 = pneg %p313
        %p615 = pneg %p310
        %s616 = smul.u32 8, %s35
        %s617 = smul.u32 32, %s35
        %p618 = scmp.eq.s32.totalorder %s35, 0
        // Predicated region
        $region117: #{tpu_custom_call.1} parent=67 // pred_check
          %p619 = pneg %p618
        $region118: #{tpu_custom_call.1} parent=67 // pred_check_branch
          %621 = sbr.rel (%p619) target = $region120
        $region119: #{tpu_custom_call.1} parent=67 // pred_region
          %622 = vst [vmem:[#allocation2] sm:$0xff] 0.0
          %623 = vst [vmem:[#allocation2 + $0x8] sm:$0xff] 0.0
          %624 = vst [vmem:[#allocation2 + $0x10] sm:$0xff] 0.0
          %625 = vst [vmem:[#allocation2 + $0x18] sm:$0xff] 0.0
          %626 = vst [vmem:[#allocation2 + $0x20] sm:$0xff] 0.0
          %627 = vst [vmem:[#allocation2 + $0x28] sm:$0xff] 0.0
          %628 = vst [vmem:[#allocation2 + $0x30] sm:$0xff] 0.0
          %629 = vst [vmem:[#allocation2 + $0x38] sm:$0xff] 0.0
        $region120: #{tpu_custom_call.1} parent=67 // pred_fallthru
          _
        %v630 = vld [vmem:[%s524] sm:$0xff]
        %v631 = vld [vmem:[%s524 + $0x8] sm:$0xff]
        %v632 = vld [vmem:[%s524 + $0x10] sm:$0xff]
        %v633 = vld [vmem:[%s524 + $0x18] sm:$0xff]
        %v634 = vld [vmem:[%s524 + $0x20] sm:$0xff]
        %v635 = vld [vmem:[%s524 + $0x28] sm:$0xff]
        %v636 = vld [vmem:[%s524 + $0x30] sm:$0xff]
        %v637 = vld [vmem:[%s524 + $0x38] sm:$0xff]
        %v638 = vld [vmem:[%s524 + $0x40] sm:$0xff]
        %v639 = vld [vmem:[%s524 + $0x48] sm:$0xff]
        %v640 = vld [vmem:[%s524 + $0x50] sm:$0xff]
        %v641 = vld [vmem:[%s524 + $0x58] sm:$0xff]
        %v642 = vld [vmem:[%s524 + $0x60] sm:$0xff]
        %v643 = vld [vmem:[%s524 + $0x68] sm:$0xff]
        %v644 = vld [vmem:[%s524 + $0x70] sm:$0xff]
        %v645 = vld [vmem:[%s524 + $0x78] sm:$0xff]
        %v646 = vld [vmem:[%s524 + $0x80] sm:$0xff]
        %v647 = vld [vmem:[%s524 + $0x88] sm:$0xff]
        %v648 = vld [vmem:[%s524 + $0x90] sm:$0xff]
        %v649 = vld [vmem:[%s524 + $0x98] sm:$0xff]
        %v650 = vld [vmem:[%s524 + $0xa0] sm:$0xff]
        %v651 = vld [vmem:[%s524 + $0xa8] sm:$0xff]
        %v652 = vld [vmem:[%s524 + $0xb0] sm:$0xff]
        %v653 = vld [vmem:[%s524 + $0xb8] sm:$0xff]
        %v654 = vld [vmem:[%s524 + $0xc0] sm:$0xff]
        %v655 = vld [vmem:[%s524 + $0xc8] sm:$0xff]
        %v656 = vld [vmem:[%s524 + $0xd0] sm:$0xff]
        %v657 = vld [vmem:[%s524 + $0xd8] sm:$0xff]
        %v658 = vld [vmem:[%s524 + $0xe0] sm:$0xff]
        %v659 = vld [vmem:[%s524 + $0xe8] sm:$0xff]
        %v660 = vld [vmem:[%s524 + $0xf0] sm:$0xff]
        %v661 = vld [vmem:[%s524 + $0xf8] sm:$0xff]
        %v662 = vld [vmem:[%s524 + $0x100] sm:$0xff]
        %v663 = vld [vmem:[%s524 + $0x108] sm:$0xff]
        %v664 = vld [vmem:[%s524 + $0x110] sm:$0xff]
        %v665 = vld [vmem:[%s524 + $0x118] sm:$0xff]
        %v666 = vld [vmem:[%s524 + $0x120] sm:$0xff]
        %v667 = vld [vmem:[%s524 + $0x128] sm:$0xff]
        %v668 = vld [vmem:[%s524 + $0x130] sm:$0xff]
        %v669 = vld [vmem:[%s524 + $0x138] sm:$0xff]
        %v670 = vld [vmem:[%s524 + $0x140] sm:$0xff]
        %v671 = vld [vmem:[%s524 + $0x148] sm:$0xff]
        %v672 = vld [vmem:[%s524 + $0x150] sm:$0xff]
        %v673 = vld [vmem:[%s524 + $0x158] sm:$0xff]
        %v674 = vld [vmem:[%s524 + $0x160] sm:$0xff]
        %v675 = vld [vmem:[%s524 + $0x168] sm:$0xff]
        %v676 = vld [vmem:[%s524 + $0x170] sm:$0xff]
        %v677 = vld [vmem:[%s524 + $0x178] sm:$0xff]
        %v678 = vld [vmem:[%s524 + $0x180] sm:$0xff]
        %v679 = vld [vmem:[%s524 + $0x188] sm:$0xff]
        %v680 = vld [vmem:[%s524 + $0x190] sm:$0xff]
        %v681 = vld [vmem:[%s524 + $0x198] sm:$0xff]
        %v682 = vld [vmem:[%s524 + $0x1a0] sm:$0xff]
        %v683 = vld [vmem:[%s524 + $0x1a8] sm:$0xff]
        %v684 = vld [vmem:[%s524 + $0x1b0] sm:$0xff]
        %v685 = vld [vmem:[%s524 + $0x1b8] sm:$0xff]
        %v686 = vld [vmem:[%s524 + $0x1c0] sm:$0xff]
        %v687 = vld [vmem:[%s524 + $0x1c8] sm:$0xff]
        %v688 = vld [vmem:[%s524 + $0x1d0] sm:$0xff]
        %v689 = vld [vmem:[%s524 + $0x1d8] sm:$0xff]
        %v690 = vld [vmem:[%s524 + $0x1e0] sm:$0xff]
        %v691 = vld [vmem:[%s524 + $0x1e8] sm:$0xff]
        %v692 = vld [vmem:[%s524 + $0x1f0] sm:$0xff]
        %v693 = vld [vmem:[%s524 + $0x1f8] sm:$0xff]
        %v694 = vld [vmem:[%s524 + $0x200] sm:$0xff]
        %v695 = vld [vmem:[%s524 + $0x208] sm:$0xff]
        %v696 = vld [vmem:[%s524 + $0x210] sm:$0xff]
        %v697 = vld [vmem:[%s524 + $0x218] sm:$0xff]
        %v698 = vld [vmem:[%s524 + $0x220] sm:$0xff]
        %v699 = vld [vmem:[%s524 + $0x228] sm:$0xff]
        %v700 = vld [vmem:[%s524 + $0x230] sm:$0xff]
        %v701 = vld [vmem:[%s524 + $0x238] sm:$0xff]
        %v702 = vld [vmem:[%s524 + $0x240] sm:$0xff]
        %v703 = vld [vmem:[%s524 + $0x248] sm:$0xff]
        %v704 = vld [vmem:[%s524 + $0x250] sm:$0xff]
        %v705 = vld [vmem:[%s524 + $0x258] sm:$0xff]
        %v706 = vld [vmem:[%s524 + $0x260] sm:$0xff]
        %v707 = vld [vmem:[%s524 + $0x268] sm:$0xff]
        %v708 = vld [vmem:[%s524 + $0x270] sm:$0xff]
        %v709 = vld [vmem:[%s524 + $0x278] sm:$0xff]
        %v710 = vld [vmem:[%s524 + $0x280] sm:$0xff]
        %v711 = vld [vmem:[%s524 + $0x288] sm:$0xff]
        %v712 = vld [vmem:[%s524 + $0x290] sm:$0xff]
        %v713 = vld [vmem:[%s524 + $0x298] sm:$0xff]
        %v714 = vld [vmem:[%s524 + $0x2a0] sm:$0xff]
        %v715 = vld [vmem:[%s524 + $0x2a8] sm:$0xff]
        %v716 = vld [vmem:[%s524 + $0x2b0] sm:$0xff]
        %v717 = vld [vmem:[%s524 + $0x2b8] sm:$0xff]
        %v718 = vld [vmem:[%s524 + $0x2c0] sm:$0xff]
        %v719 = vld [vmem:[%s524 + $0x2c8] sm:$0xff]
        %v720 = vld [vmem:[%s524 + $0x2d0] sm:$0xff]
        %v721 = vld [vmem:[%s524 + $0x2d8] sm:$0xff]
        %v722 = vld [vmem:[%s524 + $0x2e0] sm:$0xff]
        %v723 = vld [vmem:[%s524 + $0x2e8] sm:$0xff]
        %v724 = vld [vmem:[%s524 + $0x2f0] sm:$0xff]
        %v725 = vld [vmem:[%s524 + $0x2f8] sm:$0xff]
        %v726 = vld [vmem:[%s524 + $0x300] sm:$0xff]
        %v727 = vld [vmem:[%s524 + $0x308] sm:$0xff]
        %v728 = vld [vmem:[%s524 + $0x310] sm:$0xff]
        %v729 = vld [vmem:[%s524 + $0x318] sm:$0xff]
        %v730 = vld [vmem:[%s524 + $0x320] sm:$0xff]
        %v731 = vld [vmem:[%s524 + $0x328] sm:$0xff]
        %v732 = vld [vmem:[%s524 + $0x330] sm:$0xff]
        %v733 = vld [vmem:[%s524 + $0x338] sm:$0xff]
        %v734 = vld [vmem:[%s524 + $0x340] sm:$0xff]
        %v735 = vld [vmem:[%s524 + $0x348] sm:$0xff]
        %v736 = vld [vmem:[%s524 + $0x350] sm:$0xff]
        %v737 = vld [vmem:[%s524 + $0x358] sm:$0xff]
        %v738 = vld [vmem:[%s524 + $0x360] sm:$0xff]
        %v739 = vld [vmem:[%s524 + $0x368] sm:$0xff]
        %v740 = vld [vmem:[%s524 + $0x370] sm:$0xff]
        %v741 = vld [vmem:[%s524 + $0x378] sm:$0xff]
        %v742 = vld [vmem:[%s524 + $0x380] sm:$0xff]
        %v743 = vld [vmem:[%s524 + $0x388] sm:$0xff]
        %v744 = vld [vmem:[%s524 + $0x390] sm:$0xff]
        %v745 = vld [vmem:[%s524 + $0x398] sm:$0xff]
        %v746 = vld [vmem:[%s524 + $0x3a0] sm:$0xff]
        %v747 = vld [vmem:[%s524 + $0x3a8] sm:$0xff]
        %v748 = vld [vmem:[%s524 + $0x3b0] sm:$0xff]
        %v749 = vld [vmem:[%s524 + $0x3b8] sm:$0xff]
        %v750 = vld [vmem:[%s524 + $0x3c0] sm:$0xff]
        %v751 = vld [vmem:[%s524 + $0x3c8] sm:$0xff]
        %v752 = vld [vmem:[%s524 + $0x3d0] sm:$0xff]
        %v753 = vld [vmem:[%s524 + $0x3d8] sm:$0xff]
        %v754 = vld [vmem:[%s524 + $0x3e0] sm:$0xff]
        %v755 = vld [vmem:[%s524 + $0x3e8] sm:$0xff]
        %v756 = vld [vmem:[%s524 + $0x3f0] sm:$0xff]
        %v757 = vld [vmem:[%s524 + $0x3f8] sm:$0xff]
        %v758 = vld [vmem:[%s524 + $0x400] sm:$0xff]
        %v759 = vld [vmem:[%s524 + $0x408] sm:$0xff]
        %v760 = vld [vmem:[%s524 + $0x410] sm:$0xff]
        %v761 = vld [vmem:[%s524 + $0x418] sm:$0xff]
        %v762 = vld [vmem:[%s524 + $0x420] sm:$0xff]
        %v763 = vld [vmem:[%s524 + $0x428] sm:$0xff]
        %v764 = vld [vmem:[%s524 + $0x430] sm:$0xff]
        %v765 = vld [vmem:[%s524 + $0x438] sm:$0xff]
        %v766 = vld [vmem:[%s524 + $0x440] sm:$0xff]
        %v767 = vld [vmem:[%s524 + $0x448] sm:$0xff]
        %v768 = vld [vmem:[%s524 + $0x450] sm:$0xff]
        %v769 = vld [vmem:[%s524 + $0x458] sm:$0xff]
        %v770 = vld [vmem:[%s524 + $0x460] sm:$0xff]
        %v771 = vld [vmem:[%s524 + $0x468] sm:$0xff]
        %v772 = vld [vmem:[%s524 + $0x470] sm:$0xff]
        %v773 = vld [vmem:[%s524 + $0x478] sm:$0xff]
        %v774 = vld [vmem:[%s524 + $0x480] sm:$0xff]
        %v775 = vld [vmem:[%s524 + $0x488] sm:$0xff]
        %v776 = vld [vmem:[%s524 + $0x490] sm:$0xff]
        %v777 = vld [vmem:[%s524 + $0x498] sm:$0xff]
        %v778 = vld [vmem:[%s524 + $0x4a0] sm:$0xff]
        %v779 = vld [vmem:[%s524 + $0x4a8] sm:$0xff]
        %v780 = vld [vmem:[%s524 + $0x4b0] sm:$0xff]
        %v781 = vld [vmem:[%s524 + $0x4b8] sm:$0xff]
        %v782 = vld [vmem:[%s524 + $0x4c0] sm:$0xff]
        %v783 = vld [vmem:[%s524 + $0x4c8] sm:$0xff]
        %v784 = vld [vmem:[%s524 + $0x4d0] sm:$0xff]
        %v785 = vld [vmem:[%s524 + $0x4d8] sm:$0xff]
        %v786 = vld [vmem:[%s524 + $0x4e0] sm:$0xff]
        %v787 = vld [vmem:[%s524 + $0x4e8] sm:$0xff]
        %v788 = vld [vmem:[%s524 + $0x4f0] sm:$0xff]
        %v789 = vld [vmem:[%s524 + $0x4f8] sm:$0xff]
        %v790 = vld [vmem:[%s524 + $0x500] sm:$0xff]
        %v791 = vld [vmem:[%s524 + $0x508] sm:$0xff]
        %v792 = vld [vmem:[%s524 + $0x510] sm:$0xff]
        %v793 = vld [vmem:[%s524 + $0x518] sm:$0xff]
        %v794 = vld [vmem:[%s524 + $0x520] sm:$0xff]
        %v795 = vld [vmem:[%s524 + $0x528] sm:$0xff]
        %v796 = vld [vmem:[%s524 + $0x530] sm:$0xff]
        %v797 = vld [vmem:[%s524 + $0x538] sm:$0xff]
        %v798 = vld [vmem:[%s524 + $0x540] sm:$0xff]
        %v799 = vld [vmem:[%s524 + $0x548] sm:$0xff]
        %v800 = vld [vmem:[%s524 + $0x550] sm:$0xff]
        %v801 = vld [vmem:[%s524 + $0x558] sm:$0xff]
        %v802 = vld [vmem:[%s524 + $0x560] sm:$0xff]
        %v803 = vld [vmem:[%s524 + $0x568] sm:$0xff]
        %v804 = vld [vmem:[%s524 + $0x570] sm:$0xff]
        %v805 = vld [vmem:[%s524 + $0x578] sm:$0xff]
        %v806 = vld [vmem:[%s524 + $0x580] sm:$0xff]
        %v807 = vld [vmem:[%s524 + $0x588] sm:$0xff]
        %v808 = vld [vmem:[%s524 + $0x590] sm:$0xff]
        %v809 = vld [vmem:[%s524 + $0x598] sm:$0xff]
        %v810 = vld [vmem:[%s524 + $0x5a0] sm:$0xff]
        %v811 = vld [vmem:[%s524 + $0x5a8] sm:$0xff]
        %v812 = vld [vmem:[%s524 + $0x5b0] sm:$0xff]
        %v813 = vld [vmem:[%s524 + $0x5b8] sm:$0xff]
        %v814 = vld [vmem:[%s524 + $0x5c0] sm:$0xff]
        %v815 = vld [vmem:[%s524 + $0x5c8] sm:$0xff]
        %v816 = vld [vmem:[%s524 + $0x5d0] sm:$0xff]
        %v817 = vld [vmem:[%s524 + $0x5d8] sm:$0xff]
        %v818 = vld [vmem:[%s524 + $0x5e0] sm:$0xff]
        %v819 = vld [vmem:[%s524 + $0x5e8] sm:$0xff]
        %v820 = vld [vmem:[%s524 + $0x5f0] sm:$0xff]
        %v821 = vld [vmem:[%s524 + $0x5f8] sm:$0xff]
        %v822 = vld [vmem:[%s524 + $0x600] sm:$0xff]
        %v823 = vld [vmem:[%s524 + $0x608] sm:$0xff]
        %v824 = vld [vmem:[%s524 + $0x610] sm:$0xff]
        %v825 = vld [vmem:[%s524 + $0x618] sm:$0xff]
        %v826 = vld [vmem:[%s524 + $0x620] sm:$0xff]
        %v827 = vld [vmem:[%s524 + $0x628] sm:$0xff]
        %v828 = vld [vmem:[%s524 + $0x630] sm:$0xff]
        %v829 = vld [vmem:[%s524 + $0x638] sm:$0xff]
        %v830 = vld [vmem:[%s524 + $0x640] sm:$0xff]
        %v831 = vld [vmem:[%s524 + $0x648] sm:$0xff]
        %v832 = vld [vmem:[%s524 + $0x650] sm:$0xff]
        %v833 = vld [vmem:[%s524 + $0x658] sm:$0xff]
        %v834 = vld [vmem:[%s524 + $0x660] sm:$0xff]
        %v835 = vld [vmem:[%s524 + $0x668] sm:$0xff]
        %v836 = vld [vmem:[%s524 + $0x670] sm:$0xff]
        %v837 = vld [vmem:[%s524 + $0x678] sm:$0xff]
        %v838 = vld [vmem:[%s524 + $0x680] sm:$0xff]
        %v839 = vld [vmem:[%s524 + $0x688] sm:$0xff]
        %v840 = vld [vmem:[%s524 + $0x690] sm:$0xff]
        %v841 = vld [vmem:[%s524 + $0x698] sm:$0xff]
        %v842 = vld [vmem:[%s524 + $0x6a0] sm:$0xff]
        %v843 = vld [vmem:[%s524 + $0x6a8] sm:$0xff]
        %v844 = vld [vmem:[%s524 + $0x6b0] sm:$0xff]
        %v845 = vld [vmem:[%s524 + $0x6b8] sm:$0xff]
        %v846 = vld [vmem:[%s524 + $0x6c0] sm:$0xff]
        %v847 = vld [vmem:[%s524 + $0x6c8] sm:$0xff]
        %v848 = vld [vmem:[%s524 + $0x6d0] sm:$0xff]
        %v849 = vld [vmem:[%s524 + $0x6d8] sm:$0xff]
        %v850 = vld [vmem:[%s524 + $0x6e0] sm:$0xff]
        %v851 = vld [vmem:[%s524 + $0x6e8] sm:$0xff]
        %v852 = vld [vmem:[%s524 + $0x6f0] sm:$0xff]
        %v853 = vld [vmem:[%s524 + $0x6f8] sm:$0xff]
        %v854 = vld [vmem:[%s524 + $0x700] sm:$0xff]
        %v855 = vld [vmem:[%s524 + $0x708] sm:$0xff]
        %v856 = vld [vmem:[%s524 + $0x710] sm:$0xff]
        %v857 = vld [vmem:[%s524 + $0x718] sm:$0xff]
        %v858 = vld [vmem:[%s524 + $0x720] sm:$0xff]
        %v859 = vld [vmem:[%s524 + $0x728] sm:$0xff]
        %v860 = vld [vmem:[%s524 + $0x730] sm:$0xff]
        %v861 = vld [vmem:[%s524 + $0x738] sm:$0xff]
        %v862 = vld [vmem:[%s524 + $0x740] sm:$0xff]
        %v863 = vld [vmem:[%s524 + $0x748] sm:$0xff]
        %v864 = vld [vmem:[%s524 + $0x750] sm:$0xff]
        %v865 = vld [vmem:[%s524 + $0x758] sm:$0xff]
        %v866 = vld [vmem:[%s524 + $0x760] sm:$0xff]
        %v867 = vld [vmem:[%s524 + $0x768] sm:$0xff]
        %v868 = vld [vmem:[%s524 + $0x770] sm:$0xff]
        %v869 = vld [vmem:[%s524 + $0x778] sm:$0xff]
        %v870 = vld [vmem:[%s524 + $0x780] sm:$0xff]
        %v871 = vld [vmem:[%s524 + $0x788] sm:$0xff]
        %v872 = vld [vmem:[%s524 + $0x790] sm:$0xff]
        %v873 = vld [vmem:[%s524 + $0x798] sm:$0xff]
        %v874 = vld [vmem:[%s524 + $0x7a0] sm:$0xff]
        %v875 = vld [vmem:[%s524 + $0x7a8] sm:$0xff]
        %v876 = vld [vmem:[%s524 + $0x7b0] sm:$0xff]
        %v877 = vld [vmem:[%s524 + $0x7b8] sm:$0xff]
        %v878 = vld [vmem:[%s524 + $0x7c0] sm:$0xff]
        %v879 = vld [vmem:[%s524 + $0x7c8] sm:$0xff]
        %v880 = vld [vmem:[%s524 + $0x7d0] sm:$0xff]
        %v881 = vld [vmem:[%s524 + $0x7d8] sm:$0xff]
        %v882 = vld [vmem:[%s524 + $0x7e0] sm:$0xff]
        %v883 = vld [vmem:[%s524 + $0x7e8] sm:$0xff]
        %v884 = vld [vmem:[%s524 + $0x7f0] sm:$0xff]
        %v885 = vld [vmem:[%s524 + $0x7f8] sm:$0xff]
        %v886 = vunpack.c.0.s8 %v630
        %v887 = vunpack.c.0.s8 %v631
        %v888 = vunpack.c.0.s8 %v632
        %v889 = vunpack.c.0.s8 %v633
        %v890 = vunpack.c.0.s8 %v634
        %v891 = vunpack.c.0.s8 %v635
        %v892 = vunpack.c.0.s8 %v636
        %v893 = vunpack.c.0.s8 %v637
        %v894 = vunpack.c.1.s8 %v630
        %v895 = vunpack.c.1.s8 %v631
        %v896 = vunpack.c.1.s8 %v632
        %v897 = vunpack.c.1.s8 %v633
        %v898 = vunpack.c.1.s8 %v634
        %v899 = vunpack.c.1.s8 %v635
        %v900 = vunpack.c.1.s8 %v636
        %v901 = vunpack.c.1.s8 %v637
        %v902 = vunpack.c.2.s8 %v630
        %v903 = vunpack.c.2.s8 %v631
        %v904 = vunpack.c.2.s8 %v632
        %v905 = vunpack.c.2.s8 %v633
        %v906 = vunpack.c.2.s8 %v634
        %v907 = vunpack.c.2.s8 %v635
        %v908 = vunpack.c.2.s8 %v636
        %v909 = vunpack.c.2.s8 %v637
        %v910 = vunpack.c.3.s8 %v630
        %v911 = vunpack.c.3.s8 %v631
        %v912 = vunpack.c.3.s8 %v632
        %v913 = vunpack.c.3.s8 %v633
        %v914 = vunpack.c.3.s8 %v634
        %v915 = vunpack.c.3.s8 %v635
        %v916 = vunpack.c.3.s8 %v636
        %v917 = vunpack.c.3.s8 %v637
        %v918 = vunpack.c.0.s8 %v638
        %v919 = vunpack.c.0.s8 %v639
        %v920 = vunpack.c.0.s8 %v640
        %v921 = vunpack.c.0.s8 %v641
        %v922 = vunpack.c.0.s8 %v642
        %v923 = vunpack.c.0.s8 %v643
        %v924 = vunpack.c.0.s8 %v644
        %v925 = vunpack.c.0.s8 %v645
        %v926 = vunpack.c.1.s8 %v638
        %v927 = vunpack.c.1.s8 %v639
        %v928 = vunpack.c.1.s8 %v640
        %v929 = vunpack.c.1.s8 %v641
        %v930 = vunpack.c.1.s8 %v642
        %v931 = vunpack.c.1.s8 %v643
        %v932 = vunpack.c.1.s8 %v644
        %v933 = vunpack.c.1.s8 %v645
        %v934 = vunpack.c.2.s8 %v638
        %v935 = vunpack.c.2.s8 %v639
        %v936 = vunpack.c.2.s8 %v640
        %v937 = vunpack.c.2.s8 %v641
        %v938 = vunpack.c.2.s8 %v642
        %v939 = vunpack.c.2.s8 %v643
        %v940 = vunpack.c.2.s8 %v644
        %v941 = vunpack.c.2.s8 %v645
        %v942 = vunpack.c.3.s8 %v638
        %v943 = vunpack.c.3.s8 %v639
        %v944 = vunpack.c.3.s8 %v640
        %v945 = vunpack.c.3.s8 %v641
        %v946 = vunpack.c.3.s8 %v642
        %v947 = vunpack.c.3.s8 %v643
        %v948 = vunpack.c.3.s8 %v644
        %v949 = vunpack.c.3.s8 %v645
        %v950 = vunpack.c.0.s8 %v646
        %v951 = vunpack.c.0.s8 %v647
        %v952 = vunpack.c.0.s8 %v648
        %v953 = vunpack.c.0.s8 %v649
        %v954 = vunpack.c.0.s8 %v650
        %v955 = vunpack.c.0.s8 %v651
        %v956 = vunpack.c.0.s8 %v652
        %v957 = vunpack.c.0.s8 %v653
        %v958 = vunpack.c.1.s8 %v646
        %v959 = vunpack.c.1.s8 %v647
        %v960 = vunpack.c.1.s8 %v648
        %v961 = vunpack.c.1.s8 %v649
        %v962 = vunpack.c.1.s8 %v650
        %v963 = vunpack.c.1.s8 %v651
        %v964 = vunpack.c.1.s8 %v652
        %v965 = vunpack.c.1.s8 %v653
        %v966 = vunpack.c.2.s8 %v646
        %v967 = vunpack.c.2.s8 %v647
        %v968 = vunpack.c.2.s8 %v648
        %v969 = vunpack.c.2.s8 %v649
        %v970 = vunpack.c.2.s8 %v650
        %v971 = vunpack.c.2.s8 %v651
        %v972 = vunpack.c.2.s8 %v652
        %v973 = vunpack.c.2.s8 %v653
        %v974 = vunpack.c.3.s8 %v646
        %v975 = vunpack.c.3.s8 %v647
        %v976 = vunpack.c.3.s8 %v648
        %v977 = vunpack.c.3.s8 %v649
        %v978 = vunpack.c.3.s8 %v650
        %v979 = vunpack.c.3.s8 %v651
        %v980 = vunpack.c.3.s8 %v652
        %v981 = vunpack.c.3.s8 %v653
        %v982 = vunpack.c.0.s8 %v654
        %v983 = vunpack.c.0.s8 %v655
        %v984 = vunpack.c.0.s8 %v656
        %v985 = vunpack.c.0.s8 %v657
        %v986 = vunpack.c.0.s8 %v658
        %v987 = vunpack.c.0.s8 %v659
        %v988 = vunpack.c.0.s8 %v660
        %v989 = vunpack.c.0.s8 %v661
        %v990 = vunpack.c.1.s8 %v654
        %v991 = vunpack.c.1.s8 %v655
        %v992 = vunpack.c.1.s8 %v656
        %v993 = vunpack.c.1.s8 %v657
        %v994 = vunpack.c.1.s8 %v658
        %v995 = vunpack.c.1.s8 %v659
        %v996 = vunpack.c.1.s8 %v660
        %v997 = vunpack.c.1.s8 %v661
        %v998 = vunpack.c.2.s8 %v654
        %v999 = vunpack.c.2.s8 %v655
        %v1000 = vunpack.c.2.s8 %v656
        %v1001 = vunpack.c.2.s8 %v657
        %v1002 = vunpack.c.2.s8 %v658
        %v1003 = vunpack.c.2.s8 %v659
        %v1004 = vunpack.c.2.s8 %v660
        %v1005 = vunpack.c.2.s8 %v661
        %v1006 = vunpack.c.3.s8 %v654
        %v1007 = vunpack.c.3.s8 %v655
        %v1008 = vunpack.c.3.s8 %v656
        %v1009 = vunpack.c.3.s8 %v657
        %v1010 = vunpack.c.3.s8 %v658
        %v1011 = vunpack.c.3.s8 %v659
        %v1012 = vunpack.c.3.s8 %v660
        %v1013 = vunpack.c.3.s8 %v661
        %v1014 = vunpack.c.0.s8 %v662
        %v1015 = vunpack.c.0.s8 %v663
        %v1016 = vunpack.c.0.s8 %v664
        %v1017 = vunpack.c.0.s8 %v665
        %v1018 = vunpack.c.0.s8 %v666
        %v1019 = vunpack.c.0.s8 %v667
        %v1020 = vunpack.c.0.s8 %v668
        %v1021 = vunpack.c.0.s8 %v669
        %v1022 = vunpack.c.1.s8 %v662
        %v1023 = vunpack.c.1.s8 %v663
        %v1024 = vunpack.c.1.s8 %v664
        %v1025 = vunpack.c.1.s8 %v665
        %v1026 = vunpack.c.1.s8 %v666
        %v1027 = vunpack.c.1.s8 %v667
        %v1028 = vunpack.c.1.s8 %v668
        %v1029 = vunpack.c.1.s8 %v669
        %v1030 = vunpack.c.2.s8 %v662
        %v1031 = vunpack.c.2.s8 %v663
        %v1032 = vunpack.c.2.s8 %v664
        %v1033 = vunpack.c.2.s8 %v665
        %v1034 = vunpack.c.2.s8 %v666
        %v1035 = vunpack.c.2.s8 %v667
        %v1036 = vunpack.c.2.s8 %v668
        %v1037 = vunpack.c.2.s8 %v669
        %v1038 = vunpack.c.3.s8 %v662
        %v1039 = vunpack.c.3.s8 %v663
        %v1040 = vunpack.c.3.s8 %v664
        %v1041 = vunpack.c.3.s8 %v665
        %v1042 = vunpack.c.3.s8 %v666
        %v1043 = vunpack.c.3.s8 %v667
        %v1044 = vunpack.c.3.s8 %v668
        %v1045 = vunpack.c.3.s8 %v669
        %v1046 = vunpack.c.0.s8 %v670
        %v1047 = vunpack.c.0.s8 %v671
        %v1048 = vunpack.c.0.s8 %v672
        %v1049 = vunpack.c.0.s8 %v673
        %v1050 = vunpack.c.0.s8 %v674
        %v1051 = vunpack.c.0.s8 %v675
        %v1052 = vunpack.c.0.s8 %v676
        %v1053 = vunpack.c.0.s8 %v677
        %v1054 = vunpack.c.1.s8 %v670
        %v1055 = vunpack.c.1.s8 %v671
        %v1056 = vunpack.c.1.s8 %v672
        %v1057 = vunpack.c.1.s8 %v673
        %v1058 = vunpack.c.1.s8 %v674
        %v1059 = vunpack.c.1.s8 %v675
        %v1060 = vunpack.c.1.s8 %v676
        %v1061 = vunpack.c.1.s8 %v677
        %v1062 = vunpack.c.2.s8 %v670
        %v1063 = vunpack.c.2.s8 %v671
        %v1064 = vunpack.c.2.s8 %v672
        %v1065 = vunpack.c.2.s8 %v673
        %v1066 = vunpack.c.2.s8 %v674
        %v1067 = vunpack.c.2.s8 %v675
        %v1068 = vunpack.c.2.s8 %v676
        %v1069 = vunpack.c.2.s8 %v677
        %v1070 = vunpack.c.3.s8 %v670
        %v1071 = vunpack.c.3.s8 %v671
        %v1072 = vunpack.c.3.s8 %v672
        %v1073 = vunpack.c.3.s8 %v673
        %v1074 = vunpack.c.3.s8 %v674
        %v1075 = vunpack.c.3.s8 %v675
        %v1076 = vunpack.c.3.s8 %v676
        %v1077 = vunpack.c.3.s8 %v677
        %v1078 = vunpack.c.0.s8 %v678
        %v1079 = vunpack.c.0.s8 %v679
        %v1080 = vunpack.c.0.s8 %v680
        %v1081 = vunpack.c.0.s8 %v681
        %v1082 = vunpack.c.0.s8 %v682
        %v1083 = vunpack.c.0.s8 %v683
        %v1084 = vunpack.c.0.s8 %v684
        %v1085 = vunpack.c.0.s8 %v685
        %v1086 = vunpack.c.1.s8 %v678
        %v1087 = vunpack.c.1.s8 %v679
        %v1088 = vunpack.c.1.s8 %v680
        %v1089 = vunpack.c.1.s8 %v681
        %v1090 = vunpack.c.1.s8 %v682
        %v1091 = vunpack.c.1.s8 %v683
        %v1092 = vunpack.c.1.s8 %v684
        %v1093 = vunpack.c.1.s8 %v685
        %v1094 = vunpack.c.2.s8 %v678
        %v1095 = vunpack.c.2.s8 %v679
        %v1096 = vunpack.c.2.s8 %v680
        %v1097 = vunpack.c.2.s8 %v681
        %v1098 = vunpack.c.2.s8 %v682
        %v1099 = vunpack.c.2.s8 %v683
        %v1100 = vunpack.c.2.s8 %v684
        %v1101 = vunpack.c.2.s8 %v685
        %v1102 = vunpack.c.3.s8 %v678
        %v1103 = vunpack.c.3.s8 %v679
        %v1104 = vunpack.c.3.s8 %v680
        %v1105 = vunpack.c.3.s8 %v681
        %v1106 = vunpack.c.3.s8 %v682
        %v1107 = vunpack.c.3.s8 %v683
        %v1108 = vunpack.c.3.s8 %v684
        %v1109 = vunpack.c.3.s8 %v685
        %v1110 = vunpack.c.0.s8 %v686
        %v1111 = vunpack.c.0.s8 %v687
        %v1112 = vunpack.c.0.s8 %v688
        %v1113 = vunpack.c.0.s8 %v689
        %v1114 = vunpack.c.0.s8 %v690
        %v1115 = vunpack.c.0.s8 %v691
        %v1116 = vunpack.c.0.s8 %v692
        %v1117 = vunpack.c.0.s8 %v693
        %v1118 = vunpack.c.1.s8 %v686
        %v1119 = vunpack.c.1.s8 %v687
        %v1120 = vunpack.c.1.s8 %v688
        %v1121 = vunpack.c.1.s8 %v689
        %v1122 = vunpack.c.1.s8 %v690
        %v1123 = vunpack.c.1.s8 %v691
        %v1124 = vunpack.c.1.s8 %v692
        %v1125 = vunpack.c.1.s8 %v693
        %v1126 = vunpack.c.2.s8 %v686
        %v1127 = vunpack.c.2.s8 %v687
        %v1128 = vunpack.c.2.s8 %v688
        %v1129 = vunpack.c.2.s8 %v689
        %v1130 = vunpack.c.2.s8 %v690
        %v1131 = vunpack.c.2.s8 %v691
        %v1132 = vunpack.c.2.s8 %v692
        %v1133 = vunpack.c.2.s8 %v693
        %v1134 = vunpack.c.3.s8 %v686
        %v1135 = vunpack.c.3.s8 %v687
        %v1136 = vunpack.c.3.s8 %v688
        %v1137 = vunpack.c.3.s8 %v689
        %v1138 = vunpack.c.3.s8 %v690
        %v1139 = vunpack.c.3.s8 %v691
        %v1140 = vunpack.c.3.s8 %v692
        %v1141 = vunpack.c.3.s8 %v693
        %v1142 = vunpack.c.0.s8 %v694
        %v1143 = vunpack.c.0.s8 %v695
        %v1144 = vunpack.c.0.s8 %v696
        %v1145 = vunpack.c.0.s8 %v697
        %v1146 = vunpack.c.0.s8 %v698
        %v1147 = vunpack.c.0.s8 %v699
        %v1148 = vunpack.c.0.s8 %v700
        %v1149 = vunpack.c.0.s8 %v701
        %v1150 = vunpack.c.1.s8 %v694
        %v1151 = vunpack.c.1.s8 %v695
        %v1152 = vunpack.c.1.s8 %v696
        %v1153 = vunpack.c.1.s8 %v697
        %v1154 = vunpack.c.1.s8 %v698
        %v1155 = vunpack.c.1.s8 %v699
        %v1156 = vunpack.c.1.s8 %v700
        %v1157 = vunpack.c.1.s8 %v701
        %v1158 = vunpack.c.2.s8 %v694
        %v1159 = vunpack.c.2.s8 %v695
        %v1160 = vunpack.c.2.s8 %v696
        %v1161 = vunpack.c.2.s8 %v697
        %v1162 = vunpack.c.2.s8 %v698
        %v1163 = vunpack.c.2.s8 %v699
        %v1164 = vunpack.c.2.s8 %v700
        %v1165 = vunpack.c.2.s8 %v701
        %v1166 = vunpack.c.3.s8 %v694
        %v1167 = vunpack.c.3.s8 %v695
        %v1168 = vunpack.c.3.s8 %v696
        %v1169 = vunpack.c.3.s8 %v697
        %v1170 = vunpack.c.3.s8 %v698
        %v1171 = vunpack.c.3.s8 %v699
        %v1172 = vunpack.c.3.s8 %v700
        %v1173 = vunpack.c.3.s8 %v701
        %v1174 = vunpack.c.0.s8 %v702
        %v1175 = vunpack.c.0.s8 %v703
        %v1176 = vunpack.c.0.s8 %v704
        %v1177 = vunpack.c.0.s8 %v705
        %v1178 = vunpack.c.0.s8 %v706
        %v1179 = vunpack.c.0.s8 %v707
        %v1180 = vunpack.c.0.s8 %v708
        %v1181 = vunpack.c.0.s8 %v709
        %v1182 = vunpack.c.1.s8 %v702
        %v1183 = vunpack.c.1.s8 %v703
        %v1184 = vunpack.c.1.s8 %v704
        %v1185 = vunpack.c.1.s8 %v705
        %v1186 = vunpack.c.1.s8 %v706
        %v1187 = vunpack.c.1.s8 %v707
        %v1188 = vunpack.c.1.s8 %v708
        %v1189 = vunpack.c.1.s8 %v709
        %v1190 = vunpack.c.2.s8 %v702
        %v1191 = vunpack.c.2.s8 %v703
        %v1192 = vunpack.c.2.s8 %v704
        %v1193 = vunpack.c.2.s8 %v705
        %v1194 = vunpack.c.2.s8 %v706
        %v1195 = vunpack.c.2.s8 %v707
        %v1196 = vunpack.c.2.s8 %v708
        %v1197 = vunpack.c.2.s8 %v709
        %v1198 = vunpack.c.3.s8 %v702
        %v1199 = vunpack.c.3.s8 %v703
        %v1200 = vunpack.c.3.s8 %v704
        %v1201 = vunpack.c.3.s8 %v705
        %v1202 = vunpack.c.3.s8 %v706
        %v1203 = vunpack.c.3.s8 %v707
        %v1204 = vunpack.c.3.s8 %v708
        %v1205 = vunpack.c.3.s8 %v709
        %v1206 = vunpack.c.0.s8 %v710
        %v1207 = vunpack.c.0.s8 %v711
        %v1208 = vunpack.c.0.s8 %v712
        %v1209 = vunpack.c.0.s8 %v713
        %v1210 = vunpack.c.0.s8 %v714
        %v1211 = vunpack.c.0.s8 %v715
        %v1212 = vunpack.c.0.s8 %v716
        %v1213 = vunpack.c.0.s8 %v717
        %v1214 = vunpack.c.1.s8 %v710
        %v1215 = vunpack.c.1.s8 %v711
        %v1216 = vunpack.c.1.s8 %v712
        %v1217 = vunpack.c.1.s8 %v713
        %v1218 = vunpack.c.1.s8 %v714
        %v1219 = vunpack.c.1.s8 %v715
        %v1220 = vunpack.c.1.s8 %v716
        %v1221 = vunpack.c.1.s8 %v717
        %v1222 = vunpack.c.2.s8 %v710
        %v1223 = vunpack.c.2.s8 %v711
        %v1224 = vunpack.c.2.s8 %v712
        %v1225 = vunpack.c.2.s8 %v713
        %v1226 = vunpack.c.2.s8 %v714
        %v1227 = vunpack.c.2.s8 %v715
        %v1228 = vunpack.c.2.s8 %v716
        %v1229 = vunpack.c.2.s8 %v717
        %v1230 = vunpack.c.3.s8 %v710
        %v1231 = vunpack.c.3.s8 %v711
        %v1232 = vunpack.c.3.s8 %v712
        %v1233 = vunpack.c.3.s8 %v713
        %v1234 = vunpack.c.3.s8 %v714
        %v1235 = vunpack.c.3.s8 %v715
        %v1236 = vunpack.c.3.s8 %v716
        %v1237 = vunpack.c.3.s8 %v717
        %v1238 = vunpack.c.0.s8 %v718
        %v1239 = vunpack.c.0.s8 %v719
        %v1240 = vunpack.c.0.s8 %v720
        %v1241 = vunpack.c.0.s8 %v721
        %v1242 = vunpack.c.0.s8 %v722
        %v1243 = vunpack.c.0.s8 %v723
        %v1244 = vunpack.c.0.s8 %v724
        %v1245 = vunpack.c.0.s8 %v725
        %v1246 = vunpack.c.1.s8 %v718
        %v1247 = vunpack.c.1.s8 %v719
        %v1248 = vunpack.c.1.s8 %v720
        %v1249 = vunpack.c.1.s8 %v721
        %v1250 = vunpack.c.1.s8 %v722
        %v1251 = vunpack.c.1.s8 %v723
        %v1252 = vunpack.c.1.s8 %v724
        %v1253 = vunpack.c.1.s8 %v725
        %v1254 = vunpack.c.2.s8 %v718
        %v1255 = vunpack.c.2.s8 %v719
        %v1256 = vunpack.c.2.s8 %v720
        %v1257 = vunpack.c.2.s8 %v721
        %v1258 = vunpack.c.2.s8 %v722
        %v1259 = vunpack.c.2.s8 %v723
        %v1260 = vunpack.c.2.s8 %v724
        %v1261 = vunpack.c.2.s8 %v725
        %v1262 = vunpack.c.3.s8 %v718
        %v1263 = vunpack.c.3.s8 %v719
        %v1264 = vunpack.c.3.s8 %v720
        %v1265 = vunpack.c.3.s8 %v721
        %v1266 = vunpack.c.3.s8 %v722
        %v1267 = vunpack.c.3.s8 %v723
        %v1268 = vunpack.c.3.s8 %v724
        %v1269 = vunpack.c.3.s8 %v725
        %v1270 = vunpack.c.0.s8 %v726
        %v1271 = vunpack.c.0.s8 %v727
        %v1272 = vunpack.c.0.s8 %v728
        %v1273 = vunpack.c.0.s8 %v729
        %v1274 = vunpack.c.0.s8 %v730
        %v1275 = vunpack.c.0.s8 %v731
        %v1276 = vunpack.c.0.s8 %v732
        %v1277 = vunpack.c.0.s8 %v733
        %v1278 = vunpack.c.1.s8 %v726
        %v1279 = vunpack.c.1.s8 %v727
        %v1280 = vunpack.c.1.s8 %v728
        %v1281 = vunpack.c.1.s8 %v729
        %v1282 = vunpack.c.1.s8 %v730
        %v1283 = vunpack.c.1.s8 %v731
        %v1284 = vunpack.c.1.s8 %v732
        %v1285 = vunpack.c.1.s8 %v733
        %v1286 = vunpack.c.2.s8 %v726
        %v1287 = vunpack.c.2.s8 %v727
        %v1288 = vunpack.c.2.s8 %v728
        %v1289 = vunpack.c.2.s8 %v729
        %v1290 = vunpack.c.2.s8 %v730
        %v1291 = vunpack.c.2.s8 %v731
        %v1292 = vunpack.c.2.s8 %v732
        %v1293 = vunpack.c.2.s8 %v733
        %v1294 = vunpack.c.3.s8 %v726
        %v1295 = vunpack.c.3.s8 %v727
        %v1296 = vunpack.c.3.s8 %v728
        %v1297 = vunpack.c.3.s8 %v729
        %v1298 = vunpack.c.3.s8 %v730
        %v1299 = vunpack.c.3.s8 %v731
        %v1300 = vunpack.c.3.s8 %v732
        %v1301 = vunpack.c.3.s8 %v733
        %v1302 = vunpack.c.0.s8 %v734
        %v1303 = vunpack.c.0.s8 %v735
        %v1304 = vunpack.c.0.s8 %v736
        %v1305 = vunpack.c.0.s8 %v737
        %v1306 = vunpack.c.0.s8 %v738
        %v1307 = vunpack.c.0.s8 %v739
        %v1308 = vunpack.c.0.s8 %v740
        %v1309 = vunpack.c.0.s8 %v741
        %v1310 = vunpack.c.1.s8 %v734
        %v1311 = vunpack.c.1.s8 %v735
        %v1312 = vunpack.c.1.s8 %v736
        %v1313 = vunpack.c.1.s8 %v737
        %v1314 = vunpack.c.1.s8 %v738
        %v1315 = vunpack.c.1.s8 %v739
        %v1316 = vunpack.c.1.s8 %v740
        %v1317 = vunpack.c.1.s8 %v741
        %v1318 = vunpack.c.2.s8 %v734
        %v1319 = vunpack.c.2.s8 %v735
        %v1320 = vunpack.c.2.s8 %v736
        %v1321 = vunpack.c.2.s8 %v737
        %v1322 = vunpack.c.2.s8 %v738
        %v1323 = vunpack.c.2.s8 %v739
        %v1324 = vunpack.c.2.s8 %v740
        %v1325 = vunpack.c.2.s8 %v741
        %v1326 = vunpack.c.3.s8 %v734
        %v1327 = vunpack.c.3.s8 %v735
        %v1328 = vunpack.c.3.s8 %v736
        %v1329 = vunpack.c.3.s8 %v737
        %v1330 = vunpack.c.3.s8 %v738
        %v1331 = vunpack.c.3.s8 %v739
        %v1332 = vunpack.c.3.s8 %v740
        %v1333 = vunpack.c.3.s8 %v741
        %v1334 = vunpack.c.0.s8 %v742
        %v1335 = vunpack.c.0.s8 %v743
        %v1336 = vunpack.c.0.s8 %v744
        %v1337 = vunpack.c.0.s8 %v745
        %v1338 = vunpack.c.0.s8 %v746
        %v1339 = vunpack.c.0.s8 %v747
        %v1340 = vunpack.c.0.s8 %v748
        %v1341 = vunpack.c.0.s8 %v749
        %v1342 = vunpack.c.1.s8 %v742
        %v1343 = vunpack.c.1.s8 %v743
        %v1344 = vunpack.c.1.s8 %v744
        %v1345 = vunpack.c.1.s8 %v745
        %v1346 = vunpack.c.1.s8 %v746
        %v1347 = vunpack.c.1.s8 %v747
        %v1348 = vunpack.c.1.s8 %v748
        %v1349 = vunpack.c.1.s8 %v749
        %v1350 = vunpack.c.2.s8 %v742
        %v1351 = vunpack.c.2.s8 %v743
        %v1352 = vunpack.c.2.s8 %v744
        %v1353 = vunpack.c.2.s8 %v745
        %v1354 = vunpack.c.2.s8 %v746
        %v1355 = vunpack.c.2.s8 %v747
        %v1356 = vunpack.c.2.s8 %v748
        %v1357 = vunpack.c.2.s8 %v749
        %v1358 = vunpack.c.3.s8 %v742
        %v1359 = vunpack.c.3.s8 %v743
        %v1360 = vunpack.c.3.s8 %v744
        %v1361 = vunpack.c.3.s8 %v745
        %v1362 = vunpack.c.3.s8 %v746
        %v1363 = vunpack.c.3.s8 %v747
        %v1364 = vunpack.c.3.s8 %v748
        %v1365 = vunpack.c.3.s8 %v749
        %v1366 = vunpack.c.0.s8 %v750
        %v1367 = vunpack.c.0.s8 %v751
        %v1368 = vunpack.c.0.s8 %v752
        %v1369 = vunpack.c.0.s8 %v753
        %v1370 = vunpack.c.0.s8 %v754
        %v1371 = vunpack.c.0.s8 %v755
        %v1372 = vunpack.c.0.s8 %v756
        %v1373 = vunpack.c.0.s8 %v757
        %v1374 = vunpack.c.1.s8 %v750
        %v1375 = vunpack.c.1.s8 %v751
        %v1376 = vunpack.c.1.s8 %v752
        %v1377 = vunpack.c.1.s8 %v753
        %v1378 = vunpack.c.1.s8 %v754
        %v1379 = vunpack.c.1.s8 %v755
        %v1380 = vunpack.c.1.s8 %v756
        %v1381 = vunpack.c.1.s8 %v757
        %v1382 = vunpack.c.2.s8 %v750
        %v1383 = vunpack.c.2.s8 %v751
        %v1384 = vunpack.c.2.s8 %v752
        %v1385 = vunpack.c.2.s8 %v753
        %v1386 = vunpack.c.2.s8 %v754
        %v1387 = vunpack.c.2.s8 %v755
        %v1388 = vunpack.c.2.s8 %v756
        %v1389 = vunpack.c.2.s8 %v757
        %v1390 = vunpack.c.3.s8 %v750
        %v1391 = vunpack.c.3.s8 %v751
        %v1392 = vunpack.c.3.s8 %v752
        %v1393 = vunpack.c.3.s8 %v753
        %v1394 = vunpack.c.3.s8 %v754
        %v1395 = vunpack.c.3.s8 %v755
        %v1396 = vunpack.c.3.s8 %v756
        %v1397 = vunpack.c.3.s8 %v757
        %v1398 = vunpack.c.0.s8 %v758
        %v1399 = vunpack.c.0.s8 %v759
        %v1400 = vunpack.c.0.s8 %v760
        %v1401 = vunpack.c.0.s8 %v761
        %v1402 = vunpack.c.0.s8 %v762
        %v1403 = vunpack.c.0.s8 %v763
        %v1404 = vunpack.c.0.s8 %v764
        %v1405 = vunpack.c.0.s8 %v765
        %v1406 = vunpack.c.1.s8 %v758
        %v1407 = vunpack.c.1.s8 %v759
        %v1408 = vunpack.c.1.s8 %v760
        %v1409 = vunpack.c.1.s8 %v761
        %v1410 = vunpack.c.1.s8 %v762
        %v1411 = vunpack.c.1.s8 %v763
        %v1412 = vunpack.c.1.s8 %v764
        %v1413 = vunpack.c.1.s8 %v765
        %v1414 = vunpack.c.2.s8 %v758
        %v1415 = vunpack.c.2.s8 %v759
        %v1416 = vunpack.c.2.s8 %v760
        %v1417 = vunpack.c.2.s8 %v761
        %v1418 = vunpack.c.2.s8 %v762
        %v1419 = vunpack.c.2.s8 %v763
        %v1420 = vunpack.c.2.s8 %v764
        %v1421 = vunpack.c.2.s8 %v765
        %v1422 = vunpack.c.3.s8 %v758
        %v1423 = vunpack.c.3.s8 %v759
        %v1424 = vunpack.c.3.s8 %v760
        %v1425 = vunpack.c.3.s8 %v761
        %v1426 = vunpack.c.3.s8 %v762
        %v1427 = vunpack.c.3.s8 %v763
        %v1428 = vunpack.c.3.s8 %v764
        %v1429 = vunpack.c.3.s8 %v765
        %v1430 = vunpack.c.0.s8 %v766
        %v1431 = vunpack.c.0.s8 %v767
        %v1432 = vunpack.c.0.s8 %v768
        %v1433 = vunpack.c.0.s8 %v769
        %v1434 = vunpack.c.0.s8 %v770
        %v1435 = vunpack.c.0.s8 %v771
        %v1436 = vunpack.c.0.s8 %v772
        %v1437 = vunpack.c.0.s8 %v773
        %v1438 = vunpack.c.1.s8 %v766
        %v1439 = vunpack.c.1.s8 %v767
        %v1440 = vunpack.c.1.s8 %v768
        %v1441 = vunpack.c.1.s8 %v769
        %v1442 = vunpack.c.1.s8 %v770
        %v1443 = vunpack.c.1.s8 %v771
        %v1444 = vunpack.c.1.s8 %v772
        %v1445 = vunpack.c.1.s8 %v773
        %v1446 = vunpack.c.2.s8 %v766
        %v1447 = vunpack.c.2.s8 %v767
        %v1448 = vunpack.c.2.s8 %v768
        %v1449 = vunpack.c.2.s8 %v769
        %v1450 = vunpack.c.2.s8 %v770
        %v1451 = vunpack.c.2.s8 %v771
        %v1452 = vunpack.c.2.s8 %v772
        %v1453 = vunpack.c.2.s8 %v773
        %v1454 = vunpack.c.3.s8 %v766
        %v1455 = vunpack.c.3.s8 %v767
        %v1456 = vunpack.c.3.s8 %v768
        %v1457 = vunpack.c.3.s8 %v769
        %v1458 = vunpack.c.3.s8 %v770
        %v1459 = vunpack.c.3.s8 %v771
        %v1460 = vunpack.c.3.s8 %v772
        %v1461 = vunpack.c.3.s8 %v773
        %v1462 = vunpack.c.0.s8 %v774
        %v1463 = vunpack.c.0.s8 %v775
        %v1464 = vunpack.c.0.s8 %v776
        %v1465 = vunpack.c.0.s8 %v777
        %v1466 = vunpack.c.0.s8 %v778
        %v1467 = vunpack.c.0.s8 %v779
        %v1468 = vunpack.c.0.s8 %v780
        %v1469 = vunpack.c.0.s8 %v781
        %v1470 = vunpack.c.1.s8 %v774
        %v1471 = vunpack.c.1.s8 %v775
        %v1472 = vunpack.c.1.s8 %v776
        %v1473 = vunpack.c.1.s8 %v777
        %v1474 = vunpack.c.1.s8 %v778
        %v1475 = vunpack.c.1.s8 %v779
        %v1476 = vunpack.c.1.s8 %v780
        %v1477 = vunpack.c.1.s8 %v781
        %v1478 = vunpack.c.2.s8 %v774
        %v1479 = vunpack.c.2.s8 %v775
        %v1480 = vunpack.c.2.s8 %v776
        %v1481 = vunpack.c.2.s8 %v777
        %v1482 = vunpack.c.2.s8 %v778
        %v1483 = vunpack.c.2.s8 %v779
        %v1484 = vunpack.c.2.s8 %v780
        %v1485 = vunpack.c.2.s8 %v781
        %v1486 = vunpack.c.3.s8 %v774
        %v1487 = vunpack.c.3.s8 %v775
        %v1488 = vunpack.c.3.s8 %v776
        %v1489 = vunpack.c.3.s8 %v777
        %v1490 = vunpack.c.3.s8 %v778
        %v1491 = vunpack.c.3.s8 %v779
        %v1492 = vunpack.c.3.s8 %v780
        %v1493 = vunpack.c.3.s8 %v781
        %v1494 = vunpack.c.0.s8 %v782
        %v1495 = vunpack.c.0.s8 %v783
        %v1496 = vunpack.c.0.s8 %v784
        %v1497 = vunpack.c.0.s8 %v785
        %v1498 = vunpack.c.0.s8 %v786
        %v1499 = vunpack.c.0.s8 %v787
        %v1500 = vunpack.c.0.s8 %v788
        %v1501 = vunpack.c.0.s8 %v789
        %v1502 = vunpack.c.1.s8 %v782
        %v1503 = vunpack.c.1.s8 %v783
        %v1504 = vunpack.c.1.s8 %v784
        %v1505 = vunpack.c.1.s8 %v785
        %v1506 = vunpack.c.1.s8 %v786
        %v1507 = vunpack.c.1.s8 %v787
        %v1508 = vunpack.c.1.s8 %v788
        %v1509 = vunpack.c.1.s8 %v789
        %v1510 = vunpack.c.2.s8 %v782
        %v1511 = vunpack.c.2.s8 %v783
        %v1512 = vunpack.c.2.s8 %v784
        %v1513 = vunpack.c.2.s8 %v785
        %v1514 = vunpack.c.2.s8 %v786
        %v1515 = vunpack.c.2.s8 %v787
        %v1516 = vunpack.c.2.s8 %v788
        %v1517 = vunpack.c.2.s8 %v789
        %v1518 = vunpack.c.3.s8 %v782
        %v1519 = vunpack.c.3.s8 %v783
        %v1520 = vunpack.c.3.s8 %v784
        %v1521 = vunpack.c.3.s8 %v785
        %v1522 = vunpack.c.3.s8 %v786
        %v1523 = vunpack.c.3.s8 %v787
        %v1524 = vunpack.c.3.s8 %v788
        %v1525 = vunpack.c.3.s8 %v789
        %v1526 = vunpack.c.0.s8 %v790
        %v1527 = vunpack.c.0.s8 %v791
        %v1528 = vunpack.c.0.s8 %v792
        %v1529 = vunpack.c.0.s8 %v793
        %v1530 = vunpack.c.0.s8 %v794
        %v1531 = vunpack.c.0.s8 %v795
        %v1532 = vunpack.c.0.s8 %v796
        %v1533 = vunpack.c.0.s8 %v797
        %v1534 = vunpack.c.1.s8 %v790
        %v1535 = vunpack.c.1.s8 %v791
        %v1536 = vunpack.c.1.s8 %v792
        %v1537 = vunpack.c.1.s8 %v793
        %v1538 = vunpack.c.1.s8 %v794
        %v1539 = vunpack.c.1.s8 %v795
        %v1540 = vunpack.c.1.s8 %v796
        %v1541 = vunpack.c.1.s8 %v797
        %v1542 = vunpack.c.2.s8 %v790
        %v1543 = vunpack.c.2.s8 %v791
        %v1544 = vunpack.c.2.s8 %v792
        %v1545 = vunpack.c.2.s8 %v793
        %v1546 = vunpack.c.2.s8 %v794
        %v1547 = vunpack.c.2.s8 %v795
        %v1548 = vunpack.c.2.s8 %v796
        %v1549 = vunpack.c.2.s8 %v797
        %v1550 = vunpack.c.3.s8 %v790
        %v1551 = vunpack.c.3.s8 %v791
        %v1552 = vunpack.c.3.s8 %v792
        %v1553 = vunpack.c.3.s8 %v793
        %v1554 = vunpack.c.3.s8 %v794
        %v1555 = vunpack.c.3.s8 %v795
        %v1556 = vunpack.c.3.s8 %v796
        %v1557 = vunpack.c.3.s8 %v797
        %v1558 = vunpack.c.0.s8 %v798
        %v1559 = vunpack.c.0.s8 %v799
        %v1560 = vunpack.c.0.s8 %v800
        %v1561 = vunpack.c.0.s8 %v801
        %v1562 = vunpack.c.0.s8 %v802
        %v1563 = vunpack.c.0.s8 %v803
        %v1564 = vunpack.c.0.s8 %v804
        %v1565 = vunpack.c.0.s8 %v805
        %v1566 = vunpack.c.1.s8 %v798
        %v1567 = vunpack.c.1.s8 %v799
        %v1568 = vunpack.c.1.s8 %v800
        %v1569 = vunpack.c.1.s8 %v801
        %v1570 = vunpack.c.1.s8 %v802
        %v1571 = vunpack.c.1.s8 %v803
        %v1572 = vunpack.c.1.s8 %v804
        %v1573 = vunpack.c.1.s8 %v805
        %v1574 = vunpack.c.2.s8 %v798
        %v1575 = vunpack.c.2.s8 %v799
        %v1576 = vunpack.c.2.s8 %v800
        %v1577 = vunpack.c.2.s8 %v801
        %v1578 = vunpack.c.2.s8 %v802
        %v1579 = vunpack.c.2.s8 %v803
        %v1580 = vunpack.c.2.s8 %v804
        %v1581 = vunpack.c.2.s8 %v805
        %v1582 = vunpack.c.3.s8 %v798
        %v1583 = vunpack.c.3.s8 %v799
        %v1584 = vunpack.c.3.s8 %v800
        %v1585 = vunpack.c.3.s8 %v801
        %v1586 = vunpack.c.3.s8 %v802
        %v1587 = vunpack.c.3.s8 %v803
        %v1588 = vunpack.c.3.s8 %v804
        %v1589 = vunpack.c.3.s8 %v805
        %v1590 = vunpack.c.0.s8 %v806
        %v1591 = vunpack.c.0.s8 %v807
        %v1592 = vunpack.c.0.s8 %v808
        %v1593 = vunpack.c.0.s8 %v809
        %v1594 = vunpack.c.0.s8 %v810
        %v1595 = vunpack.c.0.s8 %v811
        %v1596 = vunpack.c.0.s8 %v812
        %v1597 = vunpack.c.0.s8 %v813
        %v1598 = vunpack.c.1.s8 %v806
        %v1599 = vunpack.c.1.s8 %v807
        %v1600 = vunpack.c.1.s8 %v808
        %v1601 = vunpack.c.1.s8 %v809
        %v1602 = vunpack.c.1.s8 %v810
        %v1603 = vunpack.c.1.s8 %v811
        %v1604 = vunpack.c.1.s8 %v812
        %v1605 = vunpack.c.1.s8 %v813
        %v1606 = vunpack.c.2.s8 %v806
        %v1607 = vunpack.c.2.s8 %v807
        %v1608 = vunpack.c.2.s8 %v808
        %v1609 = vunpack.c.2.s8 %v809
        %v1610 = vunpack.c.2.s8 %v810
        %v1611 = vunpack.c.2.s8 %v811
        %v1612 = vunpack.c.2.s8 %v812
        %v1613 = vunpack.c.2.s8 %v813
        %v1614 = vunpack.c.3.s8 %v806
        %v1615 = vunpack.c.3.s8 %v807
        %v1616 = vunpack.c.3.s8 %v808
        %v1617 = vunpack.c.3.s8 %v809
        %v1618 = vunpack.c.3.s8 %v810
        %v1619 = vunpack.c.3.s8 %v811
        %v1620 = vunpack.c.3.s8 %v812
        %v1621 = vunpack.c.3.s8 %v813
        %v1622 = vunpack.c.0.s8 %v814
        %v1623 = vunpack.c.0.s8 %v815
        %v1624 = vunpack.c.0.s8 %v816
        %v1625 = vunpack.c.0.s8 %v817
        %v1626 = vunpack.c.0.s8 %v818
        %v1627 = vunpack.c.0.s8 %v819
        %v1628 = vunpack.c.0.s8 %v820
        %v1629 = vunpack.c.0.s8 %v821
        %v1630 = vunpack.c.1.s8 %v814
        %v1631 = vunpack.c.1.s8 %v815
        %v1632 = vunpack.c.1.s8 %v816
        %v1633 = vunpack.c.1.s8 %v817
        %v1634 = vunpack.c.1.s8 %v818
        %v1635 = vunpack.c.1.s8 %v819
        %v1636 = vunpack.c.1.s8 %v820
        %v1637 = vunpack.c.1.s8 %v821
        %v1638 = vunpack.c.2.s8 %v814
        %v1639 = vunpack.c.2.s8 %v815
        %v1640 = vunpack.c.2.s8 %v816
        %v1641 = vunpack.c.2.s8 %v817
        %v1642 = vunpack.c.2.s8 %v818
        %v1643 = vunpack.c.2.s8 %v819
        %v1644 = vunpack.c.2.s8 %v820
        %v1645 = vunpack.c.2.s8 %v821
        %v1646 = vunpack.c.3.s8 %v814
        %v1647 = vunpack.c.3.s8 %v815
        %v1648 = vunpack.c.3.s8 %v816
        %v1649 = vunpack.c.3.s8 %v817
        %v1650 = vunpack.c.3.s8 %v818
        %v1651 = vunpack.c.3.s8 %v819
        %v1652 = vunpack.c.3.s8 %v820
        %v1653 = vunpack.c.3.s8 %v821
        %v1654 = vunpack.c.0.s8 %v822
        %v1655 = vunpack.c.0.s8 %v823
        %v1656 = vunpack.c.0.s8 %v824
        %v1657 = vunpack.c.0.s8 %v825
        %v1658 = vunpack.c.0.s8 %v826
        %v1659 = vunpack.c.0.s8 %v827
        %v1660 = vunpack.c.0.s8 %v828
        %v1661 = vunpack.c.0.s8 %v829
        %v1662 = vunpack.c.1.s8 %v822
        %v1663 = vunpack.c.1.s8 %v823
        %v1664 = vunpack.c.1.s8 %v824
        %v1665 = vunpack.c.1.s8 %v825
        %v1666 = vunpack.c.1.s8 %v826
        %v1667 = vunpack.c.1.s8 %v827
        %v1668 = vunpack.c.1.s8 %v828
        %v1669 = vunpack.c.1.s8 %v829
        %v1670 = vunpack.c.2.s8 %v822
        %v1671 = vunpack.c.2.s8 %v823
        %v1672 = vunpack.c.2.s8 %v824
        %v1673 = vunpack.c.2.s8 %v825
        %v1674 = vunpack.c.2.s8 %v826
        %v1675 = vunpack.c.2.s8 %v827
        %v1676 = vunpack.c.2.s8 %v828
        %v1677 = vunpack.c.2.s8 %v829
        %v1678 = vunpack.c.3.s8 %v822
        %v1679 = vunpack.c.3.s8 %v823
        %v1680 = vunpack.c.3.s8 %v824
        %v1681 = vunpack.c.3.s8 %v825
        %v1682 = vunpack.c.3.s8 %v826
        %v1683 = vunpack.c.3.s8 %v827
        %v1684 = vunpack.c.3.s8 %v828
        %v1685 = vunpack.c.3.s8 %v829
        %v1686 = vunpack.c.0.s8 %v830
        %v1687 = vunpack.c.0.s8 %v831
        %v1688 = vunpack.c.0.s8 %v832
        %v1689 = vunpack.c.0.s8 %v833
        %v1690 = vunpack.c.0.s8 %v834
        %v1691 = vunpack.c.0.s8 %v835
        %v1692 = vunpack.c.0.s8 %v836
        %v1693 = vunpack.c.0.s8 %v837
        %v1694 = vunpack.c.1.s8 %v830
        %v1695 = vunpack.c.1.s8 %v831
        %v1696 = vunpack.c.1.s8 %v832
        %v1697 = vunpack.c.1.s8 %v833
        %v1698 = vunpack.c.1.s8 %v834
        %v1699 = vunpack.c.1.s8 %v835
        %v1700 = vunpack.c.1.s8 %v836
        %v1701 = vunpack.c.1.s8 %v837
        %v1702 = vunpack.c.2.s8 %v830
        %v1703 = vunpack.c.2.s8 %v831
        %v1704 = vunpack.c.2.s8 %v832
        %v1705 = vunpack.c.2.s8 %v833
        %v1706 = vunpack.c.2.s8 %v834
        %v1707 = vunpack.c.2.s8 %v835
        %v1708 = vunpack.c.2.s8 %v836
        %v1709 = vunpack.c.2.s8 %v837
        %v1710 = vunpack.c.3.s8 %v830
        %v1711 = vunpack.c.3.s8 %v831
        %v1712 = vunpack.c.3.s8 %v832
        %v1713 = vunpack.c.3.s8 %v833
        %v1714 = vunpack.c.3.s8 %v834
        %v1715 = vunpack.c.3.s8 %v835
        %v1716 = vunpack.c.3.s8 %v836
        %v1717 = vunpack.c.3.s8 %v837
        %v1718 = vunpack.c.0.s8 %v838
        %v1719 = vunpack.c.0.s8 %v839
        %v1720 = vunpack.c.0.s8 %v840
        %v1721 = vunpack.c.0.s8 %v841
        %v1722 = vunpack.c.0.s8 %v842
        %v1723 = vunpack.c.0.s8 %v843
        %v1724 = vunpack.c.0.s8 %v844
        %v1725 = vunpack.c.0.s8 %v845
        %v1726 = vunpack.c.1.s8 %v838
        %v1727 = vunpack.c.1.s8 %v839
        %v1728 = vunpack.c.1.s8 %v840
        %v1729 = vunpack.c.1.s8 %v841
        %v1730 = vunpack.c.1.s8 %v842
        %v1731 = vunpack.c.1.s8 %v843
        %v1732 = vunpack.c.1.s8 %v844
        %v1733 = vunpack.c.1.s8 %v845
        %v1734 = vunpack.c.2.s8 %v838
        %v1735 = vunpack.c.2.s8 %v839
        %v1736 = vunpack.c.2.s8 %v840
        %v1737 = vunpack.c.2.s8 %v841
        %v1738 = vunpack.c.2.s8 %v842
        %v1739 = vunpack.c.2.s8 %v843
        %v1740 = vunpack.c.2.s8 %v844
        %v1741 = vunpack.c.2.s8 %v845
        %v1742 = vunpack.c.3.s8 %v838
        %v1743 = vunpack.c.3.s8 %v839
        %v1744 = vunpack.c.3.s8 %v840
        %v1745 = vunpack.c.3.s8 %v841
        %v1746 = vunpack.c.3.s8 %v842
        %v1747 = vunpack.c.3.s8 %v843
        %v1748 = vunpack.c.3.s8 %v844
        %v1749 = vunpack.c.3.s8 %v845
        %v1750 = vunpack.c.0.s8 %v846
        %v1751 = vunpack.c.0.s8 %v847
        %v1752 = vunpack.c.0.s8 %v848
        %v1753 = vunpack.c.0.s8 %v849
        %v1754 = vunpack.c.0.s8 %v850
        %v1755 = vunpack.c.0.s8 %v851
        %v1756 = vunpack.c.0.s8 %v852
        %v1757 = vunpack.c.0.s8 %v853
        %v1758 = vunpack.c.1.s8 %v846
        %v1759 = vunpack.c.1.s8 %v847
        %v1760 = vunpack.c.1.s8 %v848
        %v1761 = vunpack.c.1.s8 %v849
        %v1762 = vunpack.c.1.s8 %v850
        %v1763 = vunpack.c.1.s8 %v851
        %v1764 = vunpack.c.1.s8 %v852
        %v1765 = vunpack.c.1.s8 %v853
        %v1766 = vunpack.c.2.s8 %v846
        %v1767 = vunpack.c.2.s8 %v847
        %v1768 = vunpack.c.2.s8 %v848
        %v1769 = vunpack.c.2.s8 %v849
        %v1770 = vunpack.c.2.s8 %v850
        %v1771 = vunpack.c.2.s8 %v851
        %v1772 = vunpack.c.2.s8 %v852
        %v1773 = vunpack.c.2.s8 %v853
        %v1774 = vunpack.c.3.s8 %v846
        %v1775 = vunpack.c.3.s8 %v847
        %v1776 = vunpack.c.3.s8 %v848
        %v1777 = vunpack.c.3.s8 %v849
        %v1778 = vunpack.c.3.s8 %v850
        %v1779 = vunpack.c.3.s8 %v851
        %v1780 = vunpack.c.3.s8 %v852
        %v1781 = vunpack.c.3.s8 %v853
        %v1782 = vunpack.c.0.s8 %v854
        %v1783 = vunpack.c.0.s8 %v855
        %v1784 = vunpack.c.0.s8 %v856
        %v1785 = vunpack.c.0.s8 %v857
        %v1786 = vunpack.c.0.s8 %v858
        %v1787 = vunpack.c.0.s8 %v859
        %v1788 = vunpack.c.0.s8 %v860
        %v1789 = vunpack.c.0.s8 %v861
        %v1790 = vunpack.c.1.s8 %v854
        %v1791 = vunpack.c.1.s8 %v855
        %v1792 = vunpack.c.1.s8 %v856
        %v1793 = vunpack.c.1.s8 %v857
        %v1794 = vunpack.c.1.s8 %v858
        %v1795 = vunpack.c.1.s8 %v859
        %v1796 = vunpack.c.1.s8 %v860
        %v1797 = vunpack.c.1.s8 %v861
        %v1798 = vunpack.c.2.s8 %v854
        %v1799 = vunpack.c.2.s8 %v855
        %v1800 = vunpack.c.2.s8 %v856
        %v1801 = vunpack.c.2.s8 %v857
        %v1802 = vunpack.c.2.s8 %v858
        %v1803 = vunpack.c.2.s8 %v859
        %v1804 = vunpack.c.2.s8 %v860
        %v1805 = vunpack.c.2.s8 %v861
        %v1806 = vunpack.c.3.s8 %v854
        %v1807 = vunpack.c.3.s8 %v855
        %v1808 = vunpack.c.3.s8 %v856
        %v1809 = vunpack.c.3.s8 %v857
        %v1810 = vunpack.c.3.s8 %v858
        %v1811 = vunpack.c.3.s8 %v859
        %v1812 = vunpack.c.3.s8 %v860
        %v1813 = vunpack.c.3.s8 %v861
        %v1814 = vunpack.c.0.s8 %v862
        %v1815 = vunpack.c.0.s8 %v863
        %v1816 = vunpack.c.0.s8 %v864
        %v1817 = vunpack.c.0.s8 %v865
        %v1818 = vunpack.c.0.s8 %v866
        %v1819 = vunpack.c.0.s8 %v867
        %v1820 = vunpack.c.0.s8 %v868
        %v1821 = vunpack.c.0.s8 %v869
        %v1822 = vunpack.c.1.s8 %v862
        %v1823 = vunpack.c.1.s8 %v863
        %v1824 = vunpack.c.1.s8 %v864
        %v1825 = vunpack.c.1.s8 %v865
        %v1826 = vunpack.c.1.s8 %v866
        %v1827 = vunpack.c.1.s8 %v867
        %v1828 = vunpack.c.1.s8 %v868
        %v1829 = vunpack.c.1.s8 %v869
        %v1830 = vunpack.c.2.s8 %v862
        %v1831 = vunpack.c.2.s8 %v863
        %v1832 = vunpack.c.2.s8 %v864
        %v1833 = vunpack.c.2.s8 %v865
        %v1834 = vunpack.c.2.s8 %v866
        %v1835 = vunpack.c.2.s8 %v867
        %v1836 = vunpack.c.2.s8 %v868
        %v1837 = vunpack.c.2.s8 %v869
        %v1838 = vunpack.c.3.s8 %v862
        %v1839 = vunpack.c.3.s8 %v863
        %v1840 = vunpack.c.3.s8 %v864
        %v1841 = vunpack.c.3.s8 %v865
        %v1842 = vunpack.c.3.s8 %v866
        %v1843 = vunpack.c.3.s8 %v867
        %v1844 = vunpack.c.3.s8 %v868
        %v1845 = vunpack.c.3.s8 %v869
        %v1846 = vunpack.c.0.s8 %v870
        %v1847 = vunpack.c.0.s8 %v871
        %v1848 = vunpack.c.0.s8 %v872
        %v1849 = vunpack.c.0.s8 %v873
        %v1850 = vunpack.c.0.s8 %v874
        %v1851 = vunpack.c.0.s8 %v875
        %v1852 = vunpack.c.0.s8 %v876
        %v1853 = vunpack.c.0.s8 %v877
        %v1854 = vunpack.c.1.s8 %v870
        %v1855 = vunpack.c.1.s8 %v871
        %v1856 = vunpack.c.1.s8 %v872
        %v1857 = vunpack.c.1.s8 %v873
        %v1858 = vunpack.c.1.s8 %v874
        %v1859 = vunpack.c.1.s8 %v875
        %v1860 = vunpack.c.1.s8 %v876
        %v1861 = vunpack.c.1.s8 %v877
        %v1862 = vunpack.c.2.s8 %v870
        %v1863 = vunpack.c.2.s8 %v871
        %v1864 = vunpack.c.2.s8 %v872
        %v1865 = vunpack.c.2.s8 %v873
        %v1866 = vunpack.c.2.s8 %v874
        %v1867 = vunpack.c.2.s8 %v875
        %v1868 = vunpack.c.2.s8 %v876
        %v1869 = vunpack.c.2.s8 %v877
        %v1870 = vunpack.c.3.s8 %v870
        %v1871 = vunpack.c.3.s8 %v871
        %v1872 = vunpack.c.3.s8 %v872
        %v1873 = vunpack.c.3.s8 %v873
        %v1874 = vunpack.c.3.s8 %v874
        %v1875 = vunpack.c.3.s8 %v875
        %v1876 = vunpack.c.3.s8 %v876
        %v1877 = vunpack.c.3.s8 %v877
        %v1878 = vunpack.c.0.s8 %v878
        %v1879 = vunpack.c.0.s8 %v879
        %v1880 = vunpack.c.0.s8 %v880
        %v1881 = vunpack.c.0.s8 %v881
        %v1882 = vunpack.c.0.s8 %v882
        %v1883 = vunpack.c.0.s8 %v883
        %v1884 = vunpack.c.0.s8 %v884
        %v1885 = vunpack.c.0.s8 %v885
        %v1886 = vunpack.c.1.s8 %v878
        %v1887 = vunpack.c.1.s8 %v879
        %v1888 = vunpack.c.1.s8 %v880
        %v1889 = vunpack.c.1.s8 %v881
        %v1890 = vunpack.c.1.s8 %v882
        %v1891 = vunpack.c.1.s8 %v883
        %v1892 = vunpack.c.1.s8 %v884
        %v1893 = vunpack.c.1.s8 %v885
        %v1894 = vunpack.c.2.s8 %v878
        %v1895 = vunpack.c.2.s8 %v879
        %v1896 = vunpack.c.2.s8 %v880
        %v1897 = vunpack.c.2.s8 %v881
        %v1898 = vunpack.c.2.s8 %v882
        %v1899 = vunpack.c.2.s8 %v883
        %v1900 = vunpack.c.2.s8 %v884
        %v1901 = vunpack.c.2.s8 %v885
        %v1902 = vunpack.c.3.s8 %v878
        %v1903 = vunpack.c.3.s8 %v879
        %v1904 = vunpack.c.3.s8 %v880
        %v1905 = vunpack.c.3.s8 %v881
        %v1906 = vunpack.c.3.s8 %v882
        %v1907 = vunpack.c.3.s8 %v883
        %v1908 = vunpack.c.3.s8 %v884
        %v1909 = vunpack.c.3.s8 %v885
        %v1910 = vcvt.s32.f32 %v886
        %v1911 = vcvt.s32.f32 %v887
        %v1912 = vcvt.s32.f32 %v888
        %v1913 = vcvt.s32.f32 %v889
        %v1914 = vcvt.s32.f32 %v890
        %v1915 = vcvt.s32.f32 %v891
        %v1916 = vcvt.s32.f32 %v892
        %v1917 = vcvt.s32.f32 %v893
        %v1918 = vcvt.s32.f32 %v894
        %v1919 = vcvt.s32.f32 %v895
        %v1920 = vcvt.s32.f32 %v896
        %v1921 = vcvt.s32.f32 %v897
        %v1922 = vcvt.s32.f32 %v898
        %v1923 = vcvt.s32.f32 %v899
        %v1924 = vcvt.s32.f32 %v900
        %v1925 = vcvt.s32.f32 %v901
        %v1926 = vcvt.s32.f32 %v902
        %v1927 = vcvt.s32.f32 %v903
        %v1928 = vcvt.s32.f32 %v904
        %v1929 = vcvt.s32.f32 %v905
        %v1930 = vcvt.s32.f32 %v906
        %v1931 = vcvt.s32.f32 %v907
        %v1932 = vcvt.s32.f32 %v908
        %v1933 = vcvt.s32.f32 %v909
        %v1934 = vcvt.s32.f32 %v910
        %v1935 = vcvt.s32.f32 %v911
        %v1936 = vcvt.s32.f32 %v912
        %v1937 = vcvt.s32.f32 %v913
        %v1938 = vcvt.s32.f32 %v914
        %v1939 = vcvt.s32.f32 %v915
        %v1940 = vcvt.s32.f32 %v916
        %v1941 = vcvt.s32.f32 %v917
        %v1942 = vcvt.s32.f32 %v918
        %v1943 = vcvt.s32.f32 %v919
        %v1944 = vcvt.s32.f32 %v920
        %v1945 = vcvt.s32.f32 %v921
        %v1946 = vcvt.s32.f32 %v922
        %v1947 = vcvt.s32.f32 %v923
        %v1948 = vcvt.s32.f32 %v924
        %v1949 = vcvt.s32.f32 %v925
        %v1950 = vcvt.s32.f32 %v926
        %v1951 = vcvt.s32.f32 %v927
        %v1952 = vcvt.s32.f32 %v928
        %v1953 = vcvt.s32.f32 %v929
        %v1954 = vcvt.s32.f32 %v930
        %v1955 = vcvt.s32.f32 %v931
        %v1956 = vcvt.s32.f32 %v932
        %v1957 = vcvt.s32.f32 %v933
        %v1958 = vcvt.s32.f32 %v934
        %v1959 = vcvt.s32.f32 %v935
        %v1960 = vcvt.s32.f32 %v936
        %v1961 = vcvt.s32.f32 %v937
        %v1962 = vcvt.s32.f32 %v938
        %v1963 = vcvt.s32.f32 %v939
        %v1964 = vcvt.s32.f32 %v940
        %v1965 = vcvt.s32.f32 %v941
        %v1966 = vcvt.s32.f32 %v942
        %v1967 = vcvt.s32.f32 %v943
        %v1968 = vcvt.s32.f32 %v944
        %v1969 = vcvt.s32.f32 %v945
        %v1970 = vcvt.s32.f32 %v946
        %v1971 = vcvt.s32.f32 %v947
        %v1972 = vcvt.s32.f32 %v948
        %v1973 = vcvt.s32.f32 %v949
        %v1974 = vcvt.s32.f32 %v950
        %v1975 = vcvt.s32.f32 %v951
        %v1976 = vcvt.s32.f32 %v952
        %v1977 = vcvt.s32.f32 %v953
        %v1978 = vcvt.s32.f32 %v954
        %v1979 = vcvt.s32.f32 %v955
        %v1980 = vcvt.s32.f32 %v956
        %v1981 = vcvt.s32.f32 %v957
        %v1982 = vcvt.s32.f32 %v958
        %v1983 = vcvt.s32.f32 %v959
        %v1984 = vcvt.s32.f32 %v960
        %v1985 = vcvt.s32.f32 %v961
        %v1986 = vcvt.s32.f32 %v962
        %v1987 = vcvt.s32.f32 %v963
        %v1988 = vcvt.s32.f32 %v964
        %v1989 = vcvt.s32.f32 %v965
        %v1990 = vcvt.s32.f32 %v966
        %v1991 = vcvt.s32.f32 %v967
        %v1992 = vcvt.s32.f32 %v968
        %v1993 = vcvt.s32.f32 %v969
        %v1994 = vcvt.s32.f32 %v970
        %v1995 = vcvt.s32.f32 %v971
        %v1996 = vcvt.s32.f32 %v972
        %v1997 = vcvt.s32.f32 %v973
        %v1998 = vcvt.s32.f32 %v974
        %v1999 = vcvt.s32.f32 %v975
        %v2000 = vcvt.s32.f32 %v976
        %v2001 = vcvt.s32.f32 %v977
        %v2002 = vcvt.s32.f32 %v978
        %v2003 = vcvt.s32.f32 %v979
        %v2004 = vcvt.s32.f32 %v980
        %v2005 = vcvt.s32.f32 %v981
        %v2006 = vcvt.s32.f32 %v982
        %v2007 = vcvt.s32.f32 %v983
        %v2008 = vcvt.s32.f32 %v984
        %v2009 = vcvt.s32.f32 %v985
        %v2010 = vcvt.s32.f32 %v986
        %v2011 = vcvt.s32.f32 %v987
        %v2012 = vcvt.s32.f32 %v988
        %v2013 = vcvt.s32.f32 %v989
        %v2014 = vcvt.s32.f32 %v990
        %v2015 = vcvt.s32.f32 %v991
        %v2016 = vcvt.s32.f32 %v992
        %v2017 = vcvt.s32.f32 %v993
        %v2018 = vcvt.s32.f32 %v994
        %v2019 = vcvt.s32.f32 %v995
        %v2020 = vcvt.s32.f32 %v996
        %v2021 = vcvt.s32.f32 %v997
        %v2022 = vcvt.s32.f32 %v998
        %v2023 = vcvt.s32.f32 %v999
        %v2024 = vcvt.s32.f32 %v1000
        %v2025 = vcvt.s32.f32 %v1001
        %v2026 = vcvt.s32.f32 %v1002
        %v2027 = vcvt.s32.f32 %v1003
        %v2028 = vcvt.s32.f32 %v1004
        %v2029 = vcvt.s32.f32 %v1005
        %v2030 = vcvt.s32.f32 %v1006
        %v2031 = vcvt.s32.f32 %v1007
        %v2032 = vcvt.s32.f32 %v1008
        %v2033 = vcvt.s32.f32 %v1009
        %v2034 = vcvt.s32.f32 %v1010
        %v2035 = vcvt.s32.f32 %v1011
        %v2036 = vcvt.s32.f32 %v1012
        %v2037 = vcvt.s32.f32 %v1013
        %v2038 = vcvt.s32.f32 %v1014
        %v2039 = vcvt.s32.f32 %v1015
        %v2040 = vcvt.s32.f32 %v1016
        %v2041 = vcvt.s32.f32 %v1017
        %v2042 = vcvt.s32.f32 %v1018
        %v2043 = vcvt.s32.f32 %v1019
        %v2044 = vcvt.s32.f32 %v1020
        %v2045 = vcvt.s32.f32 %v1021
        %v2046 = vcvt.s32.f32 %v1022
        %v2047 = vcvt.s32.f32 %v1023
        %v2048 = vcvt.s32.f32 %v1024
        %v2049 = vcvt.s32.f32 %v1025
        %v2050 = vcvt.s32.f32 %v1026
        %v2051 = vcvt.s32.f32 %v1027
        %v2052 = vcvt.s32.f32 %v1028
        %v2053 = vcvt.s32.f32 %v1029
        %v2054 = vcvt.s32.f32 %v1030
        %v2055 = vcvt.s32.f32 %v1031
        %v2056 = vcvt.s32.f32 %v1032
        %v2057 = vcvt.s32.f32 %v1033
        %v2058 = vcvt.s32.f32 %v1034
        %v2059 = vcvt.s32.f32 %v1035
        %v2060 = vcvt.s32.f32 %v1036
        %v2061 = vcvt.s32.f32 %v1037
        %v2062 = vcvt.s32.f32 %v1038
        %v2063 = vcvt.s32.f32 %v1039
        %v2064 = vcvt.s32.f32 %v1040
        %v2065 = vcvt.s32.f32 %v1041
        %v2066 = vcvt.s32.f32 %v1042
        %v2067 = vcvt.s32.f32 %v1043
        %v2068 = vcvt.s32.f32 %v1044
        %v2069 = vcvt.s32.f32 %v1045
        %v2070 = vcvt.s32.f32 %v1046
        %v2071 = vcvt.s32.f32 %v1047
        %v2072 = vcvt.s32.f32 %v1048
        %v2073 = vcvt.s32.f32 %v1049
        %v2074 = vcvt.s32.f32 %v1050
        %v2075 = vcvt.s32.f32 %v1051
        %v2076 = vcvt.s32.f32 %v1052
        %v2077 = vcvt.s32.f32 %v1053
        %v2078 = vcvt.s32.f32 %v1054
        %v2079 = vcvt.s32.f32 %v1055
        %v2080 = vcvt.s32.f32 %v1056
        %v2081 = vcvt.s32.f32 %v1057
        %v2082 = vcvt.s32.f32 %v1058
        %v2083 = vcvt.s32.f32 %v1059
        %v2084 = vcvt.s32.f32 %v1060
        %v2085 = vcvt.s32.f32 %v1061
        %v2086 = vcvt.s32.f32 %v1062
        %v2087 = vcvt.s32.f32 %v1063
        %v2088 = vcvt.s32.f32 %v1064
        %v2089 = vcvt.s32.f32 %v1065
        %v2090 = vcvt.s32.f32 %v1066
        %v2091 = vcvt.s32.f32 %v1067
        %v2092 = vcvt.s32.f32 %v1068
        %v2093 = vcvt.s32.f32 %v1069
        %v2094 = vcvt.s32.f32 %v1070
        %v2095 = vcvt.s32.f32 %v1071
        %v2096 = vcvt.s32.f32 %v1072
        %v2097 = vcvt.s32.f32 %v1073
        %v2098 = vcvt.s32.f32 %v1074
        %v2099 = vcvt.s32.f32 %v1075
        %v2100 = vcvt.s32.f32 %v1076
        %v2101 = vcvt.s32.f32 %v1077
        %v2102 = vcvt.s32.f32 %v1078
        %v2103 = vcvt.s32.f32 %v1079
        %v2104 = vcvt.s32.f32 %v1080
        %v2105 = vcvt.s32.f32 %v1081
        %v2106 = vcvt.s32.f32 %v1082
        %v2107 = vcvt.s32.f32 %v1083
        %v2108 = vcvt.s32.f32 %v1084
        %v2109 = vcvt.s32.f32 %v1085
        %v2110 = vcvt.s32.f32 %v1086
        %v2111 = vcvt.s32.f32 %v1087
        %v2112 = vcvt.s32.f32 %v1088
        %v2113 = vcvt.s32.f32 %v1089
        %v2114 = vcvt.s32.f32 %v1090
        %v2115 = vcvt.s32.f32 %v1091
        %v2116 = vcvt.s32.f32 %v1092
        %v2117 = vcvt.s32.f32 %v1093
        %v2118 = vcvt.s32.f32 %v1094
        %v2119 = vcvt.s32.f32 %v1095
        %v2120 = vcvt.s32.f32 %v1096
        %v2121 = vcvt.s32.f32 %v1097
        %v2122 = vcvt.s32.f32 %v1098
        %v2123 = vcvt.s32.f32 %v1099
        %v2124 = vcvt.s32.f32 %v1100
        %v2125 = vcvt.s32.f32 %v1101
        %v2126 = vcvt.s32.f32 %v1102
        %v2127 = vcvt.s32.f32 %v1103
        %v2128 = vcvt.s32.f32 %v1104
        %v2129 = vcvt.s32.f32 %v1105
        %v2130 = vcvt.s32.f32 %v1106
        %v2131 = vcvt.s32.f32 %v1107
        %v2132 = vcvt.s32.f32 %v1108
        %v2133 = vcvt.s32.f32 %v1109
        %v2134 = vcvt.s32.f32 %v1110
        %v2135 = vcvt.s32.f32 %v1111
        %v2136 = vcvt.s32.f32 %v1112
        %v2137 = vcvt.s32.f32 %v1113
        %v2138 = vcvt.s32.f32 %v1114
        %v2139 = vcvt.s32.f32 %v1115
        %v2140 = vcvt.s32.f32 %v1116
        %v2141 = vcvt.s32.f32 %v1117
        %v2142 = vcvt.s32.f32 %v1118
        %v2143 = vcvt.s32.f32 %v1119
        %v2144 = vcvt.s32.f32 %v1120
        %v2145 = vcvt.s32.f32 %v1121
        %v2146 = vcvt.s32.f32 %v1122
        %v2147 = vcvt.s32.f32 %v1123
        %v2148 = vcvt.s32.f32 %v1124
        %v2149 = vcvt.s32.f32 %v1125
        %v2150 = vcvt.s32.f32 %v1126
        %v2151 = vcvt.s32.f32 %v1127
        %v2152 = vcvt.s32.f32 %v1128
        %v2153 = vcvt.s32.f32 %v1129
        %v2154 = vcvt.s32.f32 %v1130
        %v2155 = vcvt.s32.f32 %v1131
        %v2156 = vcvt.s32.f32 %v1132
        %v2157 = vcvt.s32.f32 %v1133
        %v2158 = vcvt.s32.f32 %v1134
        %v2159 = vcvt.s32.f32 %v1135
        %v2160 = vcvt.s32.f32 %v1136
        %v2161 = vcvt.s32.f32 %v1137
        %v2162 = vcvt.s32.f32 %v1138
        %v2163 = vcvt.s32.f32 %v1139
        %v2164 = vcvt.s32.f32 %v1140
        %v2165 = vcvt.s32.f32 %v1141
        %v2166 = vcvt.s32.f32 %v1142
        %v2167 = vcvt.s32.f32 %v1143
        %v2168 = vcvt.s32.f32 %v1144
        %v2169 = vcvt.s32.f32 %v1145
        %v2170 = vcvt.s32.f32 %v1146
        %v2171 = vcvt.s32.f32 %v1147
        %v2172 = vcvt.s32.f32 %v1148
        %v2173 = vcvt.s32.f32 %v1149
        %v2174 = vcvt.s32.f32 %v1150
        %v2175 = vcvt.s32.f32 %v1151
        %v2176 = vcvt.s32.f32 %v1152
        %v2177 = vcvt.s32.f32 %v1153
        %v2178 = vcvt.s32.f32 %v1154
        %v2179 = vcvt.s32.f32 %v1155
        %v2180 = vcvt.s32.f32 %v1156
        %v2181 = vcvt.s32.f32 %v1157
        %v2182 = vcvt.s32.f32 %v1158
        %v2183 = vcvt.s32.f32 %v1159
        %v2184 = vcvt.s32.f32 %v1160
        %v2185 = vcvt.s32.f32 %v1161
        %v2186 = vcvt.s32.f32 %v1162
        %v2187 = vcvt.s32.f32 %v1163
        %v2188 = vcvt.s32.f32 %v1164
        %v2189 = vcvt.s32.f32 %v1165
        %v2190 = vcvt.s32.f32 %v1166
        %v2191 = vcvt.s32.f32 %v1167
        %v2192 = vcvt.s32.f32 %v1168
        %v2193 = vcvt.s32.f32 %v1169
        %v2194 = vcvt.s32.f32 %v1170
        %v2195 = vcvt.s32.f32 %v1171
        %v2196 = vcvt.s32.f32 %v1172
        %v2197 = vcvt.s32.f32 %v1173
        %v2198 = vcvt.s32.f32 %v1174
        %v2199 = vcvt.s32.f32 %v1175
        %v2200 = vcvt.s32.f32 %v1176
        %v2201 = vcvt.s32.f32 %v1177
        %v2202 = vcvt.s32.f32 %v1178
        %v2203 = vcvt.s32.f32 %v1179
        %v2204 = vcvt.s32.f32 %v1180
        %v2205 = vcvt.s32.f32 %v1181
        %v2206 = vcvt.s32.f32 %v1182
        %v2207 = vcvt.s32.f32 %v1183
        %v2208 = vcvt.s32.f32 %v1184
        %v2209 = vcvt.s32.f32 %v1185
        %v2210 = vcvt.s32.f32 %v1186
        %v2211 = vcvt.s32.f32 %v1187
        %v2212 = vcvt.s32.f32 %v1188
        %v2213 = vcvt.s32.f32 %v1189
        %v2214 = vcvt.s32.f32 %v1190
        %v2215 = vcvt.s32.f32 %v1191
        %v2216 = vcvt.s32.f32 %v1192
        %v2217 = vcvt.s32.f32 %v1193
        %v2218 = vcvt.s32.f32 %v1194
        %v2219 = vcvt.s32.f32 %v1195
        %v2220 = vcvt.s32.f32 %v1196
        %v2221 = vcvt.s32.f32 %v1197
        %v2222 = vcvt.s32.f32 %v1198
        %v2223 = vcvt.s32.f32 %v1199
        %v2224 = vcvt.s32.f32 %v1200
        %v2225 = vcvt.s32.f32 %v1201
        %v2226 = vcvt.s32.f32 %v1202
        %v2227 = vcvt.s32.f32 %v1203
        %v2228 = vcvt.s32.f32 %v1204
        %v2229 = vcvt.s32.f32 %v1205
        %v2230 = vcvt.s32.f32 %v1206
        %v2231 = vcvt.s32.f32 %v1207
        %v2232 = vcvt.s32.f32 %v1208
        %v2233 = vcvt.s32.f32 %v1209
        %v2234 = vcvt.s32.f32 %v1210
        %v2235 = vcvt.s32.f32 %v1211
        %v2236 = vcvt.s32.f32 %v1212
        %v2237 = vcvt.s32.f32 %v1213
        %v2238 = vcvt.s32.f32 %v1214
        %v2239 = vcvt.s32.f32 %v1215
        %v2240 = vcvt.s32.f32 %v1216
        %v2241 = vcvt.s32.f32 %v1217
        %v2242 = vcvt.s32.f32 %v1218
        %v2243 = vcvt.s32.f32 %v1219
        %v2244 = vcvt.s32.f32 %v1220
        %v2245 = vcvt.s32.f32 %v1221
        %v2246 = vcvt.s32.f32 %v1222
        %v2247 = vcvt.s32.f32 %v1223
        %v2248 = vcvt.s32.f32 %v1224
        %v2249 = vcvt.s32.f32 %v1225
        %v2250 = vcvt.s32.f32 %v1226
        %v2251 = vcvt.s32.f32 %v1227
        %v2252 = vcvt.s32.f32 %v1228
        %v2253 = vcvt.s32.f32 %v1229
        %v2254 = vcvt.s32.f32 %v1230
        %v2255 = vcvt.s32.f32 %v1231
        %v2256 = vcvt.s32.f32 %v1232
        %v2257 = vcvt.s32.f32 %v1233
        %v2258 = vcvt.s32.f32 %v1234
        %v2259 = vcvt.s32.f32 %v1235
        %v2260 = vcvt.s32.f32 %v1236
        %v2261 = vcvt.s32.f32 %v1237
        %v2262 = vcvt.s32.f32 %v1238
        %v2263 = vcvt.s32.f32 %v1239
        %v2264 = vcvt.s32.f32 %v1240
        %v2265 = vcvt.s32.f32 %v1241
        %v2266 = vcvt.s32.f32 %v1242
        %v2267 = vcvt.s32.f32 %v1243
        %v2268 = vcvt.s32.f32 %v1244
        %v2269 = vcvt.s32.f32 %v1245
        %v2270 = vcvt.s32.f32 %v1246
        %v2271 = vcvt.s32.f32 %v1247
        %v2272 = vcvt.s32.f32 %v1248
        %v2273 = vcvt.s32.f32 %v1249
        %v2274 = vcvt.s32.f32 %v1250
        %v2275 = vcvt.s32.f32 %v1251
        %v2276 = vcvt.s32.f32 %v1252
        %v2277 = vcvt.s32.f32 %v1253
        %v2278 = vcvt.s32.f32 %v1254
        %v2279 = vcvt.s32.f32 %v1255
        %v2280 = vcvt.s32.f32 %v1256
        %v2281 = vcvt.s32.f32 %v1257
        %v2282 = vcvt.s32.f32 %v1258
        %v2283 = vcvt.s32.f32 %v1259
        %v2284 = vcvt.s32.f32 %v1260
        %v2285 = vcvt.s32.f32 %v1261
        %v2286 = vcvt.s32.f32 %v1262
        %v2287 = vcvt.s32.f32 %v1263
        %v2288 = vcvt.s32.f32 %v1264
        %v2289 = vcvt.s32.f32 %v1265
        %v2290 = vcvt.s32.f32 %v1266
        %v2291 = vcvt.s32.f32 %v1267
        %v2292 = vcvt.s32.f32 %v1268
        %v2293 = vcvt.s32.f32 %v1269
        %v2294 = vcvt.s32.f32 %v1270
        %v2295 = vcvt.s32.f32 %v1271
        %v2296 = vcvt.s32.f32 %v1272
        %v2297 = vcvt.s32.f32 %v1273
        %v2298 = vcvt.s32.f32 %v1274
        %v2299 = vcvt.s32.f32 %v1275
        %v2300 = vcvt.s32.f32 %v1276
        %v2301 = vcvt.s32.f32 %v1277
        %v2302 = vcvt.s32.f32 %v1278
        %v2303 = vcvt.s32.f32 %v1279
        %v2304 = vcvt.s32.f32 %v1280
        %v2305 = vcvt.s32.f32 %v1281
        %v2306 = vcvt.s32.f32 %v1282
        %v2307 = vcvt.s32.f32 %v1283
        %v2308 = vcvt.s32.f32 %v1284
        %v2309 = vcvt.s32.f32 %v1285
        %v2310 = vcvt.s32.f32 %v1286
        %v2311 = vcvt.s32.f32 %v1287
        %v2312 = vcvt.s32.f32 %v1288
        %v2313 = vcvt.s32.f32 %v1289
        %v2314 = vcvt.s32.f32 %v1290
        %v2315 = vcvt.s32.f32 %v1291
        %v2316 = vcvt.s32.f32 %v1292
        %v2317 = vcvt.s32.f32 %v1293
        %v2318 = vcvt.s32.f32 %v1294
        %v2319 = vcvt.s32.f32 %v1295
        %v2320 = vcvt.s32.f32 %v1296
        %v2321 = vcvt.s32.f32 %v1297
        %v2322 = vcvt.s32.f32 %v1298
        %v2323 = vcvt.s32.f32 %v1299
        %v2324 = vcvt.s32.f32 %v1300
        %v2325 = vcvt.s32.f32 %v1301
        %v2326 = vcvt.s32.f32 %v1302
        %v2327 = vcvt.s32.f32 %v1303
        %v2328 = vcvt.s32.f32 %v1304
        %v2329 = vcvt.s32.f32 %v1305
        %v2330 = vcvt.s32.f32 %v1306
        %v2331 = vcvt.s32.f32 %v1307
        %v2332 = vcvt.s32.f32 %v1308
        %v2333 = vcvt.s32.f32 %v1309
        %v2334 = vcvt.s32.f32 %v1310
        %v2335 = vcvt.s32.f32 %v1311
        %v2336 = vcvt.s32.f32 %v1312
        %v2337 = vcvt.s32.f32 %v1313
        %v2338 = vcvt.s32.f32 %v1314
        %v2339 = vcvt.s32.f32 %v1315
        %v2340 = vcvt.s32.f32 %v1316
        %v2341 = vcvt.s32.f32 %v1317
        %v2342 = vcvt.s32.f32 %v1318
        %v2343 = vcvt.s32.f32 %v1319
        %v2344 = vcvt.s32.f32 %v1320
        %v2345 = vcvt.s32.f32 %v1321
        %v2346 = vcvt.s32.f32 %v1322
        %v2347 = vcvt.s32.f32 %v1323
        %v2348 = vcvt.s32.f32 %v1324
        %v2349 = vcvt.s32.f32 %v1325
        %v2350 = vcvt.s32.f32 %v1326
        %v2351 = vcvt.s32.f32 %v1327
        %v2352 = vcvt.s32.f32 %v1328
        %v2353 = vcvt.s32.f32 %v1329
        %v2354 = vcvt.s32.f32 %v1330
        %v2355 = vcvt.s32.f32 %v1331
        %v2356 = vcvt.s32.f32 %v1332
        %v2357 = vcvt.s32.f32 %v1333
        %v2358 = vcvt.s32.f32 %v1334
        %v2359 = vcvt.s32.f32 %v1335
        %v2360 = vcvt.s32.f32 %v1336
        %v2361 = vcvt.s32.f32 %v1337
        %v2362 = vcvt.s32.f32 %v1338
        %v2363 = vcvt.s32.f32 %v1339
        %v2364 = vcvt.s32.f32 %v1340
        %v2365 = vcvt.s32.f32 %v1341
        %v2366 = vcvt.s32.f32 %v1342
        %v2367 = vcvt.s32.f32 %v1343
        %v2368 = vcvt.s32.f32 %v1344
        %v2369 = vcvt.s32.f32 %v1345
        %v2370 = vcvt.s32.f32 %v1346
        %v2371 = vcvt.s32.f32 %v1347
        %v2372 = vcvt.s32.f32 %v1348
        %v2373 = vcvt.s32.f32 %v1349
        %v2374 = vcvt.s32.f32 %v1350
        %v2375 = vcvt.s32.f32 %v1351
        %v2376 = vcvt.s32.f32 %v1352
        %v2377 = vcvt.s32.f32 %v1353
        %v2378 = vcvt.s32.f32 %v1354
        %v2379 = vcvt.s32.f32 %v1355
        %v2380 = vcvt.s32.f32 %v1356
        %v2381 = vcvt.s32.f32 %v1357
        %v2382 = vcvt.s32.f32 %v1358
        %v2383 = vcvt.s32.f32 %v1359
        %v2384 = vcvt.s32.f32 %v1360
        %v2385 = vcvt.s32.f32 %v1361
        %v2386 = vcvt.s32.f32 %v1362
        %v2387 = vcvt.s32.f32 %v1363
        %v2388 = vcvt.s32.f32 %v1364
        %v2389 = vcvt.s32.f32 %v1365
        %v2390 = vcvt.s32.f32 %v1366
        %v2391 = vcvt.s32.f32 %v1367
        %v2392 = vcvt.s32.f32 %v1368
        %v2393 = vcvt.s32.f32 %v1369
        %v2394 = vcvt.s32.f32 %v1370
        %v2395 = vcvt.s32.f32 %v1371
        %v2396 = vcvt.s32.f32 %v1372
        %v2397 = vcvt.s32.f32 %v1373
        %v2398 = vcvt.s32.f32 %v1374
        %v2399 = vcvt.s32.f32 %v1375
        %v2400 = vcvt.s32.f32 %v1376
        %v2401 = vcvt.s32.f32 %v1377
        %v2402 = vcvt.s32.f32 %v1378
        %v2403 = vcvt.s32.f32 %v1379
        %v2404 = vcvt.s32.f32 %v1380
        %v2405 = vcvt.s32.f32 %v1381
        %v2406 = vcvt.s32.f32 %v1382
        %v2407 = vcvt.s32.f32 %v1383
        %v2408 = vcvt.s32.f32 %v1384
        %v2409 = vcvt.s32.f32 %v1385
        %v2410 = vcvt.s32.f32 %v1386
        %v2411 = vcvt.s32.f32 %v1387
        %v2412 = vcvt.s32.f32 %v1388
        %v2413 = vcvt.s32.f32 %v1389
        %v2414 = vcvt.s32.f32 %v1390
        %v2415 = vcvt.s32.f32 %v1391
        %v2416 = vcvt.s32.f32 %v1392
        %v2417 = vcvt.s32.f32 %v1393
        %v2418 = vcvt.s32.f32 %v1394
        %v2419 = vcvt.s32.f32 %v1395
        %v2420 = vcvt.s32.f32 %v1396
        %v2421 = vcvt.s32.f32 %v1397
        %v2422 = vcvt.s32.f32 %v1398
        %v2423 = vcvt.s32.f32 %v1399
        %v2424 = vcvt.s32.f32 %v1400
        %v2425 = vcvt.s32.f32 %v1401
        %v2426 = vcvt.s32.f32 %v1402
        %v2427 = vcvt.s32.f32 %v1403
        %v2428 = vcvt.s32.f32 %v1404
        %v2429 = vcvt.s32.f32 %v1405
        %v2430 = vcvt.s32.f32 %v1406
        %v2431 = vcvt.s32.f32 %v1407
        %v2432 = vcvt.s32.f32 %v1408
        %v2433 = vcvt.s32.f32 %v1409
        %v2434 = vcvt.s32.f32 %v1410
        %v2435 = vcvt.s32.f32 %v1411
        %v2436 = vcvt.s32.f32 %v1412
        %v2437 = vcvt.s32.f32 %v1413
        %v2438 = vcvt.s32.f32 %v1414
        %v2439 = vcvt.s32.f32 %v1415
        %v2440 = vcvt.s32.f32 %v1416
        %v2441 = vcvt.s32.f32 %v1417
        %v2442 = vcvt.s32.f32 %v1418
        %v2443 = vcvt.s32.f32 %v1419
        %v2444 = vcvt.s32.f32 %v1420
        %v2445 = vcvt.s32.f32 %v1421
        %v2446 = vcvt.s32.f32 %v1422
        %v2447 = vcvt.s32.f32 %v1423
        %v2448 = vcvt.s32.f32 %v1424
        %v2449 = vcvt.s32.f32 %v1425
        %v2450 = vcvt.s32.f32 %v1426
        %v2451 = vcvt.s32.f32 %v1427
        %v2452 = vcvt.s32.f32 %v1428
        %v2453 = vcvt.s32.f32 %v1429
        %v2454 = vcvt.s32.f32 %v1430
        %v2455 = vcvt.s32.f32 %v1431
        %v2456 = vcvt.s32.f32 %v1432
        %v2457 = vcvt.s32.f32 %v1433
        %v2458 = vcvt.s32.f32 %v1434
        %v2459 = vcvt.s32.f32 %v1435
        %v2460 = vcvt.s32.f32 %v1436
        %v2461 = vcvt.s32.f32 %v1437
        %v2462 = vcvt.s32.f32 %v1438
        %v2463 = vcvt.s32.f32 %v1439
        %v2464 = vcvt.s32.f32 %v1440
        %v2465 = vcvt.s32.f32 %v1441
        %v2466 = vcvt.s32.f32 %v1442
        %v2467 = vcvt.s32.f32 %v1443
        %v2468 = vcvt.s32.f32 %v1444
        %v2469 = vcvt.s32.f32 %v1445
        %v2470 = vcvt.s32.f32 %v1446
        %v2471 = vcvt.s32.f32 %v1447
        %v2472 = vcvt.s32.f32 %v1448
        %v2473 = vcvt.s32.f32 %v1449
        %v2474 = vcvt.s32.f32 %v1450
        %v2475 = vcvt.s32.f32 %v1451
        %v2476 = vcvt.s32.f32 %v1452
        %v2477 = vcvt.s32.f32 %v1453
        %v2478 = vcvt.s32.f32 %v1454
        %v2479 = vcvt.s32.f32 %v1455
        %v2480 = vcvt.s32.f32 %v1456
        %v2481 = vcvt.s32.f32 %v1457
        %v2482 = vcvt.s32.f32 %v1458
        %v2483 = vcvt.s32.f32 %v1459
        %v2484 = vcvt.s32.f32 %v1460
        %v2485 = vcvt.s32.f32 %v1461
        %v2486 = vcvt.s32.f32 %v1462
        %v2487 = vcvt.s32.f32 %v1463
        %v2488 = vcvt.s32.f32 %v1464
        %v2489 = vcvt.s32.f32 %v1465
        %v2490 = vcvt.s32.f32 %v1466
        %v2491 = vcvt.s32.f32 %v1467
        %v2492 = vcvt.s32.f32 %v1468
        %v2493 = vcvt.s32.f32 %v1469
        %v2494 = vcvt.s32.f32 %v1470
        %v2495 = vcvt.s32.f32 %v1471
        %v2496 = vcvt.s32.f32 %v1472
        %v2497 = vcvt.s32.f32 %v1473
        %v2498 = vcvt.s32.f32 %v1474
        %v2499 = vcvt.s32.f32 %v1475
        %v2500 = vcvt.s32.f32 %v1476
        %v2501 = vcvt.s32.f32 %v1477
        %v2502 = vcvt.s32.f32 %v1478
        %v2503 = vcvt.s32.f32 %v1479
        %v2504 = vcvt.s32.f32 %v1480
        %v2505 = vcvt.s32.f32 %v1481
        %v2506 = vcvt.s32.f32 %v1482
        %v2507 = vcvt.s32.f32 %v1483
        %v2508 = vcvt.s32.f32 %v1484
        %v2509 = vcvt.s32.f32 %v1485
        %v2510 = vcvt.s32.f32 %v1486
        %v2511 = vcvt.s32.f32 %v1487
        %v2512 = vcvt.s32.f32 %v1488
        %v2513 = vcvt.s32.f32 %v1489
        %v2514 = vcvt.s32.f32 %v1490
        %v2515 = vcvt.s32.f32 %v1491
        %v2516 = vcvt.s32.f32 %v1492
        %v2517 = vcvt.s32.f32 %v1493
        %v2518 = vcvt.s32.f32 %v1494
        %v2519 = vcvt.s32.f32 %v1495
        %v2520 = vcvt.s32.f32 %v1496
        %v2521 = vcvt.s32.f32 %v1497
        %v2522 = vcvt.s32.f32 %v1498
        %v2523 = vcvt.s32.f32 %v1499
        %v2524 = vcvt.s32.f32 %v1500
        %v2525 = vcvt.s32.f32 %v1501
        %v2526 = vcvt.s32.f32 %v1502
        %v2527 = vcvt.s32.f32 %v1503
        %v2528 = vcvt.s32.f32 %v1504
        %v2529 = vcvt.s32.f32 %v1505
        %v2530 = vcvt.s32.f32 %v1506
        %v2531 = vcvt.s32.f32 %v1507
        %v2532 = vcvt.s32.f32 %v1508
        %v2533 = vcvt.s32.f32 %v1509
        %v2534 = vcvt.s32.f32 %v1510
        %v2535 = vcvt.s32.f32 %v1511
        %v2536 = vcvt.s32.f32 %v1512
        %v2537 = vcvt.s32.f32 %v1513
        %v2538 = vcvt.s32.f32 %v1514
        %v2539 = vcvt.s32.f32 %v1515
        %v2540 = vcvt.s32.f32 %v1516
        %v2541 = vcvt.s32.f32 %v1517
        %v2542 = vcvt.s32.f32 %v1518
        %v2543 = vcvt.s32.f32 %v1519
        %v2544 = vcvt.s32.f32 %v1520
        %v2545 = vcvt.s32.f32 %v1521
        %v2546 = vcvt.s32.f32 %v1522
        %v2547 = vcvt.s32.f32 %v1523
        %v2548 = vcvt.s32.f32 %v1524
        %v2549 = vcvt.s32.f32 %v1525
        %v2550 = vcvt.s32.f32 %v1526
        %v2551 = vcvt.s32.f32 %v1527
        %v2552 = vcvt.s32.f32 %v1528
        %v2553 = vcvt.s32.f32 %v1529
        %v2554 = vcvt.s32.f32 %v1530
        %v2555 = vcvt.s32.f32 %v1531
        %v2556 = vcvt.s32.f32 %v1532
        %v2557 = vcvt.s32.f32 %v1533
        %v2558 = vcvt.s32.f32 %v1534
        %v2559 = vcvt.s32.f32 %v1535
        %v2560 = vcvt.s32.f32 %v1536
        %v2561 = vcvt.s32.f32 %v1537
        %v2562 = vcvt.s32.f32 %v1538
        %v2563 = vcvt.s32.f32 %v1539
        %v2564 = vcvt.s32.f32 %v1540
        %v2565 = vcvt.s32.f32 %v1541
        %v2566 = vcvt.s32.f32 %v1542
        %v2567 = vcvt.s32.f32 %v1543
        %v2568 = vcvt.s32.f32 %v1544
        %v2569 = vcvt.s32.f32 %v1545
        %v2570 = vcvt.s32.f32 %v1546
        %v2571 = vcvt.s32.f32 %v1547
        %v2572 = vcvt.s32.f32 %v1548
        %v2573 = vcvt.s32.f32 %v1549
        %v2574 = vcvt.s32.f32 %v1550
        %v2575 = vcvt.s32.f32 %v1551
        %v2576 = vcvt.s32.f32 %v1552
        %v2577 = vcvt.s32.f32 %v1553
        %v2578 = vcvt.s32.f32 %v1554
        %v2579 = vcvt.s32.f32 %v1555
        %v2580 = vcvt.s32.f32 %v1556
        %v2581 = vcvt.s32.f32 %v1557
        %v2582 = vcvt.s32.f32 %v1558
        %v2583 = vcvt.s32.f32 %v1559
        %v2584 = vcvt.s32.f32 %v1560
        %v2585 = vcvt.s32.f32 %v1561
        %v2586 = vcvt.s32.f32 %v1562
        %v2587 = vcvt.s32.f32 %v1563
        %v2588 = vcvt.s32.f32 %v1564
        %v2589 = vcvt.s32.f32 %v1565
        %v2590 = vcvt.s32.f32 %v1566
        %v2591 = vcvt.s32.f32 %v1567
        %v2592 = vcvt.s32.f32 %v1568
        %v2593 = vcvt.s32.f32 %v1569
        %v2594 = vcvt.s32.f32 %v1570
        %v2595 = vcvt.s32.f32 %v1571
        %v2596 = vcvt.s32.f32 %v1572
        %v2597 = vcvt.s32.f32 %v1573
        %v2598 = vcvt.s32.f32 %v1574
        %v2599 = vcvt.s32.f32 %v1575
        %v2600 = vcvt.s32.f32 %v1576
        %v2601 = vcvt.s32.f32 %v1577
        %v2602 = vcvt.s32.f32 %v1578
        %v2603 = vcvt.s32.f32 %v1579
        %v2604 = vcvt.s32.f32 %v1580
        %v2605 = vcvt.s32.f32 %v1581
        %v2606 = vcvt.s32.f32 %v1582
        %v2607 = vcvt.s32.f32 %v1583
        %v2608 = vcvt.s32.f32 %v1584
        %v2609 = vcvt.s32.f32 %v1585
        %v2610 = vcvt.s32.f32 %v1586
        %v2611 = vcvt.s32.f32 %v1587
        %v2612 = vcvt.s32.f32 %v1588
        %v2613 = vcvt.s32.f32 %v1589
        %v2614 = vcvt.s32.f32 %v1590
        %v2615 = vcvt.s32.f32 %v1591
        %v2616 = vcvt.s32.f32 %v1592
        %v2617 = vcvt.s32.f32 %v1593
        %v2618 = vcvt.s32.f32 %v1594
        %v2619 = vcvt.s32.f32 %v1595
        %v2620 = vcvt.s32.f32 %v1596
        %v2621 = vcvt.s32.f32 %v1597
        %v2622 = vcvt.s32.f32 %v1598
        %v2623 = vcvt.s32.f32 %v1599
        %v2624 = vcvt.s32.f32 %v1600
        %v2625 = vcvt.s32.f32 %v1601
        %v2626 = vcvt.s32.f32 %v1602
        %v2627 = vcvt.s32.f32 %v1603
        %v2628 = vcvt.s32.f32 %v1604
        %v2629 = vcvt.s32.f32 %v1605
        %v2630 = vcvt.s32.f32 %v1606
        %v2631 = vcvt.s32.f32 %v1607
        %v2632 = vcvt.s32.f32 %v1608
        %v2633 = vcvt.s32.f32 %v1609
        %v2634 = vcvt.s32.f32 %v1610
        %v2635 = vcvt.s32.f32 %v1611
        %v2636 = vcvt.s32.f32 %v1612
        %v2637 = vcvt.s32.f32 %v1613
        %v2638 = vcvt.s32.f32 %v1614
        %v2639 = vcvt.s32.f32 %v1615
        %v2640 = vcvt.s32.f32 %v1616
        %v2641 = vcvt.s32.f32 %v1617
        %v2642 = vcvt.s32.f32 %v1618
        %v2643 = vcvt.s32.f32 %v1619
        %v2644 = vcvt.s32.f32 %v1620
        %v2645 = vcvt.s32.f32 %v1621
        %v2646 = vcvt.s32.f32 %v1622
        %v2647 = vcvt.s32.f32 %v1623
        %v2648 = vcvt.s32.f32 %v1624
        %v2649 = vcvt.s32.f32 %v1625
        %v2650 = vcvt.s32.f32 %v1626
        %v2651 = vcvt.s32.f32 %v1627
        %v2652 = vcvt.s32.f32 %v1628
        %v2653 = vcvt.s32.f32 %v1629
        %v2654 = vcvt.s32.f32 %v1630
        %v2655 = vcvt.s32.f32 %v1631
        %v2656 = vcvt.s32.f32 %v1632
        %v2657 = vcvt.s32.f32 %v1633
        %v2658 = vcvt.s32.f32 %v1634
        %v2659 = vcvt.s32.f32 %v1635
        %v2660 = vcvt.s32.f32 %v1636
        %v2661 = vcvt.s32.f32 %v1637
        %v2662 = vcvt.s32.f32 %v1638
        %v2663 = vcvt.s32.f32 %v1639
        %v2664 = vcvt.s32.f32 %v1640
        %v2665 = vcvt.s32.f32 %v1641
        %v2666 = vcvt.s32.f32 %v1642
        %v2667 = vcvt.s32.f32 %v1643
        %v2668 = vcvt.s32.f32 %v1644
        %v2669 = vcvt.s32.f32 %v1645
        %v2670 = vcvt.s32.f32 %v1646
        %v2671 = vcvt.s32.f32 %v1647
        %v2672 = vcvt.s32.f32 %v1648
        %v2673 = vcvt.s32.f32 %v1649
        %v2674 = vcvt.s32.f32 %v1650
        %v2675 = vcvt.s32.f32 %v1651
        %v2676 = vcvt.s32.f32 %v1652
        %v2677 = vcvt.s32.f32 %v1653
        %v2678 = vcvt.s32.f32 %v1654
        %v2679 = vcvt.s32.f32 %v1655
        %v2680 = vcvt.s32.f32 %v1656
        %v2681 = vcvt.s32.f32 %v1657
        %v2682 = vcvt.s32.f32 %v1658
        %v2683 = vcvt.s32.f32 %v1659
        %v2684 = vcvt.s32.f32 %v1660
        %v2685 = vcvt.s32.f32 %v1661
        %v2686 = vcvt.s32.f32 %v1662
        %v2687 = vcvt.s32.f32 %v1663
        %v2688 = vcvt.s32.f32 %v1664
        %v2689 = vcvt.s32.f32 %v1665
        %v2690 = vcvt.s32.f32 %v1666
        %v2691 = vcvt.s32.f32 %v1667
        %v2692 = vcvt.s32.f32 %v1668
        %v2693 = vcvt.s32.f32 %v1669
        %v2694 = vcvt.s32.f32 %v1670
        %v2695 = vcvt.s32.f32 %v1671
        %v2696 = vcvt.s32.f32 %v1672
        %v2697 = vcvt.s32.f32 %v1673
        %v2698 = vcvt.s32.f32 %v1674
        %v2699 = vcvt.s32.f32 %v1675
        %v2700 = vcvt.s32.f32 %v1676
        %v2701 = vcvt.s32.f32 %v1677
        %v2702 = vcvt.s32.f32 %v1678
        %v2703 = vcvt.s32.f32 %v1679
        %v2704 = vcvt.s32.f32 %v1680
        %v2705 = vcvt.s32.f32 %v1681
        %v2706 = vcvt.s32.f32 %v1682
        %v2707 = vcvt.s32.f32 %v1683
        %v2708 = vcvt.s32.f32 %v1684
        %v2709 = vcvt.s32.f32 %v1685
        %v2710 = vcvt.s32.f32 %v1686
        %v2711 = vcvt.s32.f32 %v1687
        %v2712 = vcvt.s32.f32 %v1688
        %v2713 = vcvt.s32.f32 %v1689
        %v2714 = vcvt.s32.f32 %v1690
        %v2715 = vcvt.s32.f32 %v1691
        %v2716 = vcvt.s32.f32 %v1692
        %v2717 = vcvt.s32.f32 %v1693
        %v2718 = vcvt.s32.f32 %v1694
        %v2719 = vcvt.s32.f32 %v1695
        %v2720 = vcvt.s32.f32 %v1696
        %v2721 = vcvt.s32.f32 %v1697
        %v2722 = vcvt.s32.f32 %v1698
        %v2723 = vcvt.s32.f32 %v1699
        %v2724 = vcvt.s32.f32 %v1700
        %v2725 = vcvt.s32.f32 %v1701
        %v2726 = vcvt.s32.f32 %v1702
        %v2727 = vcvt.s32.f32 %v1703
        %v2728 = vcvt.s32.f32 %v1704
        %v2729 = vcvt.s32.f32 %v1705
        %v2730 = vcvt.s32.f32 %v1706
        %v2731 = vcvt.s32.f32 %v1707
        %v2732 = vcvt.s32.f32 %v1708
        %v2733 = vcvt.s32.f32 %v1709
        %v2734 = vcvt.s32.f32 %v1710
        %v2735 = vcvt.s32.f32 %v1711
        %v2736 = vcvt.s32.f32 %v1712
        %v2737 = vcvt.s32.f32 %v1713
        %v2738 = vcvt.s32.f32 %v1714
        %v2739 = vcvt.s32.f32 %v1715
        %v2740 = vcvt.s32.f32 %v1716
        %v2741 = vcvt.s32.f32 %v1717
        %v2742 = vcvt.s32.f32 %v1718
        %v2743 = vcvt.s32.f32 %v1719
        %v2744 = vcvt.s32.f32 %v1720
        %v2745 = vcvt.s32.f32 %v1721
        %v2746 = vcvt.s32.f32 %v1722
        %v2747 = vcvt.s32.f32 %v1723
        %v2748 = vcvt.s32.f32 %v1724
        %v2749 = vcvt.s32.f32 %v1725
        %v2750 = vcvt.s32.f32 %v1726
        %v2751 = vcvt.s32.f32 %v1727
        %v2752 = vcvt.s32.f32 %v1728
        %v2753 = vcvt.s32.f32 %v1729
        %v2754 = vcvt.s32.f32 %v1730
        %v2755 = vcvt.s32.f32 %v1731
        %v2756 = vcvt.s32.f32 %v1732
        %v2757 = vcvt.s32.f32 %v1733
        %v2758 = vcvt.s32.f32 %v1734
        %v2759 = vcvt.s32.f32 %v1735
        %v2760 = vcvt.s32.f32 %v1736
        %v2761 = vcvt.s32.f32 %v1737
        %v2762 = vcvt.s32.f32 %v1738
        %v2763 = vcvt.s32.f32 %v1739
        %v2764 = vcvt.s32.f32 %v1740
        %v2765 = vcvt.s32.f32 %v1741
        %v2766 = vcvt.s32.f32 %v1742
        %v2767 = vcvt.s32.f32 %v1743
        %v2768 = vcvt.s32.f32 %v1744
        %v2769 = vcvt.s32.f32 %v1745
        %v2770 = vcvt.s32.f32 %v1746
        %v2771 = vcvt.s32.f32 %v1747
        %v2772 = vcvt.s32.f32 %v1748
        %v2773 = vcvt.s32.f32 %v1749
        %v2774 = vcvt.s32.f32 %v1750
        %v2775 = vcvt.s32.f32 %v1751
        %v2776 = vcvt.s32.f32 %v1752
        %v2777 = vcvt.s32.f32 %v1753
        %v2778 = vcvt.s32.f32 %v1754
        %v2779 = vcvt.s32.f32 %v1755
        %v2780 = vcvt.s32.f32 %v1756
        %v2781 = vcvt.s32.f32 %v1757
        %v2782 = vcvt.s32.f32 %v1758
        %v2783 = vcvt.s32.f32 %v1759
        %v2784 = vcvt.s32.f32 %v1760
        %v2785 = vcvt.s32.f32 %v1761
        %v2786 = vcvt.s32.f32 %v1762
        %v2787 = vcvt.s32.f32 %v1763
        %v2788 = vcvt.s32.f32 %v1764
        %v2789 = vcvt.s32.f32 %v1765
        %v2790 = vcvt.s32.f32 %v1766
        %v2791 = vcvt.s32.f32 %v1767
        %v2792 = vcvt.s32.f32 %v1768
        %v2793 = vcvt.s32.f32 %v1769
        %v2794 = vcvt.s32.f32 %v1770
        %v2795 = vcvt.s32.f32 %v1771
        %v2796 = vcvt.s32.f32 %v1772
        %v2797 = vcvt.s32.f32 %v1773
        %v2798 = vcvt.s32.f32 %v1774
        %v2799 = vcvt.s32.f32 %v1775
        %v2800 = vcvt.s32.f32 %v1776
        %v2801 = vcvt.s32.f32 %v1777
        %v2802 = vcvt.s32.f32 %v1778
        %v2803 = vcvt.s32.f32 %v1779
        %v2804 = vcvt.s32.f32 %v1780
        %v2805 = vcvt.s32.f32 %v1781
        %v2806 = vcvt.s32.f32 %v1782
        %v2807 = vcvt.s32.f32 %v1783
        %v2808 = vcvt.s32.f32 %v1784
        %v2809 = vcvt.s32.f32 %v1785
        %v2810 = vcvt.s32.f32 %v1786
        %v2811 = vcvt.s32.f32 %v1787
        %v2812 = vcvt.s32.f32 %v1788
        %v2813 = vcvt.s32.f32 %v1789
        %v2814 = vcvt.s32.f32 %v1790
        %v2815 = vcvt.s32.f32 %v1791
        %v2816 = vcvt.s32.f32 %v1792
        %v2817 = vcvt.s32.f32 %v1793
        %v2818 = vcvt.s32.f32 %v1794
        %v2819 = vcvt.s32.f32 %v1795
        %v2820 = vcvt.s32.f32 %v1796
        %v2821 = vcvt.s32.f32 %v1797
        %v2822 = vcvt.s32.f32 %v1798
        %v2823 = vcvt.s32.f32 %v1799
        %v2824 = vcvt.s32.f32 %v1800
        %v2825 = vcvt.s32.f32 %v1801
        %v2826 = vcvt.s32.f32 %v1802
        %v2827 = vcvt.s32.f32 %v1803
        %v2828 = vcvt.s32.f32 %v1804
        %v2829 = vcvt.s32.f32 %v1805
        %v2830 = vcvt.s32.f32 %v1806
        %v2831 = vcvt.s32.f32 %v1807
        %v2832 = vcvt.s32.f32 %v1808
        %v2833 = vcvt.s32.f32 %v1809
        %v2834 = vcvt.s32.f32 %v1810
        %v2835 = vcvt.s32.f32 %v1811
        %v2836 = vcvt.s32.f32 %v1812
        %v2837 = vcvt.s32.f32 %v1813
        %v2838 = vcvt.s32.f32 %v1814
        %v2839 = vcvt.s32.f32 %v1815
        %v2840 = vcvt.s32.f32 %v1816
        %v2841 = vcvt.s32.f32 %v1817
        %v2842 = vcvt.s32.f32 %v1818
        %v2843 = vcvt.s32.f32 %v1819
        %v2844 = vcvt.s32.f32 %v1820
        %v2845 = vcvt.s32.f32 %v1821
        %v2846 = vcvt.s32.f32 %v1822
        %v2847 = vcvt.s32.f32 %v1823
        %v2848 = vcvt.s32.f32 %v1824
        %v2849 = vcvt.s32.f32 %v1825
        %v2850 = vcvt.s32.f32 %v1826
        %v2851 = vcvt.s32.f32 %v1827
        %v2852 = vcvt.s32.f32 %v1828
        %v2853 = vcvt.s32.f32 %v1829
        %v2854 = vcvt.s32.f32 %v1830
        %v2855 = vcvt.s32.f32 %v1831
        %v2856 = vcvt.s32.f32 %v1832
        %v2857 = vcvt.s32.f32 %v1833
        %v2858 = vcvt.s32.f32 %v1834
        %v2859 = vcvt.s32.f32 %v1835
        %v2860 = vcvt.s32.f32 %v1836
        %v2861 = vcvt.s32.f32 %v1837
        %v2862 = vcvt.s32.f32 %v1838
        %v2863 = vcvt.s32.f32 %v1839
        %v2864 = vcvt.s32.f32 %v1840
        %v2865 = vcvt.s32.f32 %v1841
        %v2866 = vcvt.s32.f32 %v1842
        %v2867 = vcvt.s32.f32 %v1843
        %v2868 = vcvt.s32.f32 %v1844
        %v2869 = vcvt.s32.f32 %v1845
        %v2870 = vcvt.s32.f32 %v1846
        %v2871 = vcvt.s32.f32 %v1847
        %v2872 = vcvt.s32.f32 %v1848
        %v2873 = vcvt.s32.f32 %v1849
        %v2874 = vcvt.s32.f32 %v1850
        %v2875 = vcvt.s32.f32 %v1851
        %v2876 = vcvt.s32.f32 %v1852
        %v2877 = vcvt.s32.f32 %v1853
        %v2878 = vcvt.s32.f32 %v1854
        %v2879 = vcvt.s32.f32 %v1855
        %v2880 = vcvt.s32.f32 %v1856
        %v2881 = vcvt.s32.f32 %v1857
        %v2882 = vcvt.s32.f32 %v1858
        %v2883 = vcvt.s32.f32 %v1859
        %v2884 = vcvt.s32.f32 %v1860
        %v2885 = vcvt.s32.f32 %v1861
        %v2886 = vcvt.s32.f32 %v1862
        %v2887 = vcvt.s32.f32 %v1863
        %v2888 = vcvt.s32.f32 %v1864
        %v2889 = vcvt.s32.f32 %v1865
        %v2890 = vcvt.s32.f32 %v1866
        %v2891 = vcvt.s32.f32 %v1867
        %v2892 = vcvt.s32.f32 %v1868
        %v2893 = vcvt.s32.f32 %v1869
        %v2894 = vcvt.s32.f32 %v1870
        %v2895 = vcvt.s32.f32 %v1871
        %v2896 = vcvt.s32.f32 %v1872
        %v2897 = vcvt.s32.f32 %v1873
        %v2898 = vcvt.s32.f32 %v1874
        %v2899 = vcvt.s32.f32 %v1875
        %v2900 = vcvt.s32.f32 %v1876
        %v2901 = vcvt.s32.f32 %v1877
        %v2902 = vcvt.s32.f32 %v1878
        %v2903 = vcvt.s32.f32 %v1879
        %v2904 = vcvt.s32.f32 %v1880
        %v2905 = vcvt.s32.f32 %v1881
        %v2906 = vcvt.s32.f32 %v1882
        %v2907 = vcvt.s32.f32 %v1883
        %v2908 = vcvt.s32.f32 %v1884
        %v2909 = vcvt.s32.f32 %v1885
        %v2910 = vcvt.s32.f32 %v1886
        %v2911 = vcvt.s32.f32 %v1887
        %v2912 = vcvt.s32.f32 %v1888
        %v2913 = vcvt.s32.f32 %v1889
        %v2914 = vcvt.s32.f32 %v1890
        %v2915 = vcvt.s32.f32 %v1891
        %v2916 = vcvt.s32.f32 %v1892
        %v2917 = vcvt.s32.f32 %v1893
        %v2918 = vcvt.s32.f32 %v1894
        %v2919 = vcvt.s32.f32 %v1895
        %v2920 = vcvt.s32.f32 %v1896
        %v2921 = vcvt.s32.f32 %v1897
        %v2922 = vcvt.s32.f32 %v1898
        %v2923 = vcvt.s32.f32 %v1899
        %v2924 = vcvt.s32.f32 %v1900
        %v2925 = vcvt.s32.f32 %v1901
        %v2926 = vcvt.s32.f32 %v1902
        %v2927 = vcvt.s32.f32 %v1903
        %v2928 = vcvt.s32.f32 %v1904
        %v2929 = vcvt.s32.f32 %v1905
        %v2930 = vcvt.s32.f32 %v1906
        %v2931 = vcvt.s32.f32 %v1907
        %v2932 = vcvt.s32.f32 %v1908
        %v2933 = vcvt.s32.f32 %v1909
        %v2934 = vpack.c.bf16 %v1918, %v1910
        %v2935 = vpack.c.bf16 %v1919, %v1911
        %v2936 = vpack.c.bf16 %v1920, %v1912
        %v2937 = vpack.c.bf16 %v1921, %v1913
        %v2938 = vpack.c.bf16 %v1922, %v1914
        %v2939 = vpack.c.bf16 %v1923, %v1915
        %v2940 = vpack.c.bf16 %v1924, %v1916
        %v2941 = vpack.c.bf16 %v1925, %v1917
        %v2942 = vpack.c.bf16 %v1934, %v1926
        %v2943 = vpack.c.bf16 %v1935, %v1927
        %v2944 = vpack.c.bf16 %v1936, %v1928
        %v2945 = vpack.c.bf16 %v1937, %v1929
        %v2946 = vpack.c.bf16 %v1938, %v1930
        %v2947 = vpack.c.bf16 %v1939, %v1931
        %v2948 = vpack.c.bf16 %v1940, %v1932
        %v2949 = vpack.c.bf16 %v1941, %v1933
        %v2950 = vpack.c.bf16 %v1950, %v1942
        %v2951 = vpack.c.bf16 %v1951, %v1943
        %v2952 = vpack.c.bf16 %v1952, %v1944
        %v2953 = vpack.c.bf16 %v1953, %v1945
        %v2954 = vpack.c.bf16 %v1954, %v1946
        %v2955 = vpack.c.bf16 %v1955, %v1947
        %v2956 = vpack.c.bf16 %v1956, %v1948
        %v2957 = vpack.c.bf16 %v1957, %v1949
        %v2958 = vpack.c.bf16 %v1966, %v1958
        %v2959 = vpack.c.bf16 %v1967, %v1959
        %v2960 = vpack.c.bf16 %v1968, %v1960
        %v2961 = vpack.c.bf16 %v1969, %v1961
        %v2962 = vpack.c.bf16 %v1970, %v1962
        %v2963 = vpack.c.bf16 %v1971, %v1963
        %v2964 = vpack.c.bf16 %v1972, %v1964
        %v2965 = vpack.c.bf16 %v1973, %v1965
        %v2966 = vpack.c.bf16 %v1982, %v1974
        %v2967 = vpack.c.bf16 %v1983, %v1975
        %v2968 = vpack.c.bf16 %v1984, %v1976
        %v2969 = vpack.c.bf16 %v1985, %v1977
        %v2970 = vpack.c.bf16 %v1986, %v1978
        %v2971 = vpack.c.bf16 %v1987, %v1979
        %v2972 = vpack.c.bf16 %v1988, %v1980
        %v2973 = vpack.c.bf16 %v1989, %v1981
        %v2974 = vpack.c.bf16 %v1998, %v1990
        %v2975 = vpack.c.bf16 %v1999, %v1991
        %v2976 = vpack.c.bf16 %v2000, %v1992
        %v2977 = vpack.c.bf16 %v2001, %v1993
        %v2978 = vpack.c.bf16 %v2002, %v1994
        %v2979 = vpack.c.bf16 %v2003, %v1995
        %v2980 = vpack.c.bf16 %v2004, %v1996
        %v2981 = vpack.c.bf16 %v2005, %v1997
        %v2982 = vpack.c.bf16 %v2014, %v2006
        %v2983 = vpack.c.bf16 %v2015, %v2007
        %v2984 = vpack.c.bf16 %v2016, %v2008
        %v2985 = vpack.c.bf16 %v2017, %v2009
        %v2986 = vpack.c.bf16 %v2018, %v2010
        %v2987 = vpack.c.bf16 %v2019, %v2011
        %v2988 = vpack.c.bf16 %v2020, %v2012
        %v2989 = vpack.c.bf16 %v2021, %v2013
        %v2990 = vpack.c.bf16 %v2030, %v2022
        %v2991 = vpack.c.bf16 %v2031, %v2023
        %v2992 = vpack.c.bf16 %v2032, %v2024
        %v2993 = vpack.c.bf16 %v2033, %v2025
        %v2994 = vpack.c.bf16 %v2034, %v2026
        %v2995 = vpack.c.bf16 %v2035, %v2027
        %v2996 = vpack.c.bf16 %v2036, %v2028
        %v2997 = vpack.c.bf16 %v2037, %v2029
        %v2998 = vpack.c.bf16 %v2046, %v2038
        %v2999 = vpack.c.bf16 %v2047, %v2039
        %v3000 = vpack.c.bf16 %v2048, %v2040
        %v3001 = vpack.c.bf16 %v2049, %v2041
        %v3002 = vpack.c.bf16 %v2050, %v2042
        %v3003 = vpack.c.bf16 %v2051, %v2043
        %v3004 = vpack.c.bf16 %v2052, %v2044
        %v3005 = vpack.c.bf16 %v2053, %v2045
        %v3006 = vpack.c.bf16 %v2062, %v2054
        %v3007 = vpack.c.bf16 %v2063, %v2055
        %v3008 = vpack.c.bf16 %v2064, %v2056
        %v3009 = vpack.c.bf16 %v2065, %v2057
        %v3010 = vpack.c.bf16 %v2066, %v2058
        %v3011 = vpack.c.bf16 %v2067, %v2059
        %v3012 = vpack.c.bf16 %v2068, %v2060
        %v3013 = vpack.c.bf16 %v2069, %v2061
        %v3014 = vpack.c.bf16 %v2078, %v2070
        %v3015 = vpack.c.bf16 %v2079, %v2071
        %v3016 = vpack.c.bf16 %v2080, %v2072
        %v3017 = vpack.c.bf16 %v2081, %v2073
        %v3018 = vpack.c.bf16 %v2082, %v2074
        %v3019 = vpack.c.bf16 %v2083, %v2075
        %v3020 = vpack.c.bf16 %v2084, %v2076
        %v3021 = vpack.c.bf16 %v2085, %v2077
        %v3022 = vpack.c.bf16 %v2094, %v2086
        %v3023 = vpack.c.bf16 %v2095, %v2087
        %v3024 = vpack.c.bf16 %v2096, %v2088
        %v3025 = vpack.c.bf16 %v2097, %v2089
        %v3026 = vpack.c.bf16 %v2098, %v2090
        %v3027 = vpack.c.bf16 %v2099, %v2091
        %v3028 = vpack.c.bf16 %v2100, %v2092
        %v3029 = vpack.c.bf16 %v2101, %v2093
        %v3030 = vpack.c.bf16 %v2110, %v2102
        %v3031 = vpack.c.bf16 %v2111, %v2103
        %v3032 = vpack.c.bf16 %v2112, %v2104
        %v3033 = vpack.c.bf16 %v2113, %v2105
        %v3034 = vpack.c.bf16 %v2114, %v2106
        %v3035 = vpack.c.bf16 %v2115, %v2107
        %v3036 = vpack.c.bf16 %v2116, %v2108
        %v3037 = vpack.c.bf16 %v2117, %v2109
        %v3038 = vpack.c.bf16 %v2126, %v2118
        %v3039 = vpack.c.bf16 %v2127, %v2119
        %v3040 = vpack.c.bf16 %v2128, %v2120
        %v3041 = vpack.c.bf16 %v2129, %v2121
        %v3042 = vpack.c.bf16 %v2130, %v2122
        %v3043 = vpack.c.bf16 %v2131, %v2123
        %v3044 = vpack.c.bf16 %v2132, %v2124
        %v3045 = vpack.c.bf16 %v2133, %v2125
        %v3046 = vpack.c.bf16 %v2142, %v2134
        %v3047 = vpack.c.bf16 %v2143, %v2135
        %v3048 = vpack.c.bf16 %v2144, %v2136
        %v3049 = vpack.c.bf16 %v2145, %v2137
        %v3050 = vpack.c.bf16 %v2146, %v2138
        %v3051 = vpack.c.bf16 %v2147, %v2139
        %v3052 = vpack.c.bf16 %v2148, %v2140
        %v3053 = vpack.c.bf16 %v2149, %v2141
        %v3054 = vpack.c.bf16 %v2158, %v2150
        %v3055 = vpack.c.bf16 %v2159, %v2151
        %v3056 = vpack.c.bf16 %v2160, %v2152
        %v3057 = vpack.c.bf16 %v2161, %v2153
        %v3058 = vpack.c.bf16 %v2162, %v2154
        %v3059 = vpack.c.bf16 %v2163, %v2155
        %v3060 = vpack.c.bf16 %v2164, %v2156
        %v3061 = vpack.c.bf16 %v2165, %v2157
        %v3062 = vpack.c.bf16 %v2174, %v2166
        %v3063 = vpack.c.bf16 %v2175, %v2167
        %v3064 = vpack.c.bf16 %v2176, %v2168
        %v3065 = vpack.c.bf16 %v2177, %v2169
        %v3066 = vpack.c.bf16 %v2178, %v2170
        %v3067 = vpack.c.bf16 %v2179, %v2171
        %v3068 = vpack.c.bf16 %v2180, %v2172
        %v3069 = vpack.c.bf16 %v2181, %v2173
        %v3070 = vpack.c.bf16 %v2190, %v2182
        %v3071 = vpack.c.bf16 %v2191, %v2183
        %v3072 = vpack.c.bf16 %v2192, %v2184
        %v3073 = vpack.c.bf16 %v2193, %v2185
        %v3074 = vpack.c.bf16 %v2194, %v2186
        %v3075 = vpack.c.bf16 %v2195, %v2187
        %v3076 = vpack.c.bf16 %v2196, %v2188
        %v3077 = vpack.c.bf16 %v2197, %v2189
        %v3078 = vpack.c.bf16 %v2206, %v2198
        %v3079 = vpack.c.bf16 %v2207, %v2199
        %v3080 = vpack.c.bf16 %v2208, %v2200
        %v3081 = vpack.c.bf16 %v2209, %v2201
        %v3082 = vpack.c.bf16 %v2210, %v2202
        %v3083 = vpack.c.bf16 %v2211, %v2203
        %v3084 = vpack.c.bf16 %v2212, %v2204
        %v3085 = vpack.c.bf16 %v2213, %v2205
        %v3086 = vpack.c.bf16 %v2222, %v2214
        %v3087 = vpack.c.bf16 %v2223, %v2215
        %v3088 = vpack.c.bf16 %v2224, %v2216
        %v3089 = vpack.c.bf16 %v2225, %v2217
        %v3090 = vpack.c.bf16 %v2226, %v2218
        %v3091 = vpack.c.bf16 %v2227, %v2219
        %v3092 = vpack.c.bf16 %v2228, %v2220
        %v3093 = vpack.c.bf16 %v2229, %v2221
        %v3094 = vpack.c.bf16 %v2238, %v2230
        %v3095 = vpack.c.bf16 %v2239, %v2231
        %v3096 = vpack.c.bf16 %v2240, %v2232
        %v3097 = vpack.c.bf16 %v2241, %v2233
        %v3098 = vpack.c.bf16 %v2242, %v2234
        %v3099 = vpack.c.bf16 %v2243, %v2235
        %v3100 = vpack.c.bf16 %v2244, %v2236
        %v3101 = vpack.c.bf16 %v2245, %v2237
        %v3102 = vpack.c.bf16 %v2254, %v2246
        %v3103 = vpack.c.bf16 %v2255, %v2247
        %v3104 = vpack.c.bf16 %v2256, %v2248
        %v3105 = vpack.c.bf16 %v2257, %v2249
        %v3106 = vpack.c.bf16 %v2258, %v2250
        %v3107 = vpack.c.bf16 %v2259, %v2251
        %v3108 = vpack.c.bf16 %v2260, %v2252
        %v3109 = vpack.c.bf16 %v2261, %v2253
        %v3110 = vpack.c.bf16 %v2270, %v2262
        %v3111 = vpack.c.bf16 %v2271, %v2263
        %v3112 = vpack.c.bf16 %v2272, %v2264
        %v3113 = vpack.c.bf16 %v2273, %v2265
        %v3114 = vpack.c.bf16 %v2274, %v2266
        %v3115 = vpack.c.bf16 %v2275, %v2267
        %v3116 = vpack.c.bf16 %v2276, %v2268
        %v3117 = vpack.c.bf16 %v2277, %v2269
        %v3118 = vpack.c.bf16 %v2286, %v2278
        %v3119 = vpack.c.bf16 %v2287, %v2279
        %v3120 = vpack.c.bf16 %v2288, %v2280
        %v3121 = vpack.c.bf16 %v2289, %v2281
        %v3122 = vpack.c.bf16 %v2290, %v2282
        %v3123 = vpack.c.bf16 %v2291, %v2283
        %v3124 = vpack.c.bf16 %v2292, %v2284
        %v3125 = vpack.c.bf16 %v2293, %v2285
        %v3126 = vpack.c.bf16 %v2302, %v2294
        %v3127 = vpack.c.bf16 %v2303, %v2295
        %v3128 = vpack.c.bf16 %v2304, %v2296
        %v3129 = vpack.c.bf16 %v2305, %v2297
        %v3130 = vpack.c.bf16 %v2306, %v2298
        %v3131 = vpack.c.bf16 %v2307, %v2299
        %v3132 = vpack.c.bf16 %v2308, %v2300
        %v3133 = vpack.c.bf16 %v2309, %v2301
        %v3134 = vpack.c.bf16 %v2318, %v2310
        %v3135 = vpack.c.bf16 %v2319, %v2311
        %v3136 = vpack.c.bf16 %v2320, %v2312
        %v3137 = vpack.c.bf16 %v2321, %v2313
        %v3138 = vpack.c.bf16 %v2322, %v2314
        %v3139 = vpack.c.bf16 %v2323, %v2315
        %v3140 = vpack.c.bf16 %v2324, %v2316
        %v3141 = vpack.c.bf16 %v2325, %v2317
        %v3142 = vpack.c.bf16 %v2334, %v2326
        %v3143 = vpack.c.bf16 %v2335, %v2327
        %v3144 = vpack.c.bf16 %v2336, %v2328
        %v3145 = vpack.c.bf16 %v2337, %v2329
        %v3146 = vpack.c.bf16 %v2338, %v2330
        %v3147 = vpack.c.bf16 %v2339, %v2331
        %v3148 = vpack.c.bf16 %v2340, %v2332
        %v3149 = vpack.c.bf16 %v2341, %v2333
        %v3150 = vpack.c.bf16 %v2350, %v2342
        %v3151 = vpack.c.bf16 %v2351, %v2343
        %v3152 = vpack.c.bf16 %v2352, %v2344
        %v3153 = vpack.c.bf16 %v2353, %v2345
        %v3154 = vpack.c.bf16 %v2354, %v2346
        %v3155 = vpack.c.bf16 %v2355, %v2347
        %v3156 = vpack.c.bf16 %v2356, %v2348
        %v3157 = vpack.c.bf16 %v2357, %v2349
        %v3158 = vpack.c.bf16 %v2366, %v2358
        %v3159 = vpack.c.bf16 %v2367, %v2359
        %v3160 = vpack.c.bf16 %v2368, %v2360
        %v3161 = vpack.c.bf16 %v2369, %v2361
        %v3162 = vpack.c.bf16 %v2370, %v2362
        %v3163 = vpack.c.bf16 %v2371, %v2363
        %v3164 = vpack.c.bf16 %v2372, %v2364
        %v3165 = vpack.c.bf16 %v2373, %v2365
        %v3166 = vpack.c.bf16 %v2382, %v2374
        %v3167 = vpack.c.bf16 %v2383, %v2375
        %v3168 = vpack.c.bf16 %v2384, %v2376
        %v3169 = vpack.c.bf16 %v2385, %v2377
        %v3170 = vpack.c.bf16 %v2386, %v2378
        %v3171 = vpack.c.bf16 %v2387, %v2379
        %v3172 = vpack.c.bf16 %v2388, %v2380
        %v3173 = vpack.c.bf16 %v2389, %v2381
        %v3174 = vpack.c.bf16 %v2398, %v2390
        %v3175 = vpack.c.bf16 %v2399, %v2391
        %v3176 = vpack.c.bf16 %v2400, %v2392
        %v3177 = vpack.c.bf16 %v2401, %v2393
        %v3178 = vpack.c.bf16 %v2402, %v2394
        %v3179 = vpack.c.bf16 %v2403, %v2395
        %v3180 = vpack.c.bf16 %v2404, %v2396
        %v3181 = vpack.c.bf16 %v2405, %v2397
        %v3182 = vpack.c.bf16 %v2414, %v2406
        %v3183 = vpack.c.bf16 %v2415, %v2407
        %v3184 = vpack.c.bf16 %v2416, %v2408
        %v3185 = vpack.c.bf16 %v2417, %v2409
        %v3186 = vpack.c.bf16 %v2418, %v2410
        %v3187 = vpack.c.bf16 %v2419, %v2411
        %v3188 = vpack.c.bf16 %v2420, %v2412
        %v3189 = vpack.c.bf16 %v2421, %v2413
        %v3190 = vpack.c.bf16 %v2430, %v2422
        %v3191 = vpack.c.bf16 %v2431, %v2423
        %v3192 = vpack.c.bf16 %v2432, %v2424
        %v3193 = vpack.c.bf16 %v2433, %v2425
        %v3194 = vpack.c.bf16 %v2434, %v2426
        %v3195 = vpack.c.bf16 %v2435, %v2427
        %v3196 = vpack.c.bf16 %v2436, %v2428
        %v3197 = vpack.c.bf16 %v2437, %v2429
        %v3198 = vpack.c.bf16 %v2446, %v2438
        %v3199 = vpack.c.bf16 %v2447, %v2439
        %v3200 = vpack.c.bf16 %v2448, %v2440
        %v3201 = vpack.c.bf16 %v2449, %v2441
        %v3202 = vpack.c.bf16 %v2450, %v2442
        %v3203 = vpack.c.bf16 %v2451, %v2443
        %v3204 = vpack.c.bf16 %v2452, %v2444
        %v3205 = vpack.c.bf16 %v2453, %v2445
        %v3206 = vpack.c.bf16 %v2462, %v2454
        %v3207 = vpack.c.bf16 %v2463, %v2455
        %v3208 = vpack.c.bf16 %v2464, %v2456
        %v3209 = vpack.c.bf16 %v2465, %v2457
        %v3210 = vpack.c.bf16 %v2466, %v2458
        %v3211 = vpack.c.bf16 %v2467, %v2459
        %v3212 = vpack.c.bf16 %v2468, %v2460
        %v3213 = vpack.c.bf16 %v2469, %v2461
        %v3214 = vpack.c.bf16 %v2478, %v2470
        %v3215 = vpack.c.bf16 %v2479, %v2471
        %v3216 = vpack.c.bf16 %v2480, %v2472
        %v3217 = vpack.c.bf16 %v2481, %v2473
        %v3218 = vpack.c.bf16 %v2482, %v2474
        %v3219 = vpack.c.bf16 %v2483, %v2475
        %v3220 = vpack.c.bf16 %v2484, %v2476
        %v3221 = vpack.c.bf16 %v2485, %v2477
        %v3222 = vpack.c.bf16 %v2494, %v2486
        %v3223 = vpack.c.bf16 %v2495, %v2487
        %v3224 = vpack.c.bf16 %v2496, %v2488
        %v3225 = vpack.c.bf16 %v2497, %v2489
        %v3226 = vpack.c.bf16 %v2498, %v2490
        %v3227 = vpack.c.bf16 %v2499, %v2491
        %v3228 = vpack.c.bf16 %v2500, %v2492
        %v3229 = vpack.c.bf16 %v2501, %v2493
        %v3230 = vpack.c.bf16 %v2510, %v2502
        %v3231 = vpack.c.bf16 %v2511, %v2503
        %v3232 = vpack.c.bf16 %v2512, %v2504
        %v3233 = vpack.c.bf16 %v2513, %v2505
        %v3234 = vpack.c.bf16 %v2514, %v2506
        %v3235 = vpack.c.bf16 %v2515, %v2507
        %v3236 = vpack.c.bf16 %v2516, %v2508
        %v3237 = vpack.c.bf16 %v2517, %v2509
        %v3238 = vpack.c.bf16 %v2526, %v2518
        %v3239 = vpack.c.bf16 %v2527, %v2519
        %v3240 = vpack.c.bf16 %v2528, %v2520
        %v3241 = vpack.c.bf16 %v2529, %v2521
        %v3242 = vpack.c.bf16 %v2530, %v2522
        %v3243 = vpack.c.bf16 %v2531, %v2523
        %v3244 = vpack.c.bf16 %v2532, %v2524
        %v3245 = vpack.c.bf16 %v2533, %v2525
        %v3246 = vpack.c.bf16 %v2542, %v2534
        %v3247 = vpack.c.bf16 %v2543, %v2535
        %v3248 = vpack.c.bf16 %v2544, %v2536
        %v3249 = vpack.c.bf16 %v2545, %v2537
        %v3250 = vpack.c.bf16 %v2546, %v2538
        %v3251 = vpack.c.bf16 %v2547, %v2539
        %v3252 = vpack.c.bf16 %v2548, %v2540
        %v3253 = vpack.c.bf16 %v2549, %v2541
        %v3254 = vpack.c.bf16 %v2558, %v2550
        %v3255 = vpack.c.bf16 %v2559, %v2551
        %v3256 = vpack.c.bf16 %v2560, %v2552
        %v3257 = vpack.c.bf16 %v2561, %v2553
        %v3258 = vpack.c.bf16 %v2562, %v2554
        %v3259 = vpack.c.bf16 %v2563, %v2555
        %v3260 = vpack.c.bf16 %v2564, %v2556
        %v3261 = vpack.c.bf16 %v2565, %v2557
        %v3262 = vpack.c.bf16 %v2574, %v2566
        %v3263 = vpack.c.bf16 %v2575, %v2567
        %v3264 = vpack.c.bf16 %v2576, %v2568
        %v3265 = vpack.c.bf16 %v2577, %v2569
        %v3266 = vpack.c.bf16 %v2578, %v2570
        %v3267 = vpack.c.bf16 %v2579, %v2571
        %v3268 = vpack.c.bf16 %v2580, %v2572
        %v3269 = vpack.c.bf16 %v2581, %v2573
        %v3270 = vpack.c.bf16 %v2590, %v2582
        %v3271 = vpack.c.bf16 %v2591, %v2583
        %v3272 = vpack.c.bf16 %v2592, %v2584
        %v3273 = vpack.c.bf16 %v2593, %v2585
        %v3274 = vpack.c.bf16 %v2594, %v2586
        %v3275 = vpack.c.bf16 %v2595, %v2587
        %v3276 = vpack.c.bf16 %v2596, %v2588
        %v3277 = vpack.c.bf16 %v2597, %v2589
        %v3278 = vpack.c.bf16 %v2606, %v2598
        %v3279 = vpack.c.bf16 %v2607, %v2599
        %v3280 = vpack.c.bf16 %v2608, %v2600
        %v3281 = vpack.c.bf16 %v2609, %v2601
        %v3282 = vpack.c.bf16 %v2610, %v2602
        %v3283 = vpack.c.bf16 %v2611, %v2603
        %v3284 = vpack.c.bf16 %v2612, %v2604
        %v3285 = vpack.c.bf16 %v2613, %v2605
        %v3286 = vpack.c.bf16 %v2622, %v2614
        %v3287 = vpack.c.bf16 %v2623, %v2615
        %v3288 = vpack.c.bf16 %v2624, %v2616
        %v3289 = vpack.c.bf16 %v2625, %v2617
        %v3290 = vpack.c.bf16 %v2626, %v2618
        %v3291 = vpack.c.bf16 %v2627, %v2619
        %v3292 = vpack.c.bf16 %v2628, %v2620
        %v3293 = vpack.c.bf16 %v2629, %v2621
        %v3294 = vpack.c.bf16 %v2638, %v2630
        %v3295 = vpack.c.bf16 %v2639, %v2631
        %v3296 = vpack.c.bf16 %v2640, %v2632
        %v3297 = vpack.c.bf16 %v2641, %v2633
        %v3298 = vpack.c.bf16 %v2642, %v2634
        %v3299 = vpack.c.bf16 %v2643, %v2635
        %v3300 = vpack.c.bf16 %v2644, %v2636
        %v3301 = vpack.c.bf16 %v2645, %v2637
        %v3302 = vpack.c.bf16 %v2654, %v2646
        %v3303 = vpack.c.bf16 %v2655, %v2647
        %v3304 = vpack.c.bf16 %v2656, %v2648
        %v3305 = vpack.c.bf16 %v2657, %v2649
        %v3306 = vpack.c.bf16 %v2658, %v2650
        %v3307 = vpack.c.bf16 %v2659, %v2651
        %v3308 = vpack.c.bf16 %v2660, %v2652
        %v3309 = vpack.c.bf16 %v2661, %v2653
        %v3310 = vpack.c.bf16 %v2670, %v2662
        %v3311 = vpack.c.bf16 %v2671, %v2663
        %v3312 = vpack.c.bf16 %v2672, %v2664
        %v3313 = vpack.c.bf16 %v2673, %v2665
        %v3314 = vpack.c.bf16 %v2674, %v2666
        %v3315 = vpack.c.bf16 %v2675, %v2667
        %v3316 = vpack.c.bf16 %v2676, %v2668
        %v3317 = vpack.c.bf16 %v2677, %v2669
        %v3318 = vpack.c.bf16 %v2686, %v2678
        %v3319 = vpack.c.bf16 %v2687, %v2679
        %v3320 = vpack.c.bf16 %v2688, %v2680
        %v3321 = vpack.c.bf16 %v2689, %v2681
        %v3322 = vpack.c.bf16 %v2690, %v2682
        %v3323 = vpack.c.bf16 %v2691, %v2683
        %v3324 = vpack.c.bf16 %v2692, %v2684
        %v3325 = vpack.c.bf16 %v2693, %v2685
        %v3326 = vpack.c.bf16 %v2702, %v2694
        %v3327 = vpack.c.bf16 %v2703, %v2695
        %v3328 = vpack.c.bf16 %v2704, %v2696
        %v3329 = vpack.c.bf16 %v2705, %v2697
        %v3330 = vpack.c.bf16 %v2706, %v2698
        %v3331 = vpack.c.bf16 %v2707, %v2699
        %v3332 = vpack.c.bf16 %v2708, %v2700
        %v3333 = vpack.c.bf16 %v2709, %v2701
        %v3334 = vpack.c.bf16 %v2718, %v2710
        %v3335 = vpack.c.bf16 %v2719, %v2711
        %v3336 = vpack.c.bf16 %v2720, %v2712
        %v3337 = vpack.c.bf16 %v2721, %v2713
        %v3338 = vpack.c.bf16 %v2722, %v2714
        %v3339 = vpack.c.bf16 %v2723, %v2715
        %v3340 = vpack.c.bf16 %v2724, %v2716
        %v3341 = vpack.c.bf16 %v2725, %v2717
        %v3342 = vpack.c.bf16 %v2734, %v2726
        %v3343 = vpack.c.bf16 %v2735, %v2727
        %v3344 = vpack.c.bf16 %v2736, %v2728
        %v3345 = vpack.c.bf16 %v2737, %v2729
        %v3346 = vpack.c.bf16 %v2738, %v2730
        %v3347 = vpack.c.bf16 %v2739, %v2731
        %v3348 = vpack.c.bf16 %v2740, %v2732
        %v3349 = vpack.c.bf16 %v2741, %v2733
        %v3350 = vpack.c.bf16 %v2750, %v2742
        %v3351 = vpack.c.bf16 %v2751, %v2743
        %v3352 = vpack.c.bf16 %v2752, %v2744
        %v3353 = vpack.c.bf16 %v2753, %v2745
        %v3354 = vpack.c.bf16 %v2754, %v2746
        %v3355 = vpack.c.bf16 %v2755, %v2747
        %v3356 = vpack.c.bf16 %v2756, %v2748
        %v3357 = vpack.c.bf16 %v2757, %v2749
        %v3358 = vpack.c.bf16 %v2766, %v2758
        %v3359 = vpack.c.bf16 %v2767, %v2759
        %v3360 = vpack.c.bf16 %v2768, %v2760
        %v3361 = vpack.c.bf16 %v2769, %v2761
        %v3362 = vpack.c.bf16 %v2770, %v2762
        %v3363 = vpack.c.bf16 %v2771, %v2763
        %v3364 = vpack.c.bf16 %v2772, %v2764
        %v3365 = vpack.c.bf16 %v2773, %v2765
        %v3366 = vpack.c.bf16 %v2782, %v2774
        %v3367 = vpack.c.bf16 %v2783, %v2775
        %v3368 = vpack.c.bf16 %v2784, %v2776
        %v3369 = vpack.c.bf16 %v2785, %v2777
        %v3370 = vpack.c.bf16 %v2786, %v2778
        %v3371 = vpack.c.bf16 %v2787, %v2779
        %v3372 = vpack.c.bf16 %v2788, %v2780
        %v3373 = vpack.c.bf16 %v2789, %v2781
        %v3374 = vpack.c.bf16 %v2798, %v2790
        %v3375 = vpack.c.bf16 %v2799, %v2791
        %v3376 = vpack.c.bf16 %v2800, %v2792
        %v3377 = vpack.c.bf16 %v2801, %v2793
        %v3378 = vpack.c.bf16 %v2802, %v2794
        %v3379 = vpack.c.bf16 %v2803, %v2795
        %v3380 = vpack.c.bf16 %v2804, %v2796
        %v3381 = vpack.c.bf16 %v2805, %v2797
        %v3382 = vpack.c.bf16 %v2814, %v2806
        %v3383 = vpack.c.bf16 %v2815, %v2807
        %v3384 = vpack.c.bf16 %v2816, %v2808
        %v3385 = vpack.c.bf16 %v2817, %v2809
        %v3386 = vpack.c.bf16 %v2818, %v2810
        %v3387 = vpack.c.bf16 %v2819, %v2811
        %v3388 = vpack.c.bf16 %v2820, %v2812
        %v3389 = vpack.c.bf16 %v2821, %v2813
        %v3390 = vpack.c.bf16 %v2830, %v2822
        %v3391 = vpack.c.bf16 %v2831, %v2823
        %v3392 = vpack.c.bf16 %v2832, %v2824
        %v3393 = vpack.c.bf16 %v2833, %v2825
        %v3394 = vpack.c.bf16 %v2834, %v2826
        %v3395 = vpack.c.bf16 %v2835, %v2827
        %v3396 = vpack.c.bf16 %v2836, %v2828
        %v3397 = vpack.c.bf16 %v2837, %v2829
        %v3398 = vpack.c.bf16 %v2846, %v2838
        %v3399 = vpack.c.bf16 %v2847, %v2839
        %v3400 = vpack.c.bf16 %v2848, %v2840
        %v3401 = vpack.c.bf16 %v2849, %v2841
        %v3402 = vpack.c.bf16 %v2850, %v2842
        %v3403 = vpack.c.bf16 %v2851, %v2843
        %v3404 = vpack.c.bf16 %v2852, %v2844
        %v3405 = vpack.c.bf16 %v2853, %v2845
        %v3406 = vpack.c.bf16 %v2862, %v2854
        %v3407 = vpack.c.bf16 %v2863, %v2855
        %v3408 = vpack.c.bf16 %v2864, %v2856
        %v3409 = vpack.c.bf16 %v2865, %v2857
        %v3410 = vpack.c.bf16 %v2866, %v2858
        %v3411 = vpack.c.bf16 %v2867, %v2859
        %v3412 = vpack.c.bf16 %v2868, %v2860
        %v3413 = vpack.c.bf16 %v2869, %v2861
        %v3414 = vpack.c.bf16 %v2878, %v2870
        %v3415 = vpack.c.bf16 %v2879, %v2871
        %v3416 = vpack.c.bf16 %v2880, %v2872
        %v3417 = vpack.c.bf16 %v2881, %v2873
        %v3418 = vpack.c.bf16 %v2882, %v2874
        %v3419 = vpack.c.bf16 %v2883, %v2875
        %v3420 = vpack.c.bf16 %v2884, %v2876
        %v3421 = vpack.c.bf16 %v2885, %v2877
        %v3422 = vpack.c.bf16 %v2894, %v2886
        %v3423 = vpack.c.bf16 %v2895, %v2887
        %v3424 = vpack.c.bf16 %v2896, %v2888
        %v3425 = vpack.c.bf16 %v2897, %v2889
        %v3426 = vpack.c.bf16 %v2898, %v2890
        %v3427 = vpack.c.bf16 %v2899, %v2891
        %v3428 = vpack.c.bf16 %v2900, %v2892
        %v3429 = vpack.c.bf16 %v2901, %v2893
        %v3430 = vpack.c.bf16 %v2910, %v2902
        %v3431 = vpack.c.bf16 %v2911, %v2903
        %v3432 = vpack.c.bf16 %v2912, %v2904
        %v3433 = vpack.c.bf16 %v2913, %v2905
        %v3434 = vpack.c.bf16 %v2914, %v2906
        %v3435 = vpack.c.bf16 %v2915, %v2907
        %v3436 = vpack.c.bf16 %v2916, %v2908
        %v3437 = vpack.c.bf16 %v2917, %v2909
        %v3438 = vpack.c.bf16 %v2926, %v2918
        %v3439 = vpack.c.bf16 %v2927, %v2919
        %v3440 = vpack.c.bf16 %v2928, %v2920
        %v3441 = vpack.c.bf16 %v2929, %v2921
        %v3442 = vpack.c.bf16 %v2930, %v2922
        %v3443 = vpack.c.bf16 %v2931, %v2923
        %v3444 = vpack.c.bf16 %v2932, %v2924
        %v3445 = vpack.c.bf16 %v2933, %v2925
        %v3446 = vld [vmem:[#allocation2] sm:$0xff]
        %v3447 = vld [vmem:[#allocation2 + $0x8] sm:$0xff]
        %v3448 = vld [vmem:[#allocation2 + $0x10] sm:$0xff]
        %v3449 = vld [vmem:[#allocation2 + $0x18] sm:$0xff]
        %v3450 = vld [vmem:[#allocation2 + $0x20] sm:$0xff]
        %v3451 = vld [vmem:[#allocation2 + $0x28] sm:$0xff]
        %v3452 = vld [vmem:[#allocation2 + $0x30] sm:$0xff]
        %v3453 = vld [vmem:[#allocation2 + $0x38] sm:$0xff]
        %v3454 = vld [vmem:[%s514] sm:$0xff]
        %v3455 = vld [vmem:[%s514 + $0x8] sm:$0xff]
        %v3456 = vld [vmem:[%s514 + $0x10] sm:$0xff]
        %v3457 = vld [vmem:[%s514 + $0x18] sm:$0xff]
        %v3462 = vunpack.c.l.b16 %v3454
        %v3463 = vunpack.c.h.b16 %v3454
        %v3464 = vunpack.c.l.b16 %v3455
        %v3465 = vunpack.c.h.b16 %v3455
        %v3466 = vunpack.c.l.b16 %v3456
        %v3467 = vunpack.c.h.b16 %v3456
        %v3468 = vunpack.c.l.b16 %v3457
        %v3469 = vunpack.c.h.b16 %v3457
        %v3470 = vpack.c.b16 %v3462, %v3462
        %v3471 = vpack.c.b16 %v3463, %v3463
        %v3472 = vpack.c.b16 %v3464, %v3464
        %v3473 = vpack.c.b16 %v3465, %v3465
        %v3474 = vpack.c.b16 %v3466, %v3466
        %v3475 = vpack.c.b16 %v3467, %v3467
        %v3476 = vpack.c.b16 %v3468, %v3468
        %v3477 = vpack.c.b16 %v3469, %v3469
        %3486 = vmatpush.bf16.msra.mxu0 %v2990
        %3487 = vmatpush.bf16.msra.mxu0 %v2982
        %3488 = vmatpush.bf16.msra.mxu0 %v2974
        %3489 = vmatpush.bf16.msra.mxu0 %v2966
        %3490 = vmatpush.bf16.msra.mxu0 %v2958
        %3491 = vmatpush.bf16.msra.mxu0 %v2950
        %3492 = vmatpush.bf16.msra.mxu0 %v2942
        %3493 = vmatpush.bf16.msra.mxu0 %v2934
        %3494 = vmatmul.bf16.gmra.mxu0 %v3470
        %v3495 = vpop.f32.mrf.mxu0
        %v3496 = vadd.f32 0.0, %v3495
        %v3497 = vpop.f32.mrf.mxu0
        %3498 = vdwg.mxu0
        %3499 = vmatpush.bf16.msra.mxu0 %v3054
        %3500 = vmatpush.bf16.msra.mxu0 %v3046
        %3501 = vmatpush.bf16.msra.mxu0 %v3038
        %3502 = vmatpush.bf16.msra.mxu0 %v3030
        %3503 = vmatpush.bf16.msra.mxu0 %v3022
        %3504 = vmatpush.bf16.msra.mxu0 %v3014
        %3505 = vmatpush.bf16.msra.mxu0 %v3006
        %3506 = vmatpush.bf16.msra.mxu0 %v2998
        %3507 = vmatmul.bf16.gmra.mxu0 %v3471
        %v3508 = vpop.f32.mrf.mxu0
        %v3509 = vadd.f32 %v3496, %v3508
        %v3510 = vpop.f32.mrf.mxu0
        %3511 = vdwg.mxu0
        %3512 = vmatpush.bf16.msra.mxu0 %v3118
        %3513 = vmatpush.bf16.msra.mxu0 %v3110
        %3514 = vmatpush.bf16.msra.mxu0 %v3102
        %3515 = vmatpush.bf16.msra.mxu0 %v3094
        %3516 = vmatpush.bf16.msra.mxu0 %v3086
        %3517 = vmatpush.bf16.msra.mxu0 %v3078
        %3518 = vmatpush.bf16.msra.mxu0 %v3070
        %3519 = vmatpush.bf16.msra.mxu0 %v3062
        %3520 = vmatmul.bf16.gmra.mxu0 %v3472
        %v3521 = vpop.f32.mrf.mxu0
        %v3522 = vadd.f32 %v3509, %v3521
        %v3523 = vpop.f32.mrf.mxu0
        %3524 = vdwg.mxu0
        %3525 = vmatpush.bf16.msra.mxu0 %v3182
        %3526 = vmatpush.bf16.msra.mxu0 %v3174
        %3527 = vmatpush.bf16.msra.mxu0 %v3166
        %3528 = vmatpush.bf16.msra.mxu0 %v3158
        %3529 = vmatpush.bf16.msra.mxu0 %v3150
        %3530 = vmatpush.bf16.msra.mxu0 %v3142
        %3531 = vmatpush.bf16.msra.mxu0 %v3134
        %3532 = vmatpush.bf16.msra.mxu0 %v3126
        %3533 = vmatmul.bf16.gmra.mxu0 %v3473
        %v3534 = vpop.f32.mrf.mxu0
        %v3535 = vadd.f32 %v3522, %v3534
        %v3536 = vpop.f32.mrf.mxu0
        %3537 = vdwg.mxu0
        %3538 = vmatpush.bf16.msra.mxu0 %v3246
        %3539 = vmatpush.bf16.msra.mxu0 %v3238
        %3540 = vmatpush.bf16.msra.mxu0 %v3230
        %3541 = vmatpush.bf16.msra.mxu0 %v3222
        %3542 = vmatpush.bf16.msra.mxu0 %v3214
        %3543 = vmatpush.bf16.msra.mxu0 %v3206
        %3544 = vmatpush.bf16.msra.mxu0 %v3198
        %3545 = vmatpush.bf16.msra.mxu0 %v3190
        %3546 = vmatmul.bf16.gmra.mxu0 %v3474
        %v3547 = vpop.f32.mrf.mxu0
        %v3548 = vadd.f32 %v3535, %v3547
        %v3549 = vpop.f32.mrf.mxu0
        %3550 = vdwg.mxu0
        %3551 = vmatpush.bf16.msra.mxu0 %v3310
        %3552 = vmatpush.bf16.msra.mxu0 %v3302
        %3553 = vmatpush.bf16.msra.mxu0 %v3294
        %3554 = vmatpush.bf16.msra.mxu0 %v3286
        %3555 = vmatpush.bf16.msra.mxu0 %v3278
        %3556 = vmatpush.bf16.msra.mxu0 %v3270
        %3557 = vmatpush.bf16.msra.mxu0 %v3262
        %3558 = vmatpush.bf16.msra.mxu0 %v3254
        %3559 = vmatmul.bf16.gmra.mxu0 %v3475
        %v3560 = vpop.f32.mrf.mxu0
        %v3561 = vadd.f32 %v3548, %v3560
        %v3562 = vpop.f32.mrf.mxu0
        %3563 = vdwg.mxu0
        %3564 = vmatpush.bf16.msra.mxu0 %v3374
        %3565 = vmatpush.bf16.msra.mxu0 %v3366
        %3566 = vmatpush.bf16.msra.mxu0 %v3358
        %3567 = vmatpush.bf16.msra.mxu0 %v3350
        %3568 = vmatpush.bf16.msra.mxu0 %v3342
        %3569 = vmatpush.bf16.msra.mxu0 %v3334
        %3570 = vmatpush.bf16.msra.mxu0 %v3326
        %3571 = vmatpush.bf16.msra.mxu0 %v3318
        %3572 = vmatmul.bf16.gmra.mxu0 %v3476
        %v3573 = vpop.f32.mrf.mxu0
        %v3574 = vadd.f32 %v3561, %v3573
        %v3575 = vpop.f32.mrf.mxu0
        %3576 = vdwg.mxu0
        %3577 = vmatpush.bf16.msra.mxu0 %v3438
        %3578 = vmatpush.bf16.msra.mxu0 %v3430
        %3579 = vmatpush.bf16.msra.mxu0 %v3422
        %3580 = vmatpush.bf16.msra.mxu0 %v3414
        %3581 = vmatpush.bf16.msra.mxu0 %v3406
        %3582 = vmatpush.bf16.msra.mxu0 %v3398
        %3583 = vmatpush.bf16.msra.mxu0 %v3390
        %3584 = vmatpush.bf16.msra.mxu0 %v3382
        %3585 = vmatmul.bf16.gmra.mxu0 %v3477
        %v3586 = vpop.f32.mrf.mxu0
        %v3587 = vadd.f32 %v3574, %v3586
        %v3588 = vpop.f32.mrf.mxu0
        %3589 = vdwg.mxu0
        %3590 = vmatpush.bf16.msra.mxu0 %v2991
        %3591 = vmatpush.bf16.msra.mxu0 %v2983
        %3592 = vmatpush.bf16.msra.mxu0 %v2975
        %3593 = vmatpush.bf16.msra.mxu0 %v2967
        %3594 = vmatpush.bf16.msra.mxu0 %v2959
        %3595 = vmatpush.bf16.msra.mxu0 %v2951
        %3596 = vmatpush.bf16.msra.mxu0 %v2943
        %3597 = vmatpush.bf16.msra.mxu0 %v2935
        %3598 = vmatmul.bf16.gmra.mxu0 %v3470
        %v3599 = vpop.f32.mrf.mxu0
        %v3600 = vadd.f32 0.0, %v3599
        %v3601 = vpop.f32.mrf.mxu0
        %3602 = vdwg.mxu0
        %3603 = vmatpush.bf16.msra.mxu0 %v3055
        %3604 = vmatpush.bf16.msra.mxu0 %v3047
        %3605 = vmatpush.bf16.msra.mxu0 %v3039
        %3606 = vmatpush.bf16.msra.mxu0 %v3031
        %3607 = vmatpush.bf16.msra.mxu0 %v3023
        %3608 = vmatpush.bf16.msra.mxu0 %v3015
        %3609 = vmatpush.bf16.msra.mxu0 %v3007
        %3610 = vmatpush.bf16.msra.mxu0 %v2999
        %3611 = vmatmul.bf16.gmra.mxu0 %v3471
        %v3612 = vpop.f32.mrf.mxu0
        %v3613 = vadd.f32 %v3600, %v3612
        %v3614 = vpop.f32.mrf.mxu0
        %3615 = vdwg.mxu0
        %3616 = vmatpush.bf16.msra.mxu0 %v3119
        %3617 = vmatpush.bf16.msra.mxu0 %v3111
        %3618 = vmatpush.bf16.msra.mxu0 %v3103
        %3619 = vmatpush.bf16.msra.mxu0 %v3095
        %3620 = vmatpush.bf16.msra.mxu0 %v3087
        %3621 = vmatpush.bf16.msra.mxu0 %v3079
        %3622 = vmatpush.bf16.msra.mxu0 %v3071
        %3623 = vmatpush.bf16.msra.mxu0 %v3063
        %3624 = vmatmul.bf16.gmra.mxu0 %v3472
        %v3625 = vpop.f32.mrf.mxu0
        %v3626 = vadd.f32 %v3613, %v3625
        %v3627 = vpop.f32.mrf.mxu0
        %3628 = vdwg.mxu0
        %3629 = vmatpush.bf16.msra.mxu0 %v3183
        %3630 = vmatpush.bf16.msra.mxu0 %v3175
        %3631 = vmatpush.bf16.msra.mxu0 %v3167
        %3632 = vmatpush.bf16.msra.mxu0 %v3159
        %3633 = vmatpush.bf16.msra.mxu0 %v3151
        %3634 = vmatpush.bf16.msra.mxu0 %v3143
        %3635 = vmatpush.bf16.msra.mxu0 %v3135
        %3636 = vmatpush.bf16.msra.mxu0 %v3127
        %3637 = vmatmul.bf16.gmra.mxu0 %v3473
        %v3638 = vpop.f32.mrf.mxu0
        %v3639 = vadd.f32 %v3626, %v3638
        %v3640 = vpop.f32.mrf.mxu0
        %3641 = vdwg.mxu0
        %3642 = vmatpush.bf16.msra.mxu0 %v3247
        %3643 = vmatpush.bf16.msra.mxu0 %v3239
        %3644 = vmatpush.bf16.msra.mxu0 %v3231
        %3645 = vmatpush.bf16.msra.mxu0 %v3223
        %3646 = vmatpush.bf16.msra.mxu0 %v3215
        %3647 = vmatpush.bf16.msra.mxu0 %v3207
        %3648 = vmatpush.bf16.msra.mxu0 %v3199
        %3649 = vmatpush.bf16.msra.mxu0 %v3191
        %3650 = vmatmul.bf16.gmra.mxu0 %v3474
        %v3651 = vpop.f32.mrf.mxu0
        %v3652 = vadd.f32 %v3639, %v3651
        %v3653 = vpop.f32.mrf.mxu0
        %3654 = vdwg.mxu0
        %3655 = vmatpush.bf16.msra.mxu0 %v3311
        %3656 = vmatpush.bf16.msra.mxu0 %v3303
        %3657 = vmatpush.bf16.msra.mxu0 %v3295
        %3658 = vmatpush.bf16.msra.mxu0 %v3287
        %3659 = vmatpush.bf16.msra.mxu0 %v3279
        %3660 = vmatpush.bf16.msra.mxu0 %v3271
        %3661 = vmatpush.bf16.msra.mxu0 %v3263
        %3662 = vmatpush.bf16.msra.mxu0 %v3255
        %3663 = vmatmul.bf16.gmra.mxu0 %v3475
        %v3664 = vpop.f32.mrf.mxu0
        %v3665 = vadd.f32 %v3652, %v3664
        %v3666 = vpop.f32.mrf.mxu0
        %3667 = vdwg.mxu0
        %3668 = vmatpush.bf16.msra.mxu0 %v3375
        %3669 = vmatpush.bf16.msra.mxu0 %v3367
        %3670 = vmatpush.bf16.msra.mxu0 %v3359
        %3671 = vmatpush.bf16.msra.mxu0 %v3351
        %3672 = vmatpush.bf16.msra.mxu0 %v3343
        %3673 = vmatpush.bf16.msra.mxu0 %v3335
        %3674 = vmatpush.bf16.msra.mxu0 %v3327
        %3675 = vmatpush.bf16.msra.mxu0 %v3319
        %3676 = vmatmul.bf16.gmra.mxu0 %v3476
        %v3677 = vpop.f32.mrf.mxu0
        %v3678 = vadd.f32 %v3665, %v3677
        %v3679 = vpop.f32.mrf.mxu0
        %3680 = vdwg.mxu0
        %3681 = vmatpush.bf16.msra.mxu0 %v3439
        %3682 = vmatpush.bf16.msra.mxu0 %v3431
        %3683 = vmatpush.bf16.msra.mxu0 %v3423
        %3684 = vmatpush.bf16.msra.mxu0 %v3415
        %3685 = vmatpush.bf16.msra.mxu0 %v3407
        %3686 = vmatpush.bf16.msra.mxu0 %v3399
        %3687 = vmatpush.bf16.msra.mxu0 %v3391
        %3688 = vmatpush.bf16.msra.mxu0 %v3383
        %3689 = vmatmul.bf16.gmra.mxu0 %v3477
        %v3690 = vpop.f32.mrf.mxu0
        %v3691 = vadd.f32 %v3678, %v3690
        %v3692 = vpop.f32.mrf.mxu0
        %3693 = vdwg.mxu0
        %3694 = vmatpush.bf16.msra.mxu0 %v2992
        %3695 = vmatpush.bf16.msra.mxu0 %v2984
        %3696 = vmatpush.bf16.msra.mxu0 %v2976
        %3697 = vmatpush.bf16.msra.mxu0 %v2968
        %3698 = vmatpush.bf16.msra.mxu0 %v2960
        %3699 = vmatpush.bf16.msra.mxu0 %v2952
        %3700 = vmatpush.bf16.msra.mxu0 %v2944
        %3701 = vmatpush.bf16.msra.mxu0 %v2936
        %3702 = vmatmul.bf16.gmra.mxu0 %v3470
        %v3703 = vpop.f32.mrf.mxu0
        %v3704 = vadd.f32 0.0, %v3703
        %v3705 = vpop.f32.mrf.mxu0
        %3706 = vdwg.mxu0
        %3707 = vmatpush.bf16.msra.mxu0 %v3056
        %3708 = vmatpush.bf16.msra.mxu0 %v3048
        %3709 = vmatpush.bf16.msra.mxu0 %v3040
        %3710 = vmatpush.bf16.msra.mxu0 %v3032
        %3711 = vmatpush.bf16.msra.mxu0 %v3024
        %3712 = vmatpush.bf16.msra.mxu0 %v3016
        %3713 = vmatpush.bf16.msra.mxu0 %v3008
        %3714 = vmatpush.bf16.msra.mxu0 %v3000
        %3715 = vmatmul.bf16.gmra.mxu0 %v3471
        %v3716 = vpop.f32.mrf.mxu0
        %v3717 = vadd.f32 %v3704, %v3716
        %v3718 = vpop.f32.mrf.mxu0
        %3719 = vdwg.mxu0
        %3720 = vmatpush.bf16.msra.mxu0 %v3120
        %3721 = vmatpush.bf16.msra.mxu0 %v3112
        %3722 = vmatpush.bf16.msra.mxu0 %v3104
        %3723 = vmatpush.bf16.msra.mxu0 %v3096
        %3724 = vmatpush.bf16.msra.mxu0 %v3088
        %3725 = vmatpush.bf16.msra.mxu0 %v3080
        %3726 = vmatpush.bf16.msra.mxu0 %v3072
        %3727 = vmatpush.bf16.msra.mxu0 %v3064
        %3728 = vmatmul.bf16.gmra.mxu0 %v3472
        %v3729 = vpop.f32.mrf.mxu0
        %v3730 = vadd.f32 %v3717, %v3729
        %v3731 = vpop.f32.mrf.mxu0
        %3732 = vdwg.mxu0
        %3733 = vmatpush.bf16.msra.mxu0 %v3184
        %3734 = vmatpush.bf16.msra.mxu0 %v3176
        %3735 = vmatpush.bf16.msra.mxu0 %v3168
        %3736 = vmatpush.bf16.msra.mxu0 %v3160
        %3737 = vmatpush.bf16.msra.mxu0 %v3152
        %3738 = vmatpush.bf16.msra.mxu0 %v3144
        %3739 = vmatpush.bf16.msra.mxu0 %v3136
        %3740 = vmatpush.bf16.msra.mxu0 %v3128
        %3741 = vmatmul.bf16.gmra.mxu0 %v3473
        %v3742 = vpop.f32.mrf.mxu0
        %v3743 = vadd.f32 %v3730, %v3742
        %v3744 = vpop.f32.mrf.mxu0
        %3745 = vdwg.mxu0
        %3746 = vmatpush.bf16.msra.mxu0 %v3248
        %3747 = vmatpush.bf16.msra.mxu0 %v3240
        %3748 = vmatpush.bf16.msra.mxu0 %v3232
        %3749 = vmatpush.bf16.msra.mxu0 %v3224
        %3750 = vmatpush.bf16.msra.mxu0 %v3216
        %3751 = vmatpush.bf16.msra.mxu0 %v3208
        %3752 = vmatpush.bf16.msra.mxu0 %v3200
        %3753 = vmatpush.bf16.msra.mxu0 %v3192
        %3754 = vmatmul.bf16.gmra.mxu0 %v3474
        %v3755 = vpop.f32.mrf.mxu0
        %v3756 = vadd.f32 %v3743, %v3755
        %v3757 = vpop.f32.mrf.mxu0
        %3758 = vdwg.mxu0
        %3759 = vmatpush.bf16.msra.mxu0 %v3312
        %3760 = vmatpush.bf16.msra.mxu0 %v3304
        %3761 = vmatpush.bf16.msra.mxu0 %v3296
        %3762 = vmatpush.bf16.msra.mxu0 %v3288
        %3763 = vmatpush.bf16.msra.mxu0 %v3280
        %3764 = vmatpush.bf16.msra.mxu0 %v3272
        %3765 = vmatpush.bf16.msra.mxu0 %v3264
        %3766 = vmatpush.bf16.msra.mxu0 %v3256
        %3767 = vmatmul.bf16.gmra.mxu0 %v3475
        %v3768 = vpop.f32.mrf.mxu0
        %v3769 = vadd.f32 %v3756, %v3768
        %v3770 = vpop.f32.mrf.mxu0
        %3771 = vdwg.mxu0
        %3772 = vmatpush.bf16.msra.mxu0 %v3376
        %3773 = vmatpush.bf16.msra.mxu0 %v3368
        %3774 = vmatpush.bf16.msra.mxu0 %v3360
        %3775 = vmatpush.bf16.msra.mxu0 %v3352
        %3776 = vmatpush.bf16.msra.mxu0 %v3344
        %3777 = vmatpush.bf16.msra.mxu0 %v3336
        %3778 = vmatpush.bf16.msra.mxu0 %v3328
        %3779 = vmatpush.bf16.msra.mxu0 %v3320
        %3780 = vmatmul.bf16.gmra.mxu0 %v3476
        %v3781 = vpop.f32.mrf.mxu0
        %v3782 = vadd.f32 %v3769, %v3781
        %v3783 = vpop.f32.mrf.mxu0
        %3784 = vdwg.mxu0
        %3785 = vmatpush.bf16.msra.mxu0 %v3440
        %3786 = vmatpush.bf16.msra.mxu0 %v3432
        %3787 = vmatpush.bf16.msra.mxu0 %v3424
        %3788 = vmatpush.bf16.msra.mxu0 %v3416
        %3789 = vmatpush.bf16.msra.mxu0 %v3408
        %3790 = vmatpush.bf16.msra.mxu0 %v3400
        %3791 = vmatpush.bf16.msra.mxu0 %v3392
        %3792 = vmatpush.bf16.msra.mxu0 %v3384
        %3793 = vmatmul.bf16.gmra.mxu0 %v3477
        %v3794 = vpop.f32.mrf.mxu0
        %v3795 = vadd.f32 %v3782, %v3794
        %v3796 = vpop.f32.mrf.mxu0
        %3797 = vdwg.mxu0
        %3798 = vmatpush.bf16.msra.mxu0 %v2993
        %3799 = vmatpush.bf16.msra.mxu0 %v2985
        %3800 = vmatpush.bf16.msra.mxu0 %v2977
        %3801 = vmatpush.bf16.msra.mxu0 %v2969
        %3802 = vmatpush.bf16.msra.mxu0 %v2961
        %3803 = vmatpush.bf16.msra.mxu0 %v2953
        %3804 = vmatpush.bf16.msra.mxu0 %v2945
        %3805 = vmatpush.bf16.msra.mxu0 %v2937
        %3806 = vmatmul.bf16.gmra.mxu0 %v3470
        %v3807 = vpop.f32.mrf.mxu0
        %v3808 = vadd.f32 0.0, %v3807
        %v3809 = vpop.f32.mrf.mxu0
        %3810 = vdwg.mxu0
        %3811 = vmatpush.bf16.msra.mxu0 %v3057
        %3812 = vmatpush.bf16.msra.mxu0 %v3049
        %3813 = vmatpush.bf16.msra.mxu0 %v3041
        %3814 = vmatpush.bf16.msra.mxu0 %v3033
        %3815 = vmatpush.bf16.msra.mxu0 %v3025
        %3816 = vmatpush.bf16.msra.mxu0 %v3017
        %3817 = vmatpush.bf16.msra.mxu0 %v3009
        %3818 = vmatpush.bf16.msra.mxu0 %v3001
        %3819 = vmatmul.bf16.gmra.mxu0 %v3471
        %v3820 = vpop.f32.mrf.mxu0
        %v3821 = vadd.f32 %v3808, %v3820
        %v3822 = vpop.f32.mrf.mxu0
        %3823 = vdwg.mxu0
        %3824 = vmatpush.bf16.msra.mxu0 %v3121
        %3825 = vmatpush.bf16.msra.mxu0 %v3113
        %3826 = vmatpush.bf16.msra.mxu0 %v3105
        %3827 = vmatpush.bf16.msra.mxu0 %v3097
        %3828 = vmatpush.bf16.msra.mxu0 %v3089
        %3829 = vmatpush.bf16.msra.mxu0 %v3081
        %3830 = vmatpush.bf16.msra.mxu0 %v3073
        %3831 = vmatpush.bf16.msra.mxu0 %v3065
        %3832 = vmatmul.bf16.gmra.mxu0 %v3472
        %v3833 = vpop.f32.mrf.mxu0
        %v3834 = vadd.f32 %v3821, %v3833
        %v3835 = vpop.f32.mrf.mxu0
        %3836 = vdwg.mxu0
        %3837 = vmatpush.bf16.msra.mxu0 %v3185
        %3838 = vmatpush.bf16.msra.mxu0 %v3177
        %3839 = vmatpush.bf16.msra.mxu0 %v3169
        %3840 = vmatpush.bf16.msra.mxu0 %v3161
        %3841 = vmatpush.bf16.msra.mxu0 %v3153
        %3842 = vmatpush.bf16.msra.mxu0 %v3145
        %3843 = vmatpush.bf16.msra.mxu0 %v3137
        %3844 = vmatpush.bf16.msra.mxu0 %v3129
        %3845 = vmatmul.bf16.gmra.mxu0 %v3473
        %v3846 = vpop.f32.mrf.mxu0
        %v3847 = vadd.f32 %v3834, %v3846
        %v3848 = vpop.f32.mrf.mxu0
        %3849 = vdwg.mxu0
        %3850 = vmatpush.bf16.msra.mxu0 %v3249
        %3851 = vmatpush.bf16.msra.mxu0 %v3241
        %3852 = vmatpush.bf16.msra.mxu0 %v3233
        %3853 = vmatpush.bf16.msra.mxu0 %v3225
        %3854 = vmatpush.bf16.msra.mxu0 %v3217
        %3855 = vmatpush.bf16.msra.mxu0 %v3209
        %3856 = vmatpush.bf16.msra.mxu0 %v3201
        %3857 = vmatpush.bf16.msra.mxu0 %v3193
        %3858 = vmatmul.bf16.gmra.mxu0 %v3474
        %v3859 = vpop.f32.mrf.mxu0
        %v3860 = vadd.f32 %v3847, %v3859
        %v3861 = vpop.f32.mrf.mxu0
        %3862 = vdwg.mxu0
        %3863 = vmatpush.bf16.msra.mxu0 %v3313
        %3864 = vmatpush.bf16.msra.mxu0 %v3305
        %3865 = vmatpush.bf16.msra.mxu0 %v3297
        %3866 = vmatpush.bf16.msra.mxu0 %v3289
        %3867 = vmatpush.bf16.msra.mxu0 %v3281
        %3868 = vmatpush.bf16.msra.mxu0 %v3273
        %3869 = vmatpush.bf16.msra.mxu0 %v3265
        %3870 = vmatpush.bf16.msra.mxu0 %v3257
        %3871 = vmatmul.bf16.gmra.mxu0 %v3475
        %v3872 = vpop.f32.mrf.mxu0
        %v3873 = vadd.f32 %v3860, %v3872
        %v3874 = vpop.f32.mrf.mxu0
        %3875 = vdwg.mxu0
        %3876 = vmatpush.bf16.msra.mxu0 %v3377
        %3877 = vmatpush.bf16.msra.mxu0 %v3369
        %3878 = vmatpush.bf16.msra.mxu0 %v3361
        %3879 = vmatpush.bf16.msra.mxu0 %v3353
        %3880 = vmatpush.bf16.msra.mxu0 %v3345
        %3881 = vmatpush.bf16.msra.mxu0 %v3337
        %3882 = vmatpush.bf16.msra.mxu0 %v3329
        %3883 = vmatpush.bf16.msra.mxu0 %v3321
        %3884 = vmatmul.bf16.gmra.mxu0 %v3476
        %v3885 = vpop.f32.mrf.mxu0
        %v3886 = vadd.f32 %v3873, %v3885
        %v3887 = vpop.f32.mrf.mxu0
        %3888 = vdwg.mxu0
        %3889 = vmatpush.bf16.msra.mxu0 %v3441
        %3890 = vmatpush.bf16.msra.mxu0 %v3433
        %3891 = vmatpush.bf16.msra.mxu0 %v3425
        %3892 = vmatpush.bf16.msra.mxu0 %v3417
        %3893 = vmatpush.bf16.msra.mxu0 %v3409
        %3894 = vmatpush.bf16.msra.mxu0 %v3401
        %3895 = vmatpush.bf16.msra.mxu0 %v3393
        %3896 = vmatpush.bf16.msra.mxu0 %v3385
        %3897 = vmatmul.bf16.gmra.mxu0 %v3477
        %v3898 = vpop.f32.mrf.mxu0
        %v3899 = vadd.f32 %v3886, %v3898
        %v3900 = vpop.f32.mrf.mxu0
        %3901 = vdwg.mxu0
        %3902 = vmatpush.bf16.msra.mxu0 %v2994
        %3903 = vmatpush.bf16.msra.mxu0 %v2986
        %3904 = vmatpush.bf16.msra.mxu0 %v2978
        %3905 = vmatpush.bf16.msra.mxu0 %v2970
        %3906 = vmatpush.bf16.msra.mxu0 %v2962
        %3907 = vmatpush.bf16.msra.mxu0 %v2954
        %3908 = vmatpush.bf16.msra.mxu0 %v2946
        %3909 = vmatpush.bf16.msra.mxu0 %v2938
        %3910 = vmatmul.bf16.gmra.mxu0 %v3470
        %v3911 = vpop.f32.mrf.mxu0
        %v3912 = vadd.f32 0.0, %v3911
        %v3913 = vpop.f32.mrf.mxu0
        %3914 = vdwg.mxu0
        %3915 = vmatpush.bf16.msra.mxu0 %v3058
        %3916 = vmatpush.bf16.msra.mxu0 %v3050
        %3917 = vmatpush.bf16.msra.mxu0 %v3042
        %3918 = vmatpush.bf16.msra.mxu0 %v3034
        %3919 = vmatpush.bf16.msra.mxu0 %v3026
        %3920 = vmatpush.bf16.msra.mxu0 %v3018
        %3921 = vmatpush.bf16.msra.mxu0 %v3010
        %3922 = vmatpush.bf16.msra.mxu0 %v3002
        %3923 = vmatmul.bf16.gmra.mxu0 %v3471
        %v3924 = vpop.f32.mrf.mxu0
        %v3925 = vadd.f32 %v3912, %v3924
        %v3926 = vpop.f32.mrf.mxu0
        %3927 = vdwg.mxu0
        %3928 = vmatpush.bf16.msra.mxu0 %v3122
        %3929 = vmatpush.bf16.msra.mxu0 %v3114
        %3930 = vmatpush.bf16.msra.mxu0 %v3106
        %3931 = vmatpush.bf16.msra.mxu0 %v3098
        %3932 = vmatpush.bf16.msra.mxu0 %v3090
        %3933 = vmatpush.bf16.msra.mxu0 %v3082
        %3934 = vmatpush.bf16.msra.mxu0 %v3074
        %3935 = vmatpush.bf16.msra.mxu0 %v3066
        %3936 = vmatmul.bf16.gmra.mxu0 %v3472
        %v3937 = vpop.f32.mrf.mxu0
        %v3938 = vadd.f32 %v3925, %v3937
        %v3939 = vpop.f32.mrf.mxu0
        %3940 = vdwg.mxu0
        %3941 = vmatpush.bf16.msra.mxu0 %v3186
        %3942 = vmatpush.bf16.msra.mxu0 %v3178
        %3943 = vmatpush.bf16.msra.mxu0 %v3170
        %3944 = vmatpush.bf16.msra.mxu0 %v3162
        %3945 = vmatpush.bf16.msra.mxu0 %v3154
        %3946 = vmatpush.bf16.msra.mxu0 %v3146
        %3947 = vmatpush.bf16.msra.mxu0 %v3138
        %3948 = vmatpush.bf16.msra.mxu0 %v3130
        %3949 = vmatmul.bf16.gmra.mxu0 %v3473
        %v3950 = vpop.f32.mrf.mxu0
        %v3951 = vadd.f32 %v3938, %v3950
        %v3952 = vpop.f32.mrf.mxu0
        %3953 = vdwg.mxu0
        %3954 = vmatpush.bf16.msra.mxu0 %v3250
        %3955 = vmatpush.bf16.msra.mxu0 %v3242
        %3956 = vmatpush.bf16.msra.mxu0 %v3234
        %3957 = vmatpush.bf16.msra.mxu0 %v3226
        %3958 = vmatpush.bf16.msra.mxu0 %v3218
        %3959 = vmatpush.bf16.msra.mxu0 %v3210
        %3960 = vmatpush.bf16.msra.mxu0 %v3202
        %3961 = vmatpush.bf16.msra.mxu0 %v3194
        %3962 = vmatmul.bf16.gmra.mxu0 %v3474
        %v3963 = vpop.f32.mrf.mxu0
        %v3964 = vadd.f32 %v3951, %v3963
        %v3965 = vpop.f32.mrf.mxu0
        %3966 = vdwg.mxu0
        %3967 = vmatpush.bf16.msra.mxu0 %v3314
        %3968 = vmatpush.bf16.msra.mxu0 %v3306
        %3969 = vmatpush.bf16.msra.mxu0 %v3298
        %3970 = vmatpush.bf16.msra.mxu0 %v3290
        %3971 = vmatpush.bf16.msra.mxu0 %v3282
        %3972 = vmatpush.bf16.msra.mxu0 %v3274
        %3973 = vmatpush.bf16.msra.mxu0 %v3266
        %3974 = vmatpush.bf16.msra.mxu0 %v3258
        %3975 = vmatmul.bf16.gmra.mxu0 %v3475
        %v3976 = vpop.f32.mrf.mxu0
        %v3977 = vadd.f32 %v3964, %v3976
        %v3978 = vpop.f32.mrf.mxu0
        %3979 = vdwg.mxu0
        %3980 = vmatpush.bf16.msra.mxu0 %v3378
        %3981 = vmatpush.bf16.msra.mxu0 %v3370
        %3982 = vmatpush.bf16.msra.mxu0 %v3362
        %3983 = vmatpush.bf16.msra.mxu0 %v3354
        %3984 = vmatpush.bf16.msra.mxu0 %v3346
        %3985 = vmatpush.bf16.msra.mxu0 %v3338
        %3986 = vmatpush.bf16.msra.mxu0 %v3330
        %3987 = vmatpush.bf16.msra.mxu0 %v3322
        %3988 = vmatmul.bf16.gmra.mxu0 %v3476
        %v3989 = vpop.f32.mrf.mxu0
        %v3990 = vadd.f32 %v3977, %v3989
        %v3991 = vpop.f32.mrf.mxu0
        %3992 = vdwg.mxu0
        %3993 = vmatpush.bf16.msra.mxu0 %v3442
        %3994 = vmatpush.bf16.msra.mxu0 %v3434
        %3995 = vmatpush.bf16.msra.mxu0 %v3426
        %3996 = vmatpush.bf16.msra.mxu0 %v3418
        %3997 = vmatpush.bf16.msra.mxu0 %v3410
        %3998 = vmatpush.bf16.msra.mxu0 %v3402
        %3999 = vmatpush.bf16.msra.mxu0 %v3394
        %4000 = vmatpush.bf16.msra.mxu0 %v3386
        %4001 = vmatmul.bf16.gmra.mxu0 %v3477
        %v4002 = vpop.f32.mrf.mxu0
        %v4003 = vadd.f32 %v3990, %v4002
        %v4004 = vpop.f32.mrf.mxu0
        %4005 = vdwg.mxu0
        %4006 = vmatpush.bf16.msra.mxu0 %v2995
        %4007 = vmatpush.bf16.msra.mxu0 %v2987
        %4008 = vmatpush.bf16.msra.mxu0 %v2979
        %4009 = vmatpush.bf16.msra.mxu0 %v2971
        %4010 = vmatpush.bf16.msra.mxu0 %v2963
        %4011 = vmatpush.bf16.msra.mxu0 %v2955
        %4012 = vmatpush.bf16.msra.mxu0 %v2947
        %4013 = vmatpush.bf16.msra.mxu0 %v2939
        %4014 = vmatmul.bf16.gmra.mxu0 %v3470
        %v4015 = vpop.f32.mrf.mxu0
        %v4016 = vadd.f32 0.0, %v4015
        %v4017 = vpop.f32.mrf.mxu0
        %4018 = vdwg.mxu0
        %4019 = vmatpush.bf16.msra.mxu0 %v3059
        %4020 = vmatpush.bf16.msra.mxu0 %v3051
        %4021 = vmatpush.bf16.msra.mxu0 %v3043
        %4022 = vmatpush.bf16.msra.mxu0 %v3035
        %4023 = vmatpush.bf16.msra.mxu0 %v3027
        %4024 = vmatpush.bf16.msra.mxu0 %v3019
        %4025 = vmatpush.bf16.msra.mxu0 %v3011
        %4026 = vmatpush.bf16.msra.mxu0 %v3003
        %4027 = vmatmul.bf16.gmra.mxu0 %v3471
        %v4028 = vpop.f32.mrf.mxu0
        %v4029 = vadd.f32 %v4016, %v4028
        %v4030 = vpop.f32.mrf.mxu0
        %4031 = vdwg.mxu0
        %4032 = vmatpush.bf16.msra.mxu0 %v3123
        %4033 = vmatpush.bf16.msra.mxu0 %v3115
        %4034 = vmatpush.bf16.msra.mxu0 %v3107
        %4035 = vmatpush.bf16.msra.mxu0 %v3099
        %4036 = vmatpush.bf16.msra.mxu0 %v3091
        %4037 = vmatpush.bf16.msra.mxu0 %v3083
        %4038 = vmatpush.bf16.msra.mxu0 %v3075
        %4039 = vmatpush.bf16.msra.mxu0 %v3067
        %4040 = vmatmul.bf16.gmra.mxu0 %v3472
        %v4041 = vpop.f32.mrf.mxu0
        %v4042 = vadd.f32 %v4029, %v4041
        %v4043 = vpop.f32.mrf.mxu0
        %4044 = vdwg.mxu0
        %4045 = vmatpush.bf16.msra.mxu0 %v3187
        %4046 = vmatpush.bf16.msra.mxu0 %v3179
        %4047 = vmatpush.bf16.msra.mxu0 %v3171
        %4048 = vmatpush.bf16.msra.mxu0 %v3163
        %4049 = vmatpush.bf16.msra.mxu0 %v3155
        %4050 = vmatpush.bf16.msra.mxu0 %v3147
        %4051 = vmatpush.bf16.msra.mxu0 %v3139
        %4052 = vmatpush.bf16.msra.mxu0 %v3131
        %4053 = vmatmul.bf16.gmra.mxu0 %v3473
        %v4054 = vpop.f32.mrf.mxu0
        %v4055 = vadd.f32 %v4042, %v4054
        %v4056 = vpop.f32.mrf.mxu0
        %4057 = vdwg.mxu0
        %4058 = vmatpush.bf16.msra.mxu0 %v3251
        %4059 = vmatpush.bf16.msra.mxu0 %v3243
        %4060 = vmatpush.bf16.msra.mxu0 %v3235
        %4061 = vmatpush.bf16.msra.mxu0 %v3227
        %4062 = vmatpush.bf16.msra.mxu0 %v3219
        %4063 = vmatpush.bf16.msra.mxu0 %v3211
        %4064 = vmatpush.bf16.msra.mxu0 %v3203
        %4065 = vmatpush.bf16.msra.mxu0 %v3195
        %4066 = vmatmul.bf16.gmra.mxu0 %v3474
        %v4067 = vpop.f32.mrf.mxu0
        %v4068 = vadd.f32 %v4055, %v4067
        %v4069 = vpop.f32.mrf.mxu0
        %4070 = vdwg.mxu0
        %4071 = vmatpush.bf16.msra.mxu0 %v3315
        %4072 = vmatpush.bf16.msra.mxu0 %v3307
        %4073 = vmatpush.bf16.msra.mxu0 %v3299
        %4074 = vmatpush.bf16.msra.mxu0 %v3291
        %4075 = vmatpush.bf16.msra.mxu0 %v3283
        %4076 = vmatpush.bf16.msra.mxu0 %v3275
        %4077 = vmatpush.bf16.msra.mxu0 %v3267
        %4078 = vmatpush.bf16.msra.mxu0 %v3259
        %4079 = vmatmul.bf16.gmra.mxu0 %v3475
        %v4080 = vpop.f32.mrf.mxu0
        %v4081 = vadd.f32 %v4068, %v4080
        %v4082 = vpop.f32.mrf.mxu0
        %4083 = vdwg.mxu0
        %4084 = vmatpush.bf16.msra.mxu0 %v3379
        %4085 = vmatpush.bf16.msra.mxu0 %v3371
        %4086 = vmatpush.bf16.msra.mxu0 %v3363
        %4087 = vmatpush.bf16.msra.mxu0 %v3355
        %4088 = vmatpush.bf16.msra.mxu0 %v3347
        %4089 = vmatpush.bf16.msra.mxu0 %v3339
        %4090 = vmatpush.bf16.msra.mxu0 %v3331
        %4091 = vmatpush.bf16.msra.mxu0 %v3323
        %4092 = vmatmul.bf16.gmra.mxu0 %v3476
        %v4093 = vpop.f32.mrf.mxu0
        %v4094 = vadd.f32 %v4081, %v4093
        %v4095 = vpop.f32.mrf.mxu0
        %4096 = vdwg.mxu0
        %4097 = vmatpush.bf16.msra.mxu0 %v3443
        %4098 = vmatpush.bf16.msra.mxu0 %v3435
        %4099 = vmatpush.bf16.msra.mxu0 %v3427
        %4100 = vmatpush.bf16.msra.mxu0 %v3419
        %4101 = vmatpush.bf16.msra.mxu0 %v3411
        %4102 = vmatpush.bf16.msra.mxu0 %v3403
        %4103 = vmatpush.bf16.msra.mxu0 %v3395
        %4104 = vmatpush.bf16.msra.mxu0 %v3387
        %4105 = vmatmul.bf16.gmra.mxu0 %v3477
        %v4106 = vpop.f32.mrf.mxu0
        %v4107 = vadd.f32 %v4094, %v4106
        %v4108 = vpop.f32.mrf.mxu0
        %4109 = vdwg.mxu0
        %4110 = vmatpush.bf16.msra.mxu0 %v2996
        %4111 = vmatpush.bf16.msra.mxu0 %v2988
        %4112 = vmatpush.bf16.msra.mxu0 %v2980
        %4113 = vmatpush.bf16.msra.mxu0 %v2972
        %4114 = vmatpush.bf16.msra.mxu0 %v2964
        %4115 = vmatpush.bf16.msra.mxu0 %v2956
        %4116 = vmatpush.bf16.msra.mxu0 %v2948
        %4117 = vmatpush.bf16.msra.mxu0 %v2940
        %4118 = vmatmul.bf16.gmra.mxu0 %v3470
        %v4119 = vpop.f32.mrf.mxu0
        %v4120 = vadd.f32 0.0, %v4119
        %v4121 = vpop.f32.mrf.mxu0
        %4122 = vdwg.mxu0
        %4123 = vmatpush.bf16.msra.mxu0 %v3060
        %4124 = vmatpush.bf16.msra.mxu0 %v3052
        %4125 = vmatpush.bf16.msra.mxu0 %v3044
        %4126 = vmatpush.bf16.msra.mxu0 %v3036
        %4127 = vmatpush.bf16.msra.mxu0 %v3028
        %4128 = vmatpush.bf16.msra.mxu0 %v3020
        %4129 = vmatpush.bf16.msra.mxu0 %v3012
        %4130 = vmatpush.bf16.msra.mxu0 %v3004
        %4131 = vmatmul.bf16.gmra.mxu0 %v3471
        %v4132 = vpop.f32.mrf.mxu0
        %v4133 = vadd.f32 %v4120, %v4132
        %v4134 = vpop.f32.mrf.mxu0
        %4135 = vdwg.mxu0
        %4136 = vmatpush.bf16.msra.mxu0 %v3124
        %4137 = vmatpush.bf16.msra.mxu0 %v3116
        %4138 = vmatpush.bf16.msra.mxu0 %v3108
        %4139 = vmatpush.bf16.msra.mxu0 %v3100
        %4140 = vmatpush.bf16.msra.mxu0 %v3092
        %4141 = vmatpush.bf16.msra.mxu0 %v3084
        %4142 = vmatpush.bf16.msra.mxu0 %v3076
        %4143 = vmatpush.bf16.msra.mxu0 %v3068
        %4144 = vmatmul.bf16.gmra.mxu0 %v3472
        %v4145 = vpop.f32.mrf.mxu0
        %v4146 = vadd.f32 %v4133, %v4145
        %v4147 = vpop.f32.mrf.mxu0
        %4148 = vdwg.mxu0
        %4149 = vmatpush.bf16.msra.mxu0 %v3188
        %4150 = vmatpush.bf16.msra.mxu0 %v3180
        %4151 = vmatpush.bf16.msra.mxu0 %v3172
        %4152 = vmatpush.bf16.msra.mxu0 %v3164
        %4153 = vmatpush.bf16.msra.mxu0 %v3156
        %4154 = vmatpush.bf16.msra.mxu0 %v3148
        %4155 = vmatpush.bf16.msra.mxu0 %v3140
        %4156 = vmatpush.bf16.msra.mxu0 %v3132
        %4157 = vmatmul.bf16.gmra.mxu0 %v3473
        %v4158 = vpop.f32.mrf.mxu0
        %v4159 = vadd.f32 %v4146, %v4158
        %v4160 = vpop.f32.mrf.mxu0
        %4161 = vdwg.mxu0
        %4162 = vmatpush.bf16.msra.mxu0 %v3252
        %4163 = vmatpush.bf16.msra.mxu0 %v3244
        %4164 = vmatpush.bf16.msra.mxu0 %v3236
        %4165 = vmatpush.bf16.msra.mxu0 %v3228
        %4166 = vmatpush.bf16.msra.mxu0 %v3220
        %4167 = vmatpush.bf16.msra.mxu0 %v3212
        %4168 = vmatpush.bf16.msra.mxu0 %v3204
        %4169 = vmatpush.bf16.msra.mxu0 %v3196
        %4170 = vmatmul.bf16.gmra.mxu0 %v3474
        %v4171 = vpop.f32.mrf.mxu0
        %v4172 = vadd.f32 %v4159, %v4171
        %v4173 = vpop.f32.mrf.mxu0
        %4174 = vdwg.mxu0
        %4175 = vmatpush.bf16.msra.mxu0 %v3316
        %4176 = vmatpush.bf16.msra.mxu0 %v3308
        %4177 = vmatpush.bf16.msra.mxu0 %v3300
        %4178 = vmatpush.bf16.msra.mxu0 %v3292
        %4179 = vmatpush.bf16.msra.mxu0 %v3284
        %4180 = vmatpush.bf16.msra.mxu0 %v3276
        %4181 = vmatpush.bf16.msra.mxu0 %v3268
        %4182 = vmatpush.bf16.msra.mxu0 %v3260
        %4183 = vmatmul.bf16.gmra.mxu0 %v3475
        %v4184 = vpop.f32.mrf.mxu0
        %v4185 = vadd.f32 %v4172, %v4184
        %v4186 = vpop.f32.mrf.mxu0
        %4187 = vdwg.mxu0
        %4188 = vmatpush.bf16.msra.mxu0 %v3380
        %4189 = vmatpush.bf16.msra.mxu0 %v3372
        %4190 = vmatpush.bf16.msra.mxu0 %v3364
        %4191 = vmatpush.bf16.msra.mxu0 %v3356
        %4192 = vmatpush.bf16.msra.mxu0 %v3348
        %4193 = vmatpush.bf16.msra.mxu0 %v3340
        %4194 = vmatpush.bf16.msra.mxu0 %v3332
        %4195 = vmatpush.bf16.msra.mxu0 %v3324
        %4196 = vmatmul.bf16.gmra.mxu0 %v3476
        %v4197 = vpop.f32.mrf.mxu0
        %v4198 = vadd.f32 %v4185, %v4197
        %v4199 = vpop.f32.mrf.mxu0
        %4200 = vdwg.mxu0
        %4201 = vmatpush.bf16.msra.mxu0 %v3444
        %4202 = vmatpush.bf16.msra.mxu0 %v3436
        %4203 = vmatpush.bf16.msra.mxu0 %v3428
        %4204 = vmatpush.bf16.msra.mxu0 %v3420
        %4205 = vmatpush.bf16.msra.mxu0 %v3412
        %4206 = vmatpush.bf16.msra.mxu0 %v3404
        %4207 = vmatpush.bf16.msra.mxu0 %v3396
        %4208 = vmatpush.bf16.msra.mxu0 %v3388
        %4209 = vmatmul.bf16.gmra.mxu0 %v3477
        %v4210 = vpop.f32.mrf.mxu0
        %v4211 = vadd.f32 %v4198, %v4210
        %v4212 = vpop.f32.mrf.mxu0
        %4213 = vdwg.mxu0
        %4214 = vmatpush.bf16.msra.mxu0 %v2997
        %4215 = vmatpush.bf16.msra.mxu0 %v2989
        %4216 = vmatpush.bf16.msra.mxu0 %v2981
        %4217 = vmatpush.bf16.msra.mxu0 %v2973
        %4218 = vmatpush.bf16.msra.mxu0 %v2965
        %4219 = vmatpush.bf16.msra.mxu0 %v2957
        %4220 = vmatpush.bf16.msra.mxu0 %v2949
        %4221 = vmatpush.bf16.msra.mxu0 %v2941
        %4222 = vmatmul.bf16.gmra.mxu0 %v3470
        %v4223 = vpop.f32.mrf.mxu0
        %v4224 = vadd.f32 0.0, %v4223
        %v4225 = vpop.f32.mrf.mxu0
        %4226 = vdwg.mxu0
        %4227 = vmatpush.bf16.msra.mxu0 %v3061
        %4228 = vmatpush.bf16.msra.mxu0 %v3053
        %4229 = vmatpush.bf16.msra.mxu0 %v3045
        %4230 = vmatpush.bf16.msra.mxu0 %v3037
        %4231 = vmatpush.bf16.msra.mxu0 %v3029
        %4232 = vmatpush.bf16.msra.mxu0 %v3021
        %4233 = vmatpush.bf16.msra.mxu0 %v3013
        %4234 = vmatpush.bf16.msra.mxu0 %v3005
        %4235 = vmatmul.bf16.gmra.mxu0 %v3471
        %v4236 = vpop.f32.mrf.mxu0
        %v4237 = vadd.f32 %v4224, %v4236
        %v4238 = vpop.f32.mrf.mxu0
        %4239 = vdwg.mxu0
        %4240 = vmatpush.bf16.msra.mxu0 %v3125
        %4241 = vmatpush.bf16.msra.mxu0 %v3117
        %4242 = vmatpush.bf16.msra.mxu0 %v3109
        %4243 = vmatpush.bf16.msra.mxu0 %v3101
        %4244 = vmatpush.bf16.msra.mxu0 %v3093
        %4245 = vmatpush.bf16.msra.mxu0 %v3085
        %4246 = vmatpush.bf16.msra.mxu0 %v3077
        %4247 = vmatpush.bf16.msra.mxu0 %v3069
        %4248 = vmatmul.bf16.gmra.mxu0 %v3472
        %v4249 = vpop.f32.mrf.mxu0
        %v4250 = vadd.f32 %v4237, %v4249
        %v4251 = vpop.f32.mrf.mxu0
        %4252 = vdwg.mxu0
        %4253 = vmatpush.bf16.msra.mxu0 %v3189
        %4254 = vmatpush.bf16.msra.mxu0 %v3181
        %4255 = vmatpush.bf16.msra.mxu0 %v3173
        %4256 = vmatpush.bf16.msra.mxu0 %v3165
        %4257 = vmatpush.bf16.msra.mxu0 %v3157
        %4258 = vmatpush.bf16.msra.mxu0 %v3149
        %4259 = vmatpush.bf16.msra.mxu0 %v3141
        %4260 = vmatpush.bf16.msra.mxu0 %v3133
        %4261 = vmatmul.bf16.gmra.mxu0 %v3473
        %v4262 = vpop.f32.mrf.mxu0
        %v4263 = vadd.f32 %v4250, %v4262
        %v4264 = vpop.f32.mrf.mxu0
        %4265 = vdwg.mxu0
        %4266 = vmatpush.bf16.msra.mxu0 %v3253
        %4267 = vmatpush.bf16.msra.mxu0 %v3245
        %4268 = vmatpush.bf16.msra.mxu0 %v3237
        %4269 = vmatpush.bf16.msra.mxu0 %v3229
        %4270 = vmatpush.bf16.msra.mxu0 %v3221
        %4271 = vmatpush.bf16.msra.mxu0 %v3213
        %4272 = vmatpush.bf16.msra.mxu0 %v3205
        %4273 = vmatpush.bf16.msra.mxu0 %v3197
        %4274 = vmatmul.bf16.gmra.mxu0 %v3474
        %v4275 = vpop.f32.mrf.mxu0
        %v4276 = vadd.f32 %v4263, %v4275
        %v4277 = vpop.f32.mrf.mxu0
        %4278 = vdwg.mxu0
        %4279 = vmatpush.bf16.msra.mxu0 %v3317
        %4280 = vmatpush.bf16.msra.mxu0 %v3309
        %4281 = vmatpush.bf16.msra.mxu0 %v3301
        %4282 = vmatpush.bf16.msra.mxu0 %v3293
        %4283 = vmatpush.bf16.msra.mxu0 %v3285
        %4284 = vmatpush.bf16.msra.mxu0 %v3277
        %4285 = vmatpush.bf16.msra.mxu0 %v3269
        %4286 = vmatpush.bf16.msra.mxu0 %v3261
        %4287 = vmatmul.bf16.gmra.mxu0 %v3475
        %v4288 = vpop.f32.mrf.mxu0
        %v4289 = vadd.f32 %v4276, %v4288
        %v4290 = vpop.f32.mrf.mxu0
        %4291 = vdwg.mxu0
        %4292 = vmatpush.bf16.msra.mxu0 %v3381
        %4293 = vmatpush.bf16.msra.mxu0 %v3373
        %4294 = vmatpush.bf16.msra.mxu0 %v3365
        %4295 = vmatpush.bf16.msra.mxu0 %v3357
        %4296 = vmatpush.bf16.msra.mxu0 %v3349
        %4297 = vmatpush.bf16.msra.mxu0 %v3341
        %4298 = vmatpush.bf16.msra.mxu0 %v3333
        %4299 = vmatpush.bf16.msra.mxu0 %v3325
        %4300 = vmatmul.bf16.gmra.mxu0 %v3476
        %v4301 = vpop.f32.mrf.mxu0
        %v4302 = vadd.f32 %v4289, %v4301
        %v4303 = vpop.f32.mrf.mxu0
        %4304 = vdwg.mxu0
        %4305 = vmatpush.bf16.msra.mxu0 %v3445
        %4306 = vmatpush.bf16.msra.mxu0 %v3437
        %4307 = vmatpush.bf16.msra.mxu0 %v3429
        %4308 = vmatpush.bf16.msra.mxu0 %v3421
        %4309 = vmatpush.bf16.msra.mxu0 %v3413
        %4310 = vmatpush.bf16.msra.mxu0 %v3405
        %4311 = vmatpush.bf16.msra.mxu0 %v3397
        %4312 = vmatpush.bf16.msra.mxu0 %v3389
        %4313 = vmatmul.bf16.gmra.mxu0 %v3477
        %v4314 = vpop.f32.mrf.mxu0
        %v4315 = vadd.f32 %v4302, %v4314
        %v4316 = vpop.f32.mrf.mxu0
        %4317 = vdwg.mxu0
        %v4318 = vadd.f32 %v3446, %v3587
        %v4319 = vadd.f32 %v3447, %v3691
        %v4320 = vadd.f32 %v3448, %v3795
        %v4321 = vadd.f32 %v3449, %v3899
        %v4322 = vadd.f32 %v3450, %v4003
        %v4323 = vadd.f32 %v3451, %v4107
        %v4324 = vadd.f32 %v3452, %v4211
        %v4325 = vadd.f32 %v3453, %v4315
        %4326 = vst [vmem:[#allocation2] sm:$0xff] %v4318
        %4327 = vst [vmem:[#allocation2 + $0x8] sm:$0xff] %v4319
        %4328 = vst [vmem:[#allocation2 + $0x10] sm:$0xff] %v4320
        %4329 = vst [vmem:[#allocation2 + $0x18] sm:$0xff] %v4321
        %4330 = vst [vmem:[#allocation2 + $0x20] sm:$0xff] %v4322
        %4331 = vst [vmem:[#allocation2 + $0x28] sm:$0xff] %v4323
        %4332 = vst [vmem:[#allocation2 + $0x30] sm:$0xff] %v4324
        %4333 = vst [vmem:[#allocation2 + $0x38] sm:$0xff] %v4325
        %p4334 = scmp.eq.s32.totalorder %s35, 3
        // Predicated region
        $region121: #{tpu_custom_call.1} parent=67 // pred_check
          %p4335 = pneg %p4334
        $region122: #{tpu_custom_call.1} parent=67 // pred_check_branch
          %4337 = sbr.rel (%p4335) target = $region124
        $region123: #{tpu_custom_call.1} parent=67 // pred_region
          %v4338 = vld [vmem:[#allocation2] sm:$0xff]
          %v4339 = vld [vmem:[#allocation2 + $0x8] sm:$0xff]
          %v4340 = vld [vmem:[#allocation2 + $0x10] sm:$0xff]
          %v4341 = vld [vmem:[#allocation2 + $0x18] sm:$0xff]
          %v4342 = vld [vmem:[#allocation2 + $0x20] sm:$0xff]
          %v4343 = vld [vmem:[#allocation2 + $0x28] sm:$0xff]
          %v4344 = vld [vmem:[#allocation2 + $0x30] sm:$0xff]
          %v4345 = vld [vmem:[#allocation2 + $0x38] sm:$0xff]
          %v4346 = vld [vmem:[#allocation8] sm:$0xff]
          %v4348 = vperm.slane %v4346, 0
          %v4349 = vperm.slane %v4346, 1
          %v4350 = vperm.slane %v4346, 2
          %v4351 = vperm.slane %v4346, 3
          %v4352 = vperm.slane %v4346, 4
          %v4353 = vperm.slane %v4346, 5
          %v4354 = vperm.slane %v4346, 6
          %v4355 = vperm.slane %v4346, 7
          %v4364 = vmul.f32 %v4338, %v4348
          %v4365 = vmul.f32 %v4339, %v4349
          %v4366 = vmul.f32 %v4340, %v4350
          %v4367 = vmul.f32 %v4341, %v4351
          %v4368 = vmul.f32 %v4342, %v4352
          %v4369 = vmul.f32 %v4343, %v4353
          %v4370 = vmul.f32 %v4344, %v4354
          %v4371 = vmul.f32 %v4345, %v4355
          %v4372 = vld [vmem:[#allocation9] sm:$0xff]
          %v4374 = vperm.slane %v4372, 0
          %v4375 = vperm.slane %v4372, 1
          %v4376 = vperm.slane %v4372, 2
          %v4377 = vperm.slane %v4372, 3
          %v4378 = vperm.slane %v4372, 4
          %v4379 = vperm.slane %v4372, 5
          %v4380 = vperm.slane %v4372, 6
          %v4381 = vperm.slane %v4372, 7
          %v4390 = vadd.f32 %v4364, %v4374
          %v4391 = vadd.f32 %v4365, %v4375
          %v4392 = vadd.f32 %v4366, %v4376
          %v4393 = vadd.f32 %v4367, %v4377
          %v4394 = vadd.f32 %v4368, %v4378
          %v4395 = vadd.f32 %v4369, %v4379
          %v4396 = vadd.f32 %v4370, %v4380
          %v4397 = vadd.f32 %v4371, %v4381
          %v4398 = vpack.c.bf16 %v4390, %v4390
          %v4399 = vpack.c.bf16 %v4391, %v4391
          %v4400 = vpack.c.bf16 %v4392, %v4392
          %v4401 = vpack.c.bf16 %v4393, %v4393
          %v4402 = vpack.c.bf16 %v4394, %v4394
          %v4403 = vpack.c.bf16 %v4395, %v4395
          %v4404 = vpack.c.bf16 %v4396, %v4396
          %v4405 = vpack.c.bf16 %v4397, %v4397
          %v4406 = vld [vmem:[#allocation11] sm:$0xff]
          %v4407 = vld [vmem:[#allocation11 + $0x8] sm:$0xff]
          %v4408 = vld [vmem:[#allocation11 + $0x10] sm:$0xff]
          %v4409 = vld [vmem:[#allocation11 + $0x18] sm:$0xff]
          %v4410 = vld [vmem:[#allocation11 + $0x20] sm:$0xff]
          %v4411 = vld [vmem:[#allocation11 + $0x28] sm:$0xff]
          %v4412 = vld [vmem:[#allocation11 + $0x30] sm:$0xff]
          %v4413 = vld [vmem:[#allocation11 + $0x38] sm:$0xff]
          %v4414 = vld [vmem:[#allocation11 + $0x40] sm:$0xff]
          %v4415 = vld [vmem:[#allocation11 + $0x48] sm:$0xff]
          %v4416 = vld [vmem:[#allocation11 + $0x50] sm:$0xff]
          %v4417 = vld [vmem:[#allocation11 + $0x58] sm:$0xff]
          %v4418 = vld [vmem:[#allocation11 + $0x60] sm:$0xff]
          %v4419 = vld [vmem:[#allocation11 + $0x68] sm:$0xff]
          %v4420 = vld [vmem:[#allocation11 + $0x70] sm:$0xff]
          %v4421 = vld [vmem:[#allocation11 + $0x78] sm:$0xff]
          %v4422 = vld [vmem:[#allocation11 + $0x80] sm:$0xff]
          %v4423 = vld [vmem:[#allocation11 + $0x88] sm:$0xff]
          %v4424 = vld [vmem:[#allocation11 + $0x90] sm:$0xff]
          %v4425 = vld [vmem:[#allocation11 + $0x98] sm:$0xff]
          %v4426 = vld [vmem:[#allocation11 + $0xa0] sm:$0xff]
          %v4427 = vld [vmem:[#allocation11 + $0xa8] sm:$0xff]
          %v4428 = vld [vmem:[#allocation11 + $0xb0] sm:$0xff]
          %v4429 = vld [vmem:[#allocation11 + $0xb8] sm:$0xff]
          %v4430 = vld [vmem:[#allocation11 + $0xc0] sm:$0xff]
          %v4431 = vld [vmem:[#allocation11 + $0xc8] sm:$0xff]
          %v4432 = vld [vmem:[#allocation11 + $0xd0] sm:$0xff]
          %v4433 = vld [vmem:[#allocation11 + $0xd8] sm:$0xff]
          %v4434 = vld [vmem:[#allocation11 + $0xe0] sm:$0xff]
          %v4435 = vld [vmem:[#allocation11 + $0xe8] sm:$0xff]
          %v4436 = vld [vmem:[#allocation11 + $0xf0] sm:$0xff]
          %v4437 = vld [vmem:[#allocation11 + $0xf8] sm:$0xff]
          %v4438 = vld [vmem:[#allocation11 + $0x100] sm:$0xff]
          %v4439 = vld [vmem:[#allocation11 + $0x108] sm:$0xff]
          %v4440 = vld [vmem:[#allocation11 + $0x110] sm:$0xff]
          %v4441 = vld [vmem:[#allocation11 + $0x118] sm:$0xff]
          %v4442 = vld [vmem:[#allocation11 + $0x120] sm:$0xff]
          %v4443 = vld [vmem:[#allocation11 + $0x128] sm:$0xff]
          %v4444 = vld [vmem:[#allocation11 + $0x130] sm:$0xff]
          %v4445 = vld [vmem:[#allocation11 + $0x138] sm:$0xff]
          %v4446 = vld [vmem:[#allocation11 + $0x140] sm:$0xff]
          %v4447 = vld [vmem:[#allocation11 + $0x148] sm:$0xff]
          %v4448 = vld [vmem:[#allocation11 + $0x150] sm:$0xff]
          %v4449 = vld [vmem:[#allocation11 + $0x158] sm:$0xff]
          %v4450 = vld [vmem:[#allocation11 + $0x160] sm:$0xff]
          %v4451 = vld [vmem:[#allocation11 + $0x168] sm:$0xff]
          %v4452 = vld [vmem:[#allocation11 + $0x170] sm:$0xff]
          %v4453 = vld [vmem:[#allocation11 + $0x178] sm:$0xff]
          %v4454 = vld [vmem:[#allocation11 + $0x180] sm:$0xff]
          %v4455 = vld [vmem:[#allocation11 + $0x188] sm:$0xff]
          %v4456 = vld [vmem:[#allocation11 + $0x190] sm:$0xff]
          %v4457 = vld [vmem:[#allocation11 + $0x198] sm:$0xff]
          %v4458 = vld [vmem:[#allocation11 + $0x1a0] sm:$0xff]
          %v4459 = vld [vmem:[#allocation11 + $0x1a8] sm:$0xff]
          %v4460 = vld [vmem:[#allocation11 + $0x1b0] sm:$0xff]
          %v4461 = vld [vmem:[#allocation11 + $0x1b8] sm:$0xff]
          %v4462 = vld [vmem:[#allocation11 + $0x1c0] sm:$0xff]
          %v4463 = vld [vmem:[#allocation11 + $0x1c8] sm:$0xff]
          %v4464 = vld [vmem:[#allocation11 + $0x1d0] sm:$0xff]
          %v4465 = vld [vmem:[#allocation11 + $0x1d8] sm:$0xff]
          %v4466 = vld [vmem:[#allocation11 + $0x1e0] sm:$0xff]
          %v4467 = vld [vmem:[#allocation11 + $0x1e8] sm:$0xff]
          %v4468 = vld [vmem:[#allocation11 + $0x1f0] sm:$0xff]
          %v4469 = vld [vmem:[#allocation11 + $0x1f8] sm:$0xff]
          %v4470 = vld [vmem:[#allocation11 + $0x200] sm:$0xff]
          %v4471 = vld [vmem:[#allocation11 + $0x208] sm:$0xff]
          %v4472 = vld [vmem:[#allocation11 + $0x210] sm:$0xff]
          %v4473 = vld [vmem:[#allocation11 + $0x218] sm:$0xff]
          %v4474 = vld [vmem:[#allocation11 + $0x220] sm:$0xff]
          %v4475 = vld [vmem:[#allocation11 + $0x228] sm:$0xff]
          %v4476 = vld [vmem:[#allocation11 + $0x230] sm:$0xff]
          %v4477 = vld [vmem:[#allocation11 + $0x238] sm:$0xff]
          %v4478 = vld [vmem:[#allocation11 + $0x240] sm:$0xff]
          %v4479 = vld [vmem:[#allocation11 + $0x248] sm:$0xff]
          %v4480 = vld [vmem:[#allocation11 + $0x250] sm:$0xff]
          %v4481 = vld [vmem:[#allocation11 + $0x258] sm:$0xff]
          %v4482 = vld [vmem:[#allocation11 + $0x260] sm:$0xff]
          %v4483 = vld [vmem:[#allocation11 + $0x268] sm:$0xff]
          %v4484 = vld [vmem:[#allocation11 + $0x270] sm:$0xff]
          %v4485 = vld [vmem:[#allocation11 + $0x278] sm:$0xff]
          %v4486 = vld [vmem:[#allocation11 + $0x280] sm:$0xff]
          %v4487 = vld [vmem:[#allocation11 + $0x288] sm:$0xff]
          %v4488 = vld [vmem:[#allocation11 + $0x290] sm:$0xff]
          %v4489 = vld [vmem:[#allocation11 + $0x298] sm:$0xff]
          %v4490 = vld [vmem:[#allocation11 + $0x2a0] sm:$0xff]
          %v4491 = vld [vmem:[#allocation11 + $0x2a8] sm:$0xff]
          %v4492 = vld [vmem:[#allocation11 + $0x2b0] sm:$0xff]
          %v4493 = vld [vmem:[#allocation11 + $0x2b8] sm:$0xff]
          %v4494 = vld [vmem:[#allocation11 + $0x2c0] sm:$0xff]
          %v4495 = vld [vmem:[#allocation11 + $0x2c8] sm:$0xff]
          %v4496 = vld [vmem:[#allocation11 + $0x2d0] sm:$0xff]
          %v4497 = vld [vmem:[#allocation11 + $0x2d8] sm:$0xff]
          %v4498 = vld [vmem:[#allocation11 + $0x2e0] sm:$0xff]
          %v4499 = vld [vmem:[#allocation11 + $0x2e8] sm:$0xff]
          %v4500 = vld [vmem:[#allocation11 + $0x2f0] sm:$0xff]
          %v4501 = vld [vmem:[#allocation11 + $0x2f8] sm:$0xff]
          %v4502 = vld [vmem:[#allocation11 + $0x300] sm:$0xff]
          %v4503 = vld [vmem:[#allocation11 + $0x308] sm:$0xff]
          %v4504 = vld [vmem:[#allocation11 + $0x310] sm:$0xff]
          %v4505 = vld [vmem:[#allocation11 + $0x318] sm:$0xff]
          %v4506 = vld [vmem:[#allocation11 + $0x320] sm:$0xff]
          %v4507 = vld [vmem:[#allocation11 + $0x328] sm:$0xff]
          %v4508 = vld [vmem:[#allocation11 + $0x330] sm:$0xff]
          %v4509 = vld [vmem:[#allocation11 + $0x338] sm:$0xff]
          %v4510 = vld [vmem:[#allocation11 + $0x340] sm:$0xff]
          %v4511 = vld [vmem:[#allocation11 + $0x348] sm:$0xff]
          %v4512 = vld [vmem:[#allocation11 + $0x350] sm:$0xff]
          %v4513 = vld [vmem:[#allocation11 + $0x358] sm:$0xff]
          %v4514 = vld [vmem:[#allocation11 + $0x360] sm:$0xff]
          %v4515 = vld [vmem:[#allocation11 + $0x368] sm:$0xff]
          %v4516 = vld [vmem:[#allocation11 + $0x370] sm:$0xff]
          %v4517 = vld [vmem:[#allocation11 + $0x378] sm:$0xff]
          %v4518 = vld [vmem:[#allocation11 + $0x380] sm:$0xff]
          %v4519 = vld [vmem:[#allocation11 + $0x388] sm:$0xff]
          %v4520 = vld [vmem:[#allocation11 + $0x390] sm:$0xff]
          %v4521 = vld [vmem:[#allocation11 + $0x398] sm:$0xff]
          %v4522 = vld [vmem:[#allocation11 + $0x3a0] sm:$0xff]
          %v4523 = vld [vmem:[#allocation11 + $0x3a8] sm:$0xff]
          %v4524 = vld [vmem:[#allocation11 + $0x3b0] sm:$0xff]
          %v4525 = vld [vmem:[#allocation11 + $0x3b8] sm:$0xff]
          %v4526 = vld [vmem:[#allocation11 + $0x3c0] sm:$0xff]
          %v4527 = vld [vmem:[#allocation11 + $0x3c8] sm:$0xff]
          %v4528 = vld [vmem:[#allocation11 + $0x3d0] sm:$0xff]
          %v4529 = vld [vmem:[#allocation11 + $0x3d8] sm:$0xff]
          %v4530 = vld [vmem:[#allocation11 + $0x3e0] sm:$0xff]
          %v4531 = vld [vmem:[#allocation11 + $0x3e8] sm:$0xff]
          %v4532 = vld [vmem:[#allocation11 + $0x3f0] sm:$0xff]
          %v4533 = vld [vmem:[#allocation11 + $0x3f8] sm:$0xff]
          %v4534 = vld [vmem:[#allocation12] sm:$0x3]
          %v4536 = vperm.slane %v4534, 0
          %v4537 = vperm.slane %v4534, 1
          %v4668 = vunpack.c.l.b16 %v4406
          %v4669 = vunpack.c.h.b16 %v4406
          %v4670 = vunpack.c.l.b16 %v4407
          %v4671 = vunpack.c.h.b16 %v4407
          %v4672 = vunpack.c.l.b16 %v4408
          %v4673 = vunpack.c.h.b16 %v4408
          %v4674 = vunpack.c.l.b16 %v4409
          %v4675 = vunpack.c.h.b16 %v4409
          %v4676 = vunpack.c.l.b16 %v4410
          %v4677 = vunpack.c.h.b16 %v4410
          %v4678 = vunpack.c.l.b16 %v4411
          %v4679 = vunpack.c.h.b16 %v4411
          %v4680 = vunpack.c.l.b16 %v4412
          %v4681 = vunpack.c.h.b16 %v4412
          %v4682 = vunpack.c.l.b16 %v4413
          %v4683 = vunpack.c.h.b16 %v4413
          %v4684 = vunpack.c.l.b16 %v4414
          %v4685 = vunpack.c.h.b16 %v4414
          %v4686 = vunpack.c.l.b16 %v4415
          %v4687 = vunpack.c.h.b16 %v4415
          %v4688 = vunpack.c.l.b16 %v4416
          %v4689 = vunpack.c.h.b16 %v4416
          %v4690 = vunpack.c.l.b16 %v4417
          %v4691 = vunpack.c.h.b16 %v4417
          %v4692 = vunpack.c.l.b16 %v4418
          %v4693 = vunpack.c.h.b16 %v4418
          %v4694 = vunpack.c.l.b16 %v4419
          %v4695 = vunpack.c.h.b16 %v4419
          %v4696 = vunpack.c.l.b16 %v4420
          %v4697 = vunpack.c.h.b16 %v4420
          %v4698 = vunpack.c.l.b16 %v4421
          %v4699 = vunpack.c.h.b16 %v4421
          %v4700 = vunpack.c.l.b16 %v4422
          %v4701 = vunpack.c.h.b16 %v4422
          %v4702 = vunpack.c.l.b16 %v4423
          %v4703 = vunpack.c.h.b16 %v4423
          %v4704 = vunpack.c.l.b16 %v4424
          %v4705 = vunpack.c.h.b16 %v4424
          %v4706 = vunpack.c.l.b16 %v4425
          %v4707 = vunpack.c.h.b16 %v4425
          %v4708 = vunpack.c.l.b16 %v4426
          %v4709 = vunpack.c.h.b16 %v4426
          %v4710 = vunpack.c.l.b16 %v4427
          %v4711 = vunpack.c.h.b16 %v4427
          %v4712 = vunpack.c.l.b16 %v4428
          %v4713 = vunpack.c.h.b16 %v4428
          %v4714 = vunpack.c.l.b16 %v4429
          %v4715 = vunpack.c.h.b16 %v4429
          %v4716 = vunpack.c.l.b16 %v4430
          %v4717 = vunpack.c.h.b16 %v4430
          %v4718 = vunpack.c.l.b16 %v4431
          %v4719 = vunpack.c.h.b16 %v4431
          %v4720 = vunpack.c.l.b16 %v4432
          %v4721 = vunpack.c.h.b16 %v4432
          %v4722 = vunpack.c.l.b16 %v4433
          %v4723 = vunpack.c.h.b16 %v4433
          %v4724 = vunpack.c.l.b16 %v4434
          %v4725 = vunpack.c.h.b16 %v4434
          %v4726 = vunpack.c.l.b16 %v4435
          %v4727 = vunpack.c.h.b16 %v4435
          %v4728 = vunpack.c.l.b16 %v4436
          %v4729 = vunpack.c.h.b16 %v4436
          %v4730 = vunpack.c.l.b16 %v4437
          %v4731 = vunpack.c.h.b16 %v4437
          %v4732 = vunpack.c.l.b16 %v4438
          %v4733 = vunpack.c.h.b16 %v4438
          %v4734 = vunpack.c.l.b16 %v4439
          %v4735 = vunpack.c.h.b16 %v4439
          %v4736 = vunpack.c.l.b16 %v4440
          %v4737 = vunpack.c.h.b16 %v4440
          %v4738 = vunpack.c.l.b16 %v4441
          %v4739 = vunpack.c.h.b16 %v4441
          %v4740 = vunpack.c.l.b16 %v4442
          %v4741 = vunpack.c.h.b16 %v4442
          %v4742 = vunpack.c.l.b16 %v4443
          %v4743 = vunpack.c.h.b16 %v4443
          %v4744 = vunpack.c.l.b16 %v4444
          %v4745 = vunpack.c.h.b16 %v4444
          %v4746 = vunpack.c.l.b16 %v4445
          %v4747 = vunpack.c.h.b16 %v4445
          %v4748 = vunpack.c.l.b16 %v4446
          %v4749 = vunpack.c.h.b16 %v4446
          %v4750 = vunpack.c.l.b16 %v4447
          %v4751 = vunpack.c.h.b16 %v4447
          %v4752 = vunpack.c.l.b16 %v4448
          %v4753 = vunpack.c.h.b16 %v4448
          %v4754 = vunpack.c.l.b16 %v4449
          %v4755 = vunpack.c.h.b16 %v4449
          %v4756 = vunpack.c.l.b16 %v4450
          %v4757 = vunpack.c.h.b16 %v4450
          %v4758 = vunpack.c.l.b16 %v4451
          %v4759 = vunpack.c.h.b16 %v4451
          %v4760 = vunpack.c.l.b16 %v4452
          %v4761 = vunpack.c.h.b16 %v4452
          %v4762 = vunpack.c.l.b16 %v4453
          %v4763 = vunpack.c.h.b16 %v4453
          %v4764 = vunpack.c.l.b16 %v4454
          %v4765 = vunpack.c.h.b16 %v4454
          %v4766 = vunpack.c.l.b16 %v4455
          %v4767 = vunpack.c.h.b16 %v4455
          %v4768 = vunpack.c.l.b16 %v4456
          %v4769 = vunpack.c.h.b16 %v4456
          %v4770 = vunpack.c.l.b16 %v4457
          %v4771 = vunpack.c.h.b16 %v4457
          %v4772 = vunpack.c.l.b16 %v4458
          %v4773 = vunpack.c.h.b16 %v4458
          %v4774 = vunpack.c.l.b16 %v4459
          %v4775 = vunpack.c.h.b16 %v4459
          %v4776 = vunpack.c.l.b16 %v4460
          %v4777 = vunpack.c.h.b16 %v4460
          %v4778 = vunpack.c.l.b16 %v4461
          %v4779 = vunpack.c.h.b16 %v4461
          %v4780 = vunpack.c.l.b16 %v4462
          %v4781 = vunpack.c.h.b16 %v4462
          %v4782 = vunpack.c.l.b16 %v4463
          %v4783 = vunpack.c.h.b16 %v4463
          %v4784 = vunpack.c.l.b16 %v4464
          %v4785 = vunpack.c.h.b16 %v4464
          %v4786 = vunpack.c.l.b16 %v4465
          %v4787 = vunpack.c.h.b16 %v4465
          %v4788 = vunpack.c.l.b16 %v4466
          %v4789 = vunpack.c.h.b16 %v4466
          %v4790 = vunpack.c.l.b16 %v4467
          %v4791 = vunpack.c.h.b16 %v4467
          %v4792 = vunpack.c.l.b16 %v4468
          %v4793 = vunpack.c.h.b16 %v4468
          %v4794 = vunpack.c.l.b16 %v4469
          %v4795 = vunpack.c.h.b16 %v4469
          %v4796 = vunpack.c.l.b16 %v4470
          %v4797 = vunpack.c.h.b16 %v4470
          %v4798 = vunpack.c.l.b16 %v4471
          %v4799 = vunpack.c.h.b16 %v4471
          %v4800 = vunpack.c.l.b16 %v4472
          %v4801 = vunpack.c.h.b16 %v4472
          %v4802 = vunpack.c.l.b16 %v4473
          %v4803 = vunpack.c.h.b16 %v4473
          %v4804 = vunpack.c.l.b16 %v4474
          %v4805 = vunpack.c.h.b16 %v4474
          %v4806 = vunpack.c.l.b16 %v4475
          %v4807 = vunpack.c.h.b16 %v4475
          %v4808 = vunpack.c.l.b16 %v4476
          %v4809 = vunpack.c.h.b16 %v4476
          %v4810 = vunpack.c.l.b16 %v4477
          %v4811 = vunpack.c.h.b16 %v4477
          %v4812 = vunpack.c.l.b16 %v4478
          %v4813 = vunpack.c.h.b16 %v4478
          %v4814 = vunpack.c.l.b16 %v4479
          %v4815 = vunpack.c.h.b16 %v4479
          %v4816 = vunpack.c.l.b16 %v4480
          %v4817 = vunpack.c.h.b16 %v4480
          %v4818 = vunpack.c.l.b16 %v4481
          %v4819 = vunpack.c.h.b16 %v4481
          %v4820 = vunpack.c.l.b16 %v4482
          %v4821 = vunpack.c.h.b16 %v4482
          %v4822 = vunpack.c.l.b16 %v4483
          %v4823 = vunpack.c.h.b16 %v4483
          %v4824 = vunpack.c.l.b16 %v4484
          %v4825 = vunpack.c.h.b16 %v4484
          %v4826 = vunpack.c.l.b16 %v4485
          %v4827 = vunpack.c.h.b16 %v4485
          %v4828 = vunpack.c.l.b16 %v4486
          %v4829 = vunpack.c.h.b16 %v4486
          %v4830 = vunpack.c.l.b16 %v4487
          %v4831 = vunpack.c.h.b16 %v4487
          %v4832 = vunpack.c.l.b16 %v4488
          %v4833 = vunpack.c.h.b16 %v4488
          %v4834 = vunpack.c.l.b16 %v4489
          %v4835 = vunpack.c.h.b16 %v4489
          %v4836 = vunpack.c.l.b16 %v4490
          %v4837 = vunpack.c.h.b16 %v4490
          %v4838 = vunpack.c.l.b16 %v4491
          %v4839 = vunpack.c.h.b16 %v4491
          %v4840 = vunpack.c.l.b16 %v4492
          %v4841 = vunpack.c.h.b16 %v4492
          %v4842 = vunpack.c.l.b16 %v4493
          %v4843 = vunpack.c.h.b16 %v4493
          %v4844 = vunpack.c.l.b16 %v4494
          %v4845 = vunpack.c.h.b16 %v4494
          %v4846 = vunpack.c.l.b16 %v4495
          %v4847 = vunpack.c.h.b16 %v4495
          %v4848 = vunpack.c.l.b16 %v4496
          %v4849 = vunpack.c.h.b16 %v4496
          %v4850 = vunpack.c.l.b16 %v4497
          %v4851 = vunpack.c.h.b16 %v4497
          %v4852 = vunpack.c.l.b16 %v4498
          %v4853 = vunpack.c.h.b16 %v4498
          %v4854 = vunpack.c.l.b16 %v4499
          %v4855 = vunpack.c.h.b16 %v4499
          %v4856 = vunpack.c.l.b16 %v4500
          %v4857 = vunpack.c.h.b16 %v4500
          %v4858 = vunpack.c.l.b16 %v4501
          %v4859 = vunpack.c.h.b16 %v4501
          %v4860 = vunpack.c.l.b16 %v4502
          %v4861 = vunpack.c.h.b16 %v4502
          %v4862 = vunpack.c.l.b16 %v4503
          %v4863 = vunpack.c.h.b16 %v4503
          %v4864 = vunpack.c.l.b16 %v4504
          %v4865 = vunpack.c.h.b16 %v4504
          %v4866 = vunpack.c.l.b16 %v4505
          %v4867 = vunpack.c.h.b16 %v4505
          %v4868 = vunpack.c.l.b16 %v4506
          %v4869 = vunpack.c.h.b16 %v4506
          %v4870 = vunpack.c.l.b16 %v4507
          %v4871 = vunpack.c.h.b16 %v4507
          %v4872 = vunpack.c.l.b16 %v4508
          %v4873 = vunpack.c.h.b16 %v4508
          %v4874 = vunpack.c.l.b16 %v4509
          %v4875 = vunpack.c.h.b16 %v4509
          %v4876 = vunpack.c.l.b16 %v4510
          %v4877 = vunpack.c.h.b16 %v4510
          %v4878 = vunpack.c.l.b16 %v4511
          %v4879 = vunpack.c.h.b16 %v4511
          %v4880 = vunpack.c.l.b16 %v4512
          %v4881 = vunpack.c.h.b16 %v4512
          %v4882 = vunpack.c.l.b16 %v4513
          %v4883 = vunpack.c.h.b16 %v4513
          %v4884 = vunpack.c.l.b16 %v4514
          %v4885 = vunpack.c.h.b16 %v4514
          %v4886 = vunpack.c.l.b16 %v4515
          %v4887 = vunpack.c.h.b16 %v4515
          %v4888 = vunpack.c.l.b16 %v4516
          %v4889 = vunpack.c.h.b16 %v4516
          %v4890 = vunpack.c.l.b16 %v4517
          %v4891 = vunpack.c.h.b16 %v4517
          %v4892 = vunpack.c.l.b16 %v4518
          %v4893 = vunpack.c.h.b16 %v4518
          %v4894 = vunpack.c.l.b16 %v4519
          %v4895 = vunpack.c.h.b16 %v4519
          %v4896 = vunpack.c.l.b16 %v4520
          %v4897 = vunpack.c.h.b16 %v4520
          %v4898 = vunpack.c.l.b16 %v4521
          %v4899 = vunpack.c.h.b16 %v4521
          %v4900 = vunpack.c.l.b16 %v4522
          %v4901 = vunpack.c.h.b16 %v4522
          %v4902 = vunpack.c.l.b16 %v4523
          %v4903 = vunpack.c.h.b16 %v4523
          %v4904 = vunpack.c.l.b16 %v4524
          %v4905 = vunpack.c.h.b16 %v4524
          %v4906 = vunpack.c.l.b16 %v4525
          %v4907 = vunpack.c.h.b16 %v4525
          %v4908 = vunpack.c.l.b16 %v4526
          %v4909 = vunpack.c.h.b16 %v4526
          %v4910 = vunpack.c.l.b16 %v4527
          %v4911 = vunpack.c.h.b16 %v4527
          %v4912 = vunpack.c.l.b16 %v4528
          %v4913 = vunpack.c.h.b16 %v4528
          %v4914 = vunpack.c.l.b16 %v4529
          %v4915 = vunpack.c.h.b16 %v4529
          %v4916 = vunpack.c.l.b16 %v4530
          %v4917 = vunpack.c.h.b16 %v4530
          %v4918 = vunpack.c.l.b16 %v4531
          %v4919 = vunpack.c.h.b16 %v4531
          %v4920 = vunpack.c.l.b16 %v4532
          %v4921 = vunpack.c.h.b16 %v4532
          %v4922 = vunpack.c.l.b16 %v4533
          %v4923 = vunpack.c.h.b16 %v4533
          %v4924 = vpack.c.b16 %v4670, %v4668
          %v4925 = vpack.c.b16 %v4671, %v4669
          %v4926 = vpack.c.b16 %v4674, %v4672
          %v4927 = vpack.c.b16 %v4675, %v4673
          %v4928 = vpack.c.b16 %v4678, %v4676
          %v4929 = vpack.c.b16 %v4679, %v4677
          %v4930 = vpack.c.b16 %v4682, %v4680
          %v4931 = vpack.c.b16 %v4683, %v4681
          %v4932 = vpack.c.b16 %v4686, %v4684
          %v4933 = vpack.c.b16 %v4687, %v4685
          %v4934 = vpack.c.b16 %v4690, %v4688
          %v4935 = vpack.c.b16 %v4691, %v4689
          %v4936 = vpack.c.b16 %v4694, %v4692
          %v4937 = vpack.c.b16 %v4695, %v4693
          %v4938 = vpack.c.b16 %v4698, %v4696
          %v4939 = vpack.c.b16 %v4699, %v4697
          %v4940 = vpack.c.b16 %v4702, %v4700
          %v4941 = vpack.c.b16 %v4703, %v4701
          %v4942 = vpack.c.b16 %v4706, %v4704
          %v4943 = vpack.c.b16 %v4707, %v4705
          %v4944 = vpack.c.b16 %v4710, %v4708
          %v4945 = vpack.c.b16 %v4711, %v4709
          %v4946 = vpack.c.b16 %v4714, %v4712
          %v4947 = vpack.c.b16 %v4715, %v4713
          %v4948 = vpack.c.b16 %v4718, %v4716
          %v4949 = vpack.c.b16 %v4719, %v4717
          %v4950 = vpack.c.b16 %v4722, %v4720
          %v4951 = vpack.c.b16 %v4723, %v4721
          %v4952 = vpack.c.b16 %v4726, %v4724
          %v4953 = vpack.c.b16 %v4727, %v4725
          %v4954 = vpack.c.b16 %v4730, %v4728
          %v4955 = vpack.c.b16 %v4731, %v4729
          %v4956 = vpack.c.b16 %v4734, %v4732
          %v4957 = vpack.c.b16 %v4735, %v4733
          %v4958 = vpack.c.b16 %v4738, %v4736
          %v4959 = vpack.c.b16 %v4739, %v4737
          %v4960 = vpack.c.b16 %v4742, %v4740
          %v4961 = vpack.c.b16 %v4743, %v4741
          %v4962 = vpack.c.b16 %v4746, %v4744
          %v4963 = vpack.c.b16 %v4747, %v4745
          %v4964 = vpack.c.b16 %v4750, %v4748
          %v4965 = vpack.c.b16 %v4751, %v4749
          %v4966 = vpack.c.b16 %v4754, %v4752
          %v4967 = vpack.c.b16 %v4755, %v4753
          %v4968 = vpack.c.b16 %v4758, %v4756
          %v4969 = vpack.c.b16 %v4759, %v4757
          %v4970 = vpack.c.b16 %v4762, %v4760
          %v4971 = vpack.c.b16 %v4763, %v4761
          %v4972 = vpack.c.b16 %v4766, %v4764
          %v4973 = vpack.c.b16 %v4767, %v4765
          %v4974 = vpack.c.b16 %v4770, %v4768
          %v4975 = vpack.c.b16 %v4771, %v4769
          %v4976 = vpack.c.b16 %v4774, %v4772
          %v4977 = vpack.c.b16 %v4775, %v4773
          %v4978 = vpack.c.b16 %v4778, %v4776
          %v4979 = vpack.c.b16 %v4779, %v4777
          %v4980 = vpack.c.b16 %v4782, %v4780
          %v4981 = vpack.c.b16 %v4783, %v4781
          %v4982 = vpack.c.b16 %v4786, %v4784
          %v4983 = vpack.c.b16 %v4787, %v4785
          %v4984 = vpack.c.b16 %v4790, %v4788
          %v4985 = vpack.c.b16 %v4791, %v4789
          %v4986 = vpack.c.b16 %v4794, %v4792
          %v4987 = vpack.c.b16 %v4795, %v4793
          %v4988 = vpack.c.b16 %v4798, %v4796
          %v4989 = vpack.c.b16 %v4799, %v4797
          %v4990 = vpack.c.b16 %v4802, %v4800
          %v4991 = vpack.c.b16 %v4803, %v4801
          %v4992 = vpack.c.b16 %v4806, %v4804
          %v4993 = vpack.c.b16 %v4807, %v4805
          %v4994 = vpack.c.b16 %v4810, %v4808
          %v4995 = vpack.c.b16 %v4811, %v4809
          %v4996 = vpack.c.b16 %v4814, %v4812
          %v4997 = vpack.c.b16 %v4815, %v4813
          %v4998 = vpack.c.b16 %v4818, %v4816
          %v4999 = vpack.c.b16 %v4819, %v4817
          %v5000 = vpack.c.b16 %v4822, %v4820
          %v5001 = vpack.c.b16 %v4823, %v4821
          %v5002 = vpack.c.b16 %v4826, %v4824
          %v5003 = vpack.c.b16 %v4827, %v4825
          %v5004 = vpack.c.b16 %v4830, %v4828
          %v5005 = vpack.c.b16 %v4831, %v4829
          %v5006 = vpack.c.b16 %v4834, %v4832
          %v5007 = vpack.c.b16 %v4835, %v4833
          %v5008 = vpack.c.b16 %v4838, %v4836
          %v5009 = vpack.c.b16 %v4839, %v4837
          %v5010 = vpack.c.b16 %v4842, %v4840
          %v5011 = vpack.c.b16 %v4843, %v4841
          %v5012 = vpack.c.b16 %v4846, %v4844
          %v5013 = vpack.c.b16 %v4847, %v4845
          %v5014 = vpack.c.b16 %v4850, %v4848
          %v5015 = vpack.c.b16 %v4851, %v4849
          %v5016 = vpack.c.b16 %v4854, %v4852
          %v5017 = vpack.c.b16 %v4855, %v4853
          %v5018 = vpack.c.b16 %v4858, %v4856
          %v5019 = vpack.c.b16 %v4859, %v4857
          %v5020 = vpack.c.b16 %v4862, %v4860
          %v5021 = vpack.c.b16 %v4863, %v4861
          %v5022 = vpack.c.b16 %v4866, %v4864
          %v5023 = vpack.c.b16 %v4867, %v4865
          %v5024 = vpack.c.b16 %v4870, %v4868
          %v5025 = vpack.c.b16 %v4871, %v4869
          %v5026 = vpack.c.b16 %v4874, %v4872
          %v5027 = vpack.c.b16 %v4875, %v4873
          %v5028 = vpack.c.b16 %v4878, %v4876
          %v5029 = vpack.c.b16 %v4879, %v4877
          %v5030 = vpack.c.b16 %v4882, %v4880
          %v5031 = vpack.c.b16 %v4883, %v4881
          %v5032 = vpack.c.b16 %v4886, %v4884
          %v5033 = vpack.c.b16 %v4887, %v4885
          %v5034 = vpack.c.b16 %v4890, %v4888
          %v5035 = vpack.c.b16 %v4891, %v4889
          %v5036 = vpack.c.b16 %v4894, %v4892
          %v5037 = vpack.c.b16 %v4895, %v4893
          %v5038 = vpack.c.b16 %v4898, %v4896
          %v5039 = vpack.c.b16 %v4899, %v4897
          %v5040 = vpack.c.b16 %v4902, %v4900
          %v5041 = vpack.c.b16 %v4903, %v4901
          %v5042 = vpack.c.b16 %v4906, %v4904
          %v5043 = vpack.c.b16 %v4907, %v4905
          %v5044 = vpack.c.b16 %v4910, %v4908
          %v5045 = vpack.c.b16 %v4911, %v4909
          %v5046 = vpack.c.b16 %v4914, %v4912
          %v5047 = vpack.c.b16 %v4915, %v4913
          %v5048 = vpack.c.b16 %v4918, %v4916
          %v5049 = vpack.c.b16 %v4919, %v4917
          %v5050 = vpack.c.b16 %v4922, %v4920
          %v5051 = vpack.c.b16 %v4923, %v4921
          %5180 = vmatpush.bf16.msra.mxu0 %v4938
          %5181 = vmatpush.bf16.msra.mxu0 %v4936
          %5182 = vmatpush.bf16.msra.mxu0 %v4934
          %5183 = vmatpush.bf16.msra.mxu0 %v4932
          %5184 = vmatpush.bf16.msra.mxu0 %v4930
          %5185 = vmatpush.bf16.msra.mxu0 %v4928
          %5186 = vmatpush.bf16.msra.mxu0 %v4926
          %5187 = vmatpush.bf16.msra.mxu0 %v4924
          %5188 = vmatmul.bf16.gmra.mxu0 %v4398
          %v5189 = vpop.f32.mrf.mxu0
          %v5190 = vadd.f32 %v4536, %v5189
          %v5191 = vpop.f32.mrf.mxu0
          %5192 = vdwg.mxu0
          %5193 = vmatpush.bf16.msra.mxu0 %v4954
          %5194 = vmatpush.bf16.msra.mxu0 %v4952
          %5195 = vmatpush.bf16.msra.mxu0 %v4950
          %5196 = vmatpush.bf16.msra.mxu0 %v4948
          %5197 = vmatpush.bf16.msra.mxu0 %v4946
          %5198 = vmatpush.bf16.msra.mxu0 %v4944
          %5199 = vmatpush.bf16.msra.mxu0 %v4942
          %5200 = vmatpush.bf16.msra.mxu0 %v4940
          %5201 = vmatmul.bf16.gmra.mxu0 %v4399
          %v5202 = vpop.f32.mrf.mxu0
          %v5203 = vadd.f32 %v5190, %v5202
          %v5204 = vpop.f32.mrf.mxu0
          %5205 = vdwg.mxu0
          %5206 = vmatpush.bf16.msra.mxu0 %v4970
          %5207 = vmatpush.bf16.msra.mxu0 %v4968
          %5208 = vmatpush.bf16.msra.mxu0 %v4966
          %5209 = vmatpush.bf16.msra.mxu0 %v4964
          %5210 = vmatpush.bf16.msra.mxu0 %v4962
          %5211 = vmatpush.bf16.msra.mxu0 %v4960
          %5212 = vmatpush.bf16.msra.mxu0 %v4958
          %5213 = vmatpush.bf16.msra.mxu0 %v4956
          %5214 = vmatmul.bf16.gmra.mxu0 %v4400
          %v5215 = vpop.f32.mrf.mxu0
          %v5216 = vadd.f32 %v5203, %v5215
          %v5217 = vpop.f32.mrf.mxu0
          %5218 = vdwg.mxu0
          %5219 = vmatpush.bf16.msra.mxu0 %v4986
          %5220 = vmatpush.bf16.msra.mxu0 %v4984
          %5221 = vmatpush.bf16.msra.mxu0 %v4982
          %5222 = vmatpush.bf16.msra.mxu0 %v4980
          %5223 = vmatpush.bf16.msra.mxu0 %v4978
          %5224 = vmatpush.bf16.msra.mxu0 %v4976
          %5225 = vmatpush.bf16.msra.mxu0 %v4974
          %5226 = vmatpush.bf16.msra.mxu0 %v4972
          %5227 = vmatmul.bf16.gmra.mxu0 %v4401
          %v5228 = vpop.f32.mrf.mxu0
          %v5229 = vadd.f32 %v5216, %v5228
          %v5230 = vpop.f32.mrf.mxu0
          %5231 = vdwg.mxu0
          %5232 = vmatpush.bf16.msra.mxu0 %v5002
          %5233 = vmatpush.bf16.msra.mxu0 %v5000
          %5234 = vmatpush.bf16.msra.mxu0 %v4998
          %5235 = vmatpush.bf16.msra.mxu0 %v4996
          %5236 = vmatpush.bf16.msra.mxu0 %v4994
          %5237 = vmatpush.bf16.msra.mxu0 %v4992
          %5238 = vmatpush.bf16.msra.mxu0 %v4990
          %5239 = vmatpush.bf16.msra.mxu0 %v4988
          %5240 = vmatmul.bf16.gmra.mxu0 %v4402
          %v5241 = vpop.f32.mrf.mxu0
          %v5242 = vadd.f32 %v5229, %v5241
          %v5243 = vpop.f32.mrf.mxu0
          %5244 = vdwg.mxu0
          %5245 = vmatpush.bf16.msra.mxu0 %v5018
          %5246 = vmatpush.bf16.msra.mxu0 %v5016
          %5247 = vmatpush.bf16.msra.mxu0 %v5014
          %5248 = vmatpush.bf16.msra.mxu0 %v5012
          %5249 = vmatpush.bf16.msra.mxu0 %v5010
          %5250 = vmatpush.bf16.msra.mxu0 %v5008
          %5251 = vmatpush.bf16.msra.mxu0 %v5006
          %5252 = vmatpush.bf16.msra.mxu0 %v5004
          %5253 = vmatmul.bf16.gmra.mxu0 %v4403
          %v5254 = vpop.f32.mrf.mxu0
          %v5255 = vadd.f32 %v5242, %v5254
          %v5256 = vpop.f32.mrf.mxu0
          %5257 = vdwg.mxu0
          %5258 = vmatpush.bf16.msra.mxu0 %v5034
          %5259 = vmatpush.bf16.msra.mxu0 %v5032
          %5260 = vmatpush.bf16.msra.mxu0 %v5030
          %5261 = vmatpush.bf16.msra.mxu0 %v5028
          %5262 = vmatpush.bf16.msra.mxu0 %v5026
          %5263 = vmatpush.bf16.msra.mxu0 %v5024
          %5264 = vmatpush.bf16.msra.mxu0 %v5022
          %5265 = vmatpush.bf16.msra.mxu0 %v5020
          %5266 = vmatmul.bf16.gmra.mxu0 %v4404
          %v5267 = vpop.f32.mrf.mxu0
          %v5268 = vadd.f32 %v5255, %v5267
          %v5269 = vpop.f32.mrf.mxu0
          %5270 = vdwg.mxu0
          %5271 = vmatpush.bf16.msra.mxu0 %v5050
          %5272 = vmatpush.bf16.msra.mxu0 %v5048
          %5273 = vmatpush.bf16.msra.mxu0 %v5046
          %5274 = vmatpush.bf16.msra.mxu0 %v5044
          %5275 = vmatpush.bf16.msra.mxu0 %v5042
          %5276 = vmatpush.bf16.msra.mxu0 %v5040
          %5277 = vmatpush.bf16.msra.mxu0 %v5038
          %5278 = vmatpush.bf16.msra.mxu0 %v5036
          %5279 = vmatmul.bf16.gmra.mxu0 %v4405
          %v5280 = vpop.f32.mrf.mxu0
          %v5281 = vadd.f32 %v5268, %v5280
          %v5282 = vpop.f32.mrf.mxu0
          %5283 = vdwg.mxu0
          %5284 = vmatpush.bf16.msra.mxu0 %v4939
          %5285 = vmatpush.bf16.msra.mxu0 %v4937
          %5286 = vmatpush.bf16.msra.mxu0 %v4935
          %5287 = vmatpush.bf16.msra.mxu0 %v4933
          %5288 = vmatpush.bf16.msra.mxu0 %v4931
          %5289 = vmatpush.bf16.msra.mxu0 %v4929
          %5290 = vmatpush.bf16.msra.mxu0 %v4927
          %5291 = vmatpush.bf16.msra.mxu0 %v4925
          %5292 = vmatmul.bf16.gmra.mxu0 %v4398
          %v5293 = vpop.f32.mrf.mxu0
          %v5294 = vadd.f32 %v4537, %v5293
          %v5295 = vpop.f32.mrf.mxu0
          %5296 = vdwg.mxu0
          %5297 = vmatpush.bf16.msra.mxu0 %v4955
          %5298 = vmatpush.bf16.msra.mxu0 %v4953
          %5299 = vmatpush.bf16.msra.mxu0 %v4951
          %5300 = vmatpush.bf16.msra.mxu0 %v4949
          %5301 = vmatpush.bf16.msra.mxu0 %v4947
          %5302 = vmatpush.bf16.msra.mxu0 %v4945
          %5303 = vmatpush.bf16.msra.mxu0 %v4943
          %5304 = vmatpush.bf16.msra.mxu0 %v4941
          %5305 = vmatmul.bf16.gmra.mxu0 %v4399
          %v5306 = vpop.f32.mrf.mxu0
          %v5307 = vadd.f32 %v5294, %v5306
          %v5308 = vpop.f32.mrf.mxu0
          %5309 = vdwg.mxu0
          %5310 = vmatpush.bf16.msra.mxu0 %v4971
          %5311 = vmatpush.bf16.msra.mxu0 %v4969
          %5312 = vmatpush.bf16.msra.mxu0 %v4967
          %5313 = vmatpush.bf16.msra.mxu0 %v4965
          %5314 = vmatpush.bf16.msra.mxu0 %v4963
          %5315 = vmatpush.bf16.msra.mxu0 %v4961
          %5316 = vmatpush.bf16.msra.mxu0 %v4959
          %5317 = vmatpush.bf16.msra.mxu0 %v4957
          %5318 = vmatmul.bf16.gmra.mxu0 %v4400
          %v5319 = vpop.f32.mrf.mxu0
          %v5320 = vadd.f32 %v5307, %v5319
          %v5321 = vpop.f32.mrf.mxu0
          %5322 = vdwg.mxu0
          %5323 = vmatpush.bf16.msra.mxu0 %v4987
          %5324 = vmatpush.bf16.msra.mxu0 %v4985
          %5325 = vmatpush.bf16.msra.mxu0 %v4983
          %5326 = vmatpush.bf16.msra.mxu0 %v4981
          %5327 = vmatpush.bf16.msra.mxu0 %v4979
          %5328 = vmatpush.bf16.msra.mxu0 %v4977
          %5329 = vmatpush.bf16.msra.mxu0 %v4975
          %5330 = vmatpush.bf16.msra.mxu0 %v4973
          %5331 = vmatmul.bf16.gmra.mxu0 %v4401
          %v5332 = vpop.f32.mrf.mxu0
          %v5333 = vadd.f32 %v5320, %v5332
          %v5334 = vpop.f32.mrf.mxu0
          %5335 = vdwg.mxu0
          %5336 = vmatpush.bf16.msra.mxu0 %v5003
          %5337 = vmatpush.bf16.msra.mxu0 %v5001
          %5338 = vmatpush.bf16.msra.mxu0 %v4999
          %5339 = vmatpush.bf16.msra.mxu0 %v4997
          %5340 = vmatpush.bf16.msra.mxu0 %v4995
          %5341 = vmatpush.bf16.msra.mxu0 %v4993
          %5342 = vmatpush.bf16.msra.mxu0 %v4991
          %5343 = vmatpush.bf16.msra.mxu0 %v4989
          %5344 = vmatmul.bf16.gmra.mxu0 %v4402
          %v5345 = vpop.f32.mrf.mxu0
          %v5346 = vadd.f32 %v5333, %v5345
          %v5347 = vpop.f32.mrf.mxu0
          %5348 = vdwg.mxu0
          %5349 = vmatpush.bf16.msra.mxu0 %v5019
          %5350 = vmatpush.bf16.msra.mxu0 %v5017
          %5351 = vmatpush.bf16.msra.mxu0 %v5015
          %5352 = vmatpush.bf16.msra.mxu0 %v5013
          %5353 = vmatpush.bf16.msra.mxu0 %v5011
          %5354 = vmatpush.bf16.msra.mxu0 %v5009
          %5355 = vmatpush.bf16.msra.mxu0 %v5007
          %5356 = vmatpush.bf16.msra.mxu0 %v5005
          %5357 = vmatmul.bf16.gmra.mxu0 %v4403
          %v5358 = vpop.f32.mrf.mxu0
          %v5359 = vadd.f32 %v5346, %v5358
          %v5360 = vpop.f32.mrf.mxu0
          %5361 = vdwg.mxu0
          %5362 = vmatpush.bf16.msra.mxu0 %v5035
          %5363 = vmatpush.bf16.msra.mxu0 %v5033
          %5364 = vmatpush.bf16.msra.mxu0 %v5031
          %5365 = vmatpush.bf16.msra.mxu0 %v5029
          %5366 = vmatpush.bf16.msra.mxu0 %v5027
          %5367 = vmatpush.bf16.msra.mxu0 %v5025
          %5368 = vmatpush.bf16.msra.mxu0 %v5023
          %5369 = vmatpush.bf16.msra.mxu0 %v5021
          %5370 = vmatmul.bf16.gmra.mxu0 %v4404
          %v5371 = vpop.f32.mrf.mxu0
          %v5372 = vadd.f32 %v5359, %v5371
          %v5373 = vpop.f32.mrf.mxu0
          %5374 = vdwg.mxu0
          %5375 = vmatpush.bf16.msra.mxu0 %v5051
          %5376 = vmatpush.bf16.msra.mxu0 %v5049
          %5377 = vmatpush.bf16.msra.mxu0 %v5047
          %5378 = vmatpush.bf16.msra.mxu0 %v5045
          %5379 = vmatpush.bf16.msra.mxu0 %v5043
          %5380 = vmatpush.bf16.msra.mxu0 %v5041
          %5381 = vmatpush.bf16.msra.mxu0 %v5039
          %5382 = vmatpush.bf16.msra.mxu0 %v5037
          %5383 = vmatmul.bf16.gmra.mxu0 %v4405
          %v5384 = vpop.f32.mrf.mxu0
          %v5385 = vadd.f32 %v5372, %v5384
          %v5386 = vpop.f32.mrf.mxu0
          %5387 = vdwg.mxu0
          %v5388 = vld [vmem:[#allocation14] sm:$0xff]
          %v5389 = vld [vmem:[#allocation14 + $0x8] sm:$0xff]
          %v5390 = vld [vmem:[#allocation14 + $0x10] sm:$0xff]
          %v5391 = vld [vmem:[#allocation14 + $0x18] sm:$0xff]
          %v5392 = vld [vmem:[#allocation14 + $0x20] sm:$0xff]
          %v5393 = vld [vmem:[#allocation14 + $0x28] sm:$0xff]
          %v5394 = vld [vmem:[#allocation14 + $0x30] sm:$0xff]
          %v5395 = vld [vmem:[#allocation14 + $0x38] sm:$0xff]
          %v5396 = vld [vmem:[#allocation14 + $0x40] sm:$0xff]
          %v5397 = vld [vmem:[#allocation14 + $0x48] sm:$0xff]
          %v5398 = vld [vmem:[#allocation14 + $0x50] sm:$0xff]
          %v5399 = vld [vmem:[#allocation14 + $0x58] sm:$0xff]
          %v5400 = vld [vmem:[#allocation14 + $0x60] sm:$0xff]
          %v5401 = vld [vmem:[#allocation14 + $0x68] sm:$0xff]
          %v5402 = vld [vmem:[#allocation14 + $0x70] sm:$0xff]
          %v5403 = vld [vmem:[#allocation14 + $0x78] sm:$0xff]
          %v5404 = vld [vmem:[#allocation14 + $0x80] sm:$0xff]
          %v5405 = vld [vmem:[#allocation14 + $0x88] sm:$0xff]
          %v5406 = vld [vmem:[#allocation14 + $0x90] sm:$0xff]
          %v5407 = vld [vmem:[#allocation14 + $0x98] sm:$0xff]
          %v5408 = vld [vmem:[#allocation14 + $0xa0] sm:$0xff]
          %v5409 = vld [vmem:[#allocation14 + $0xa8] sm:$0xff]
          %v5410 = vld [vmem:[#allocation14 + $0xb0] sm:$0xff]
          %v5411 = vld [vmem:[#allocation14 + $0xb8] sm:$0xff]
          %v5412 = vld [vmem:[#allocation14 + $0xc0] sm:$0xff]
          %v5413 = vld [vmem:[#allocation14 + $0xc8] sm:$0xff]
          %v5414 = vld [vmem:[#allocation14 + $0xd0] sm:$0xff]
          %v5415 = vld [vmem:[#allocation14 + $0xd8] sm:$0xff]
          %v5416 = vld [vmem:[#allocation14 + $0xe0] sm:$0xff]
          %v5417 = vld [vmem:[#allocation14 + $0xe8] sm:$0xff]
          %v5418 = vld [vmem:[#allocation14 + $0xf0] sm:$0xff]
          %v5419 = vld [vmem:[#allocation14 + $0xf8] sm:$0xff]
          %v5420 = vld [vmem:[#allocation15] sm:$0x1]
          %v5422 = vperm.slane %v5420, 0
          %5424 = vmatpush.msra.mxu0 %v5403
          %5425 = vmatpush.msra.mxu0 %v5402
          %5426 = vmatpush.msra.mxu0 %v5401
          %5427 = vmatpush.msra.mxu0 %v5400
          %5428 = vmatpush.msra.mxu0 %v5399
          %5429 = vmatpush.msra.mxu0 %v5398
          %5430 = vmatpush.msra.mxu0 %v5397
          %5431 = vmatpush.msra.mxu0 %v5396
          %5432 = vmatpush.msra.mxu0 %v5395
          %5433 = vmatpush.msra.mxu0 %v5394
          %5434 = vmatpush.msra.mxu0 %v5393
          %5435 = vmatpush.msra.mxu0 %v5392
          %5436 = vmatpush.msra.mxu0 %v5391
          %5437 = vmatpush.msra.mxu0 %v5390
          %5438 = vmatpush.msra.mxu0 %v5389
          %5439 = vmatpush.msra.mxu0 %v5388
          %5440 = vmatmul.f32.gmra.mxu0 %v5281
          %v5441 = vpop.f32.mrf.mxu0
          %v5442 = vadd.f32 %v5422, %v5441
          %5443 = vdwg.mxu0
          %5444 = vmatpush.msra.mxu0 %v5419
          %5445 = vmatpush.msra.mxu0 %v5418
          %5446 = vmatpush.msra.mxu0 %v5417
          %5447 = vmatpush.msra.mxu0 %v5416
          %5448 = vmatpush.msra.mxu0 %v5415
          %5449 = vmatpush.msra.mxu0 %v5414
          %5450 = vmatpush.msra.mxu0 %v5413
          %5451 = vmatpush.msra.mxu0 %v5412
          %5452 = vmatpush.msra.mxu0 %v5411
          %5453 = vmatpush.msra.mxu0 %v5410
          %5454 = vmatpush.msra.mxu0 %v5409
          %5455 = vmatpush.msra.mxu0 %v5408
          %5456 = vmatpush.msra.mxu0 %v5407
          %5457 = vmatpush.msra.mxu0 %v5406
          %5458 = vmatpush.msra.mxu0 %v5405
          %5459 = vmatpush.msra.mxu0 %v5404
          %5460 = vmatmul.f32.gmra.mxu0 %v5385
          %v5461 = vpop.f32.mrf.mxu0
          %v5462 = vadd.f32 %v5442, %v5461
          %5463 = vdwg.mxu0
          %v5464 = vmax.f32 %v5462, 0.0
          %v5465 = vld [vmem:[#allocation17] sm:$0xff]
          %v5466 = vmax.f32 %v5465, 0.0
          %v5467 = vld [vmem:[#allocation18] sm:$0xff]
          %v5468 = vld [vmem:[#allocation18 + $0x8] sm:$0xff]
          %v5469 = vld [vmem:[#allocation18 + $0x10] sm:$0xff]
          %v5470 = vld [vmem:[#allocation18 + $0x18] sm:$0xff]
          %v5471 = vld [vmem:[#allocation18 + $0x20] sm:$0xff]
          %v5472 = vld [vmem:[#allocation18 + $0x28] sm:$0xff]
          %v5473 = vld [vmem:[#allocation18 + $0x30] sm:$0xff]
          %v5474 = vld [vmem:[#allocation18 + $0x38] sm:$0xff]
          %v5475 = vld [vmem:[#allocation18 + $0x40] sm:$0xff]
          %v5476 = vld [vmem:[#allocation18 + $0x48] sm:$0xff]
          %v5477 = vld [vmem:[#allocation18 + $0x50] sm:$0xff]
          %v5478 = vld [vmem:[#allocation18 + $0x58] sm:$0xff]
          %v5479 = vld [vmem:[#allocation18 + $0x60] sm:$0xff]
          %v5480 = vld [vmem:[#allocation18 + $0x68] sm:$0xff]
          %v5481 = vld [vmem:[#allocation18 + $0x70] sm:$0xff]
          %v5482 = vld [vmem:[#allocation18 + $0x78] sm:$0xff]
          %v5483 = vld [vmem:[#allocation20] sm:$0xff]
          %v5484 = vld [vmem:[#allocation20 + $0x8] sm:$0xff]
          %v5485 = vld [vmem:[#allocation20 + $0x10] sm:$0xff]
          %v5486 = vld [vmem:[#allocation20 + $0x18] sm:$0xff]
          %v5487 = vld [vmem:[#allocation20 + $0x20] sm:$0xff]
          %v5488 = vld [vmem:[#allocation20 + $0x28] sm:$0xff]
          %v5489 = vld [vmem:[#allocation20 + $0x30] sm:$0xff]
          %v5490 = vld [vmem:[#allocation20 + $0x38] sm:$0xff]
          %v5491 = vld [vmem:[#allocation20 + $0x40] sm:$0xff]
          %v5492 = vld [vmem:[#allocation20 + $0x48] sm:$0xff]
          %v5493 = vld [vmem:[#allocation20 + $0x50] sm:$0xff]
          %v5494 = vld [vmem:[#allocation20 + $0x58] sm:$0xff]
          %v5495 = vld [vmem:[#allocation20 + $0x60] sm:$0xff]
          %v5496 = vld [vmem:[#allocation20 + $0x68] sm:$0xff]
          %v5497 = vld [vmem:[#allocation20 + $0x70] sm:$0xff]
          %v5498 = vld [vmem:[#allocation20 + $0x78] sm:$0xff]
          %5499 = vmatpush.msra.mxu0 %v5498
          %5500 = vmatpush.msra.mxu0 %v5497
          %5501 = vmatpush.msra.mxu0 %v5496
          %5502 = vmatpush.msra.mxu0 %v5495
          %5503 = vmatpush.msra.mxu0 %v5494
          %5504 = vmatpush.msra.mxu0 %v5493
          %5505 = vmatpush.msra.mxu0 %v5492
          %5506 = vmatpush.msra.mxu0 %v5491
          %5507 = vmatpush.msra.mxu0 %v5490
          %5508 = vmatpush.msra.mxu0 %v5489
          %5509 = vmatpush.msra.mxu0 %v5488
          %5510 = vmatpush.msra.mxu0 %v5487
          %5511 = vmatpush.msra.mxu0 %v5486
          %5512 = vmatpush.msra.mxu0 %v5485
          %5513 = vmatpush.msra.mxu0 %v5484
          %5514 = vmatpush.msra.mxu0 %v5483
          %5515 = vmatmul.f32.gmra.mxu0 %v5466
          %v5516 = vpop.f32.mrf.mxu0
          %v5517 = vadd.f32 0.0, %v5516
          %5518 = vdwg.mxu0
          %5519 = vmatpush.msra.mxu0 %v5482
          %5520 = vmatpush.msra.mxu0 %v5481
          %5521 = vmatpush.msra.mxu0 %v5480
          %5522 = vmatpush.msra.mxu0 %v5479
          %5523 = vmatpush.msra.mxu0 %v5478
          %5524 = vmatpush.msra.mxu0 %v5477
          %5525 = vmatpush.msra.mxu0 %v5476
          %5526 = vmatpush.msra.mxu0 %v5475
          %5527 = vmatpush.msra.mxu0 %v5474
          %5528 = vmatpush.msra.mxu0 %v5473
          %5529 = vmatpush.msra.mxu0 %v5472
          %5530 = vmatpush.msra.mxu0 %v5471
          %5531 = vmatpush.msra.mxu0 %v5470
          %5532 = vmatpush.msra.mxu0 %v5469
          %5533 = vmatpush.msra.mxu0 %v5468
          %5534 = vmatpush.msra.mxu0 %v5467
          %5535 = vmatmul.f32.gmra.mxu0 %v5464
          %v5536 = vpop.f32.mrf.mxu0
          %v5537 = vadd.f32 %v5517, %v5536
          %5538 = vdwg.mxu0
          %v5539 = vld [vmem:[#allocation21] sm:$0x1]
          %v5541 = vperm.slane %v5539, 0
          %v5543 = vadd.f32 %v5537, %v5541
          %5544 = vst [vmem:[#allocation23] sm:$0xff] %v5543
        $region124: #{tpu_custom_call.1} parent=67 // pred_fallthru
          _
        // Predicated region
        $region125: #{tpu_custom_call.1} parent=67 // pred_check
          %p5545 = pneg %p310
        $region126: #{tpu_custom_call.1} parent=67 // pred_check_branch
          %5547 = sbr.rel (%p5545) target = $region128
        $region127: #{tpu_custom_call.1} parent=67 // pred_region
          %5549 = vsyncadd [#allocation5], 0
          %s5551 = sshll.u32 [#allocation23], 4
          %s5552 = int_to_ptr.vmem [resolvable:$true] %s5551
          %s5553 = sshll.u32 %s12, 4
          %s5554 = int_to_ptr.hbm [resolvable:$true] %s5553
          %5556 = dma.vmem_to_hbm [thread:$0]  %s5552, 128, %s5554, [#allocation5]
        $region128: #{tpu_custom_call.1} parent=67 // pred_fallthru
          _
        // Predicated region
        $region129: #{tpu_custom_call.1} parent=67 // pred_check
          %p5557 = pneg %p310
        $region130: #{tpu_custom_call.1} parent=67 // pred_check_branch
          %5559 = sbr.rel (%p5557) target = $region132
        $region131: #{tpu_custom_call.1} parent=67 // pred_region
          %5561 = dma.done [#allocation5], 128
        $region132: #{tpu_custom_call.1} parent=67 // pred_fallthru
          _
      $region68: #{tpu_custom_call.1} parent=5 // pred_fallthru
        _
      %p5562 = scmp.le.s32.totalorder 2, %s30
      // Predicated region
      $region133: #{tpu_custom_call.1} parent=5 // pred_check
        %p5563 = pneg %p5562
      $region134: #{tpu_custom_call.1} parent=5 // pred_check_branch
        %5565 = sbr.rel (%p5563) target = $region136
      $region135: #{tpu_custom_call.1} parent=5 // pred_region
        %s5566 = ssub.s32 %s30, 2
      $region136: #{tpu_custom_call.1} parent=5 // pred_fallthru
        _
    $region6: #{tpu_custom_call.1} parent=1 // loop_footer
      %s34 = sadd.s32 1, %s30
    $region7: #{tpu_custom_call.1} parent=1 // loop_footer_branch
      %29 = sbr.rel target = $region3
    $region8: #{tpu_custom_call.1} parent=1 // loop_exit
      _
    %5567 = vsyncpa [#allocation4], 1
    %s5568 = scalar_lea.sflag [#allocation4], 1
    %5569 = vsyncpa %s5568, 1
    %5570 = vsyncpa [#allocation7], 1
    %s5571 = scalar_lea.sflag [#allocation7], 1
    %5572 = vsyncpa %s5571, 1
    %5573 = vsyncpa [#allocation10], 1
    %5574 = vsyncpa [#allocation13], 1
    %5575 = vsyncpa [#allocation16], 1
    %5576 = vsyncpa [#allocation19], 1
    %5577 = vsyncpa [#allocation22], 1
    %5578 = vsyncpa [#allocation5], 1
    %s5579 = scalar_lea.sflag [#allocation5], 1
    %5580 = vsyncpa %s5579, 1

</llo_original>
